<compile_context>
chip_gen: v5e
topology: v5e:2x2
jax: 0.10.0
libtpu: 0.0.40
codegen_flags: <defaults>
</compile_context>

<pallas_src>
import functools

import jax
import jax.numpy as jnp
from jax import lax
from jax.experimental import pallas as pl
from jax.experimental.pallas import tpu as pltpu


_PER_LAYER_KEYS = (
    "wqkv", "bqkv", "wo", "bo",
    "cwq", "cbq", "cwkv", "cbkv", "cwo", "cbo",
    "n1g", "n1b", "n2g", "n2b", "n3g", "n3b",
    "w1", "b1", "w2", "b2",
)


# ------------------------------- fused kernel ------------------------------- #

def _encoder_kernel(
    # data (one batch block per grid step along axis 0)
    x_ref, cross_ref,
    # per-layer weight slabs (leading layer dim squeezed by the BlockSpec)
    wqkv_ref, bqkv_ref, wo_ref, bo_ref,
    cwq_ref, cbq_ref, cwkv_ref, cbkv_ref, cwo_ref, cbo_ref,
    n1g_ref, n1b_ref, n2g_ref, n2b_ref, n3g_ref, n3b_ref,
    w1_ref, b1_ref, w2_ref, b2_ref,
    # final norm + projection (resident)
    fng_ref, fnb_ref, wp_ref, bp_ref,
    # output
    o_ref,
    # VMEM carry for the residual stream across layer grid steps
    x_state,
    *, n_heads, head_dim, eps, has_norm, has_proj, compute_dtype):
    H, E = n_heads, head_dim
    cd = compute_dtype
    layer = pl.program_id(1)
    last = pl.num_programs(1) - 1

    @pl.when(layer == 0)
    def _init():
        x_state[...] = x_ref[...].astype(jnp.float32)

    x = x_state[...]                       # (Bb, N, D) f32 residual stream
    Bb, N, D = x.shape
    cross = cross_ref[...].astype(jnp.float32)   # (Bb, L, D)
    L = cross.shape[1]
    M = Bb * N

    def mm(a, w_ref, b_ref):
        # weights pre-cast to compute_dtype on the host; f32 accumulation
        w = w_ref[...]
        return jnp.dot(a.astype(w.dtype), w,
                       preferred_element_type=jnp.float32) + b_ref[...]

    def layernorm(v, g_ref, b_ref):
        mu = jnp.mean(v, axis=-1, keepdims=True)
        c = v - mu
        var = jnp.mean(c * c, axis=-1, keepdims=True)
        return c * lax.rsqrt(var + eps) * g_ref[...] + b_ref[...]

    def softmax(s):
        m = jnp.max(s, axis=-1, keepdims=True)
        p = jnp.exp(s - m)
        return p / jnp.sum(p, axis=-1, keepdims=True)

    def attend(q2, k2, v2, Lq, Lk):
        """q2 (Bb*Lq, D) [1/sqrt(E) already folded into Wq/bq], k2/v2 (Bb*Lk, D)
        -> context (Bb*Lq, D) with heads re-merged into the lane dim so the
        output projection reduces over heads inside the MXU K dimension."""
        qs, ks, vs = [], [], []
        for b in range(Bb):
            for h in range(H):
                cslc = slice(h * E, (h + 1) * E)
                qs.append(q2[b * Lq:(b + 1) * Lq, cslc])
                ks.append(k2[b * Lk:(b + 1) * Lk, cslc])
                vs.append(v2[b * Lk:(b + 1) * Lk, cslc])
        qh = jnp.stack(qs, axis=0).astype(cd)      # (Bb*H, Lq, E)
        kh = jnp.stack(ks, axis=0).astype(cd)      # (Bb*H, Lk, E)
        vh = jnp.stack(vs, axis=0).astype(cd)      # (Bb*H, Lk, E)
        s = jnp.einsum('zqe,zke->zqk', qh, kh,
                       preferred_element_type=jnp.float32)
        p = softmax(s)
        o = jnp.einsum('zqk,zke->zqe', p.astype(cd), vh,
                       preferred_element_type=jnp.float32)   # (Bb*H, Lq, E)
        rows = [jnp.concatenate([o[b * H + h] for h in range(H)], axis=-1)
                for b in range(Bb)]
        return jnp.concatenate(rows, axis=0)                 # (Bb*Lq, D)

    # ---- self-attention over patch + global tokens, residual, norm1 ----
    x2 = x.reshape(M, D)
    qkv = mm(x2, wqkv_ref, bqkv_ref)                          # (M, 3D)
    ctx = attend(qkv[:, :D], qkv[:, D:2 * D], qkv[:, 2 * D:], N, N)
    x = layernorm(x + mm(ctx, wo_ref, bo_ref).reshape(Bb, N, D),
                  n1g_ref, n1b_ref)

    # ---- cross-attention: global token (last row) vs exogenous tokens ----
    xg = x[:, N - 1:N, :].reshape(Bb, D)                      # (Bb, D)
    qg = mm(xg, cwq_ref, cbq_ref)                             # (Bb, D)
    kv = mm(cross.reshape(Bb * L, D), cwkv_ref, cbkv_ref)     # (Bb*L, 2D)
    cg = attend(qg, kv[:, :D], kv[:, D:], 1, L)               # (Bb, D)
    xg = layernorm((xg + mm(cg, cwo_ref, cbo_ref))[:, None, :],
                   n2g_ref, n2b_ref)                          # (Bb, 1, D)

    # splice the updated global-token row back via a single-row scratch store
    x_state[...] = x
    x_state[:, N - 1:N, :] = xg
    x = x_state[...]

    # ---- FFN: Conv1d(kernel_size=1) x2 == per-token matmuls; residual, norm3 ----
    x2 = x.reshape(M, D)
    h = jnp.maximum(mm(x2, w1_ref, b1_ref), 0.0)              # activation="relu"
    y = mm(h, w2_ref, b2_ref)
    x = layernorm(x + y.reshape(Bb, N, D), n3g_ref, n3b_ref)

    x_state[...] = x

    # ---- final norm + projection, written once at the last layer step ----
    @pl.when(layer == last)
    def _finalize():
        out = x
        if has_norm:
            out = layernorm(out, fng_ref, fnb_ref)
        out2 = out.reshape(M, D)
        if has_proj:
            out2 = mm(out2, wp_ref, bp_ref)
        o_ref[...] = out2.reshape(Bb, N, out2.shape[-1]).astype(o_ref.dtype)


# -------------------- host-side packing (once, outside jit) ------------------ #

def pack_encoder_params(params, *, n_heads, compute_dtype=jnp.float32):
    """Pack & stack all Encoder weights once at model-load time.

    * Q|K|V (and cross K|V) projections fused into 2-D (D, 3D)/(D, 2D) slabs.
    * 1/sqrt(head_dim) attention scale folded into Q weights/biases.
    * Matmul weight slabs pre-cast to compute_dtype (e.g. bf16); biases & norm
      parameters stay f32.
    """
    layers = params["layers"]
    D = layers[0]["self_attn"]["wq"].shape[0]
    E = D // n_heads
    scale = 1.0 / (E ** 0.5)
    wd = compute_dtype

    def stack(fn, dtype=None):
        a = jnp.stack([fn(p) for p in layers], axis=0)
        return a.astype(dtype) if dtype is not None else a

    packed = dict(
        wqkv=stack(lambda p: jnp.concatenate(
            [p["self_attn"]["wq"] * scale, p["self_attn"]["wk"],
             p["self_attn"]["wv"]], axis=1), wd),
        bqkv=stack(lambda p: jnp.concatenate(
            [p["self_attn"]["bq"] * scale, p["self_attn"]["bk"],
             p["self_attn"]["bv"]])[None, :]),
        wo=stack(lambda p: p["self_attn"]["wo"], wd),
        bo=stack(lambda p: p["self_attn"]["bo"][None, :]),
        cwq=stack(lambda p: p["cross_attn"]["wq"] * scale, wd),
        cbq=stack(lambda p: p["cross_attn"]["bq"][None, :] * scale),
        cwkv=stack(lambda p: jnp.concatenate(
            [p["cross_attn"]["wk"], p["cross_attn"]["wv"]], axis=1), wd),
        cbkv=stack(lambda p: jnp.concatenate(
            [p["cross_attn"]["bk"], p["cross_attn"]["bv"]])[None, :]),
        cwo=stack(lambda p: p["cross_attn"]["wo"], wd),
        cbo=stack(lambda p: p["cross_attn"]["bo"][None, :]),
        n1g=stack(lambda p: p["norm1_g"][None, :]),
        n1b=stack(lambda p: p["norm1_b"][None, :]),
        n2g=stack(lambda p: p["norm2_g"][None, :]),
        n2b=stack(lambda p: p["norm2_b"][None, :]),
        n3g=stack(lambda p: p["norm3_g"][None, :]),
        n3b=stack(lambda p: p["norm3_b"][None, :]),
        w1=stack(lambda p: p["w1"], wd),
        b1=stack(lambda p: p["b1"][None, :]),
        w2=stack(lambda p: p["w2"], wd),
        b2=stack(lambda p: p["b2"][None, :]),
    )

    has_norm = params.get("norm") is not None
    has_proj = params.get("projection") is not None
    if has_norm:
        fng = params["norm"][0][None, :].astype(jnp.float32)
        fnb = params["norm"][1][None, :].astype(jnp.float32)
    else:  # tiny placeholders, never read by the kernel
        fng = jnp.zeros((1, 1), jnp.float32)
        fnb = jnp.zeros((1, 1), jnp.float32)
    if has_proj:
        wp = params["projection"][0].astype(wd)
        bp = params["projection"][1][None, :].astype(jnp.float32)
    else:
        wp = jnp.zeros((1, 1), wd)
        bp = jnp.zeros((1, 1), jnp.float32)

    weights = tuple(packed[k] for k in _PER_LAYER_KEYS) + (fng, fnb, wp, bp)
    meta = dict(n_heads=n_heads, has_norm=has_norm, has_proj=has_proj,
                compute_dtype=compute_dtype)
    return weights, meta


def _pick_batch_block(B):
    """Largest divisor of B that keeps >= 2 grid steps on the batch axis (both
    TensorCores busy on v7x); B == 1 degenerates to a single step."""
    if B <= 1:
        return 1
    for bb in range(B // 2, 0, -1):
        if B % bb == 0:
            return bb
    return 1


# --------------------------------- wrapper ----------------------------------- #

@functools.partial(
    jax.jit,
    static_argnames=("n_heads", "has_norm", "has_proj", "compute_dtype",
                     "batch_block"))
def encoder_apply(x, cross, weights, *, n_heads, has_norm, has_proj,
                  compute_dtype=jnp.float32, batch_block=None):
    B, N, D = x.shape
    _, L, _ = cross.shape
    E = D // n_heads

    per_layer = weights[:len(_PER_LAYER_KEYS)]
    fng, fnb, wp, bp = weights[len(_PER_LAYER_KEYS):]
    n_layers = int(per_layer[0].shape[0])
    Dout = wp.shape[1] if has_proj else D

    Bb = _pick_batch_block(B) if batch_block is None else batch_block
    assert B % Bb == 0, "batch_block must divide the batch size"
    nb = B // Bb

    kernel = functools.partial(
        _encoder_kernel, n_heads=n_heads, head_dim=E, eps=1e-5,
        has_norm=has_norm, has_proj=has_proj, compute_dtype=compute_dtype)

    def layer_spec(a):
        nd = a.ndim
        return pl.BlockSpec((None,) + tuple(a.shape[1:]),
                            lambda b, l, _nd=nd: (l,) + (0,) * (_nd - 1))

    def const_spec(a):
        nd = a.ndim
        return pl.BlockSpec(tuple(a.shape), lambda b, l, _nd=nd: (0,) * _nd)

    in_specs = (
        [pl.BlockSpec((Bb, N, D), lambda b, l: (b, 0, 0)),
         pl.BlockSpec((Bb, L, D), lambda b, l: (b, 0, 0))]
        + [layer_spec(a) for a in per_layer]
        + [const_spec(a) for a in (fng, fnb, wp, bp)]
    )

    # VMEM budget: one layer's weight slabs (double-buffered by the pipeline)
    # + resident final norm/proj + activation blocks + the carry scratch.
    per_layer_bytes = sum(int(a.nbytes) // int(a.shape[0]) for a in per_layer)
    const_bytes = sum(int(a.nbytes) for a in (fng, fnb, wp, bp))
    io_bytes = 4 * (Bb * N * D + Bb * L * D) + Bb * N * Dout * x.dtype.itemsize
    vmem_bytes = int(2 * per_layer_bytes + 2 * const_bytes + 2 * io_bytes
                     + 4 * Bb * N * D + (4 << 20))
    vmem_bytes = int(min(64 << 20, max(32 << 20, vmem_bytes)))

    return pl.pallas_call(
        kernel,
        out_shape=jax.ShapeDtypeStruct((B, N, Dout), x.dtype),
        grid=(nb, n_layers),
        in_specs=in_specs,
        out_specs=pl.BlockSpec((Bb, N, Dout), lambda b, l: (b, 0, 0)),
        scratch_shapes=[pltpu.VMEM((Bb, N, D), jnp.float32)],
        compiler_params=pltpu.CompilerParams(
            dimension_semantics=("parallel", "arbitrary"),
            vmem_limit_bytes=vmem_bytes),
    )(x, cross, *weights)


# ---------------------------- pure-JAX reference ---------------------------- #

def _ref_ln(x, g, b, eps=1e-5):
    m = jnp.mean(x, -1, keepdims=True)
    v = jnp.mean((x - m) ** 2, -1, keepdims=True)
    return (x - m) * lax.rsqrt(v + eps) * g + b


def _ref_attn(xq, xkv, p, H):
    B, Lq, D = xq.shape
    _, Ls, _ = xkv.shape
    E = D // H
    q = (xq @ p["wq"] + p["bq"]).reshape(B, Lq, H, E)
    k = (xkv @ p["wk"] + p["bk"]).reshape(B, Ls, H, E)
    v = (xkv @ p["wv"] + p["bv"]).reshape(B, Ls, H, E)
    s = jnp.einsum("blhe,bshe->bhls", q, k) / (E ** 0.5)
    a = jax.nn.softmax(s, axis=-1)
    o = jnp.einsum("bhls,bshe->blhe", a, v).reshape(B, Lq, D)
    return o @ p["wo"] + p["bo"]


def ref_encoder(x, cross, params, H):
    for p in params["layers"]:
        x = _ref_ln(x + _ref_attn(x, x, p["self_attn"], H), p["norm1_g"], p["norm1_b"])
        xg = x[:, -1:, :]
        xg = _ref_ln(xg + _ref_attn(xg, cross, p["cross_attn"], H),
                     p["norm2_g"], p["norm2_b"])
        x = jnp.concatenate([x[:, :-1, :], xg], axis=1)
        y = jnp.maximum(x @ p["w1"] + p["b1"], 0.0) @ p["w2"] + p["b2"]
        x = _ref_ln(x + y, p["norm3_g"], p["norm3_b"])
    g, b = params["norm"]
    x = _ref_ln(x, g, b)
    w, b = params["projection"]
    return x @ w + b


# -------------------------------- param init -------------------------------- #

def _dense(key, fan_in, fan_out):
    kw, kb = jax.random.split(key)
    w = jax.random.normal(kw, (fan_in, fan_out), jnp.float32) / (fan_in ** 0.5)
    b = 0.01 * jax.random.normal(kb, (fan_out,), jnp.float32)
    return w, b


def init_params(key, n_layers, D, Dff, Dout):
    layers = []
    for _ in range(n_layers):
        ks = jax.random.split(key, 12)
        key = ks[-1]

        def attn_params(kq, kk, kv, ko):
            wq, bq = _dense(kq, D, D)
            wk, bk = _dense(kk, D, D)
            wv, bv = _dense(kv, D, D)
            wo, bo = _dense(ko, D, D)
            return dict(wq=wq, bq=bq, wk=wk, bk=bk, wv=wv, bv=bv, wo=wo, bo=bo)

        w1, b1 = _dense(ks[8], D, Dff)
        w2, b2 = _dense(ks[9], Dff, D)
        layers.append(dict(
            self_attn=attn_params(ks[0], ks[1], ks[2], ks[3]),
            cross_attn=attn_params(ks[4], ks[5], ks[6], ks[7]),
            w1=w1, b1=b1, w2=w2, b2=b2,
            norm1_g=jnp.ones((D,), jnp.float32), norm1_b=jnp.zeros((D,), jnp.float32),
            norm2_g=jnp.ones((D,), jnp.float32), norm2_b=jnp.zeros((D,), jnp.float32),
            norm3_g=jnp.ones((D,), jnp.float32), norm3_b=jnp.zeros((D,), jnp.float32),
        ))
    kproj, _ = jax.random.split(key)
    wp, bp = _dense(kproj, D, Dout)
    return dict(
        layers=layers,
        norm=(jnp.ones((D,), jnp.float32), jnp.zeros((D,), jnp.float32)),
        projection=(wp, bp),
    )


# ----------------------------------- main ------------------------------------ #

if __name__ == "__main__":
    B, N, L, D, Dff, H = 2, 9, 8, 32, 64, 4   # N = 8 patch tokens + 1 global token
    n_layers = 2

    key = jax.random.PRNGKey(0)
    kx, kc, kp = jax.random.split(key, 3)
    x = jax.random.normal(kx, (B, N, D), jnp.float32)
    cross = jax.random.normal(kc, (B, L, D), jnp.float32)
    params = init_params(kp, n_layers, D, Dff, Dout=D)

    ref = ref_encoder(x, cross, params, H)

    # pack once at "model load" time (outside jit) -- f32 MXU-operand path
    weights_f32, meta_f32 = pack_encoder_params(params, n_heads=H,
                                                compute_dtype=jnp.float32)
    out = jax.block_until_ready(encoder_apply(x, cross, weights_f32, **meta_f32))
    assert out.shape == (B, N, D)
    err = float(jnp.max(jnp.abs(out - ref)))
    assert err < 5e-3, f"f32 kernel mismatch vs pure-JAX reference: {err}"

    # bf16 MXU-operand fast path (v6e / v7x); f32 accumulation, looser tolerance.
    weights_bf16, meta_bf16 = pack_encoder_params(params, n_heads=H,
                                                  compute_dtype=jnp.bfloat16)
    out_bf16 = jax.block_until_ready(
        encoder_apply(x, cross, weights_bf16, **meta_bf16))
    err_bf16 = float(jnp.max(jnp.abs(out_bf16 - ref)))
    assert err_bf16 < 1e-1, f"bf16 kernel mismatch vs pure-JAX reference: {err_bf16}"

    print("KERNEL_OK")
</pallas_src>

<mosaic_0001>
module attributes {stable_mosaic.version = 11 : i64} {
  func.func @_encoder_kernel(%arg0: i32, %arg1: i32, %arg2: memref<1x9x32xf32, #tpu.memory_space<vmem>>, %arg3: memref<1x8x32xf32, #tpu.memory_space<vmem>>, %arg4: memref<1x32x96xf32, #tpu.memory_space<vmem>>, %arg5: memref<1x1x96xf32, #tpu.memory_space<vmem>>, %arg6: memref<1x32x32xf32, #tpu.memory_space<vmem>>, %arg7: memref<1x1x32xf32, #tpu.memory_space<vmem>>, %arg8: memref<1x32x32xf32, #tpu.memory_space<vmem>>, %arg9: memref<1x1x32xf32, #tpu.memory_space<vmem>>, %arg10: memref<1x32x64xf32, #tpu.memory_space<vmem>>, %arg11: memref<1x1x64xf32, #tpu.memory_space<vmem>>, %arg12: memref<1x32x32xf32, #tpu.memory_space<vmem>>, %arg13: memref<1x1x32xf32, #tpu.memory_space<vmem>>, %arg14: memref<1x1x32xf32, #tpu.memory_space<vmem>>, %arg15: memref<1x1x32xf32, #tpu.memory_space<vmem>>, %arg16: memref<1x1x32xf32, #tpu.memory_space<vmem>>, %arg17: memref<1x1x32xf32, #tpu.memory_space<vmem>>, %arg18: memref<1x1x32xf32, #tpu.memory_space<vmem>>, %arg19: memref<1x1x32xf32, #tpu.memory_space<vmem>>, %arg20: memref<1x32x64xf32, #tpu.memory_space<vmem>>, %arg21: memref<1x1x64xf32, #tpu.memory_space<vmem>>, %arg22: memref<1x64x32xf32, #tpu.memory_space<vmem>>, %arg23: memref<1x1x32xf32, #tpu.memory_space<vmem>>, %arg24: memref<1x32xf32, #tpu.memory_space<vmem>>, %arg25: memref<1x32xf32, #tpu.memory_space<vmem>>, %arg26: memref<32x32xf32, #tpu.memory_space<vmem>>, %arg27: memref<1x32xf32, #tpu.memory_space<vmem>>, %arg28: memref<1x9x32xf32, #tpu.memory_space<vmem>>, %arg29: memref<1x9x32xf32, #tpu.memory_space<vmem>>) attributes {dimension_semantics = [#tpu.dimension_semantics<parallel>, #tpu.dimension_semantics<arbitrary>], iteration_bounds = array<i64: 2, 2>, scalar_prefetch = 0 : i64, scratch_operands = 1 : i64, tpu.core_type = #tpu.core_type<tc>, window_params = [{transform_indices = @transform_0, window_bounds = array<i64: 1, 9, 32>}, {transform_indices = @transform_1, window_bounds = array<i64: 1, 8, 32>}, {transform_indices = @transform_2, window_bounds = array<i64: 1, 32, 96>}, {transform_indices = @transform_3, window_bounds = array<i64: 1, 1, 96>}, {transform_indices = @transform_4, window_bounds = array<i64: 1, 32, 32>}, {transform_indices = @transform_5, window_bounds = array<i64: 1, 1, 32>}, {transform_indices = @transform_6, window_bounds = array<i64: 1, 32, 32>}, {transform_indices = @transform_7, window_bounds = array<i64: 1, 1, 32>}, {transform_indices = @transform_8, window_bounds = array<i64: 1, 32, 64>}, {transform_indices = @transform_9, window_bounds = array<i64: 1, 1, 64>}, {transform_indices = @transform_10, window_bounds = array<i64: 1, 32, 32>}, {transform_indices = @transform_11, window_bounds = array<i64: 1, 1, 32>}, {transform_indices = @transform_12, window_bounds = array<i64: 1, 1, 32>}, {transform_indices = @transform_13, window_bounds = array<i64: 1, 1, 32>}, {transform_indices = @transform_14, window_bounds = array<i64: 1, 1, 32>}, {transform_indices = @transform_15, window_bounds = array<i64: 1, 1, 32>}, {transform_indices = @transform_16, window_bounds = array<i64: 1, 1, 32>}, {transform_indices = @transform_17, window_bounds = array<i64: 1, 1, 32>}, {transform_indices = @transform_18, window_bounds = array<i64: 1, 32, 64>}, {transform_indices = @transform_19, window_bounds = array<i64: 1, 1, 64>}, {transform_indices = @transform_20, window_bounds = array<i64: 1, 64, 32>}, {transform_indices = @transform_21, window_bounds = array<i64: 1, 1, 32>}, {pipeline_mode = #tpu.pipeline_mode<synchronous>, transform_indices = @transform_22, window_bounds = array<i64: 1, 32>}, {pipeline_mode = #tpu.pipeline_mode<synchronous>, transform_indices = @transform_23, window_bounds = array<i64: 1, 32>}, {pipeline_mode = #tpu.pipeline_mode<synchronous>, transform_indices = @transform_24, window_bounds = array<i64: 32, 32>}, {pipeline_mode = #tpu.pipeline_mode<synchronous>, transform_indices = @transform_25, window_bounds = array<i64: 1, 32>}, {transform_indices = @transform_26, window_bounds = array<i64: 1, 9, 32>}]} {
    %c0_i32 = arith.constant 0 : i32
    %0 = arith.cmpi eq, %arg1, %c0_i32 : i32
    %1 = arith.extui %0 : i1 to i32
    %c0_i32_0 = arith.constant 0 : i32
    %2 = arith.cmpi ne, %1, %c0_i32_0 : i32
    scf.if %2 {
      %c0_108 = arith.constant 0 : index
      %c0_109 = arith.constant 0 : index
      %c0_110 = arith.constant 0 : index
      %247 = vector.load %arg2[%c0_108, %c0_109, %c0_110] : memref<1x9x32xf32, #tpu.memory_space<vmem>>, vector<1x9x32xf32>
      %c0_111 = arith.constant 0 : index
      %c0_112 = arith.constant 0 : index
      %c0_113 = arith.constant 0 : index
      %248 = vector.load %arg29[%c0_111, %c0_112, %c0_113] : memref<1x9x32xf32, #tpu.memory_space<vmem>>, vector<1x9x32xf32>
      tpu.vector_store %arg29[%c0_111, %c0_112, %c0_113], %247 {strides = array<i32>} : memref<1x9x32xf32, #tpu.memory_space<vmem>>, vector<1x9x32xf32>,
    } else {
    }
    %c0 = arith.constant 0 : index
    %c0_1 = arith.constant 0 : index
    %c0_2 = arith.constant 0 : index
    %3 = vector.load %arg29[%c0, %c0_1, %c0_2] : memref<1x9x32xf32, #tpu.memory_space<vmem>>, vector<1x9x32xf32>
    %c0_3 = arith.constant 0 : index
    %c0_4 = arith.constant 0 : index
    %c0_5 = arith.constant 0 : index
    %4 = vector.load %arg3[%c0_3, %c0_4, %c0_5] : memref<1x8x32xf32, #tpu.memory_space<vmem>>, vector<1x8x32xf32>
    %5 = vector.shape_cast %3 : vector<1x9x32xf32> to vector<9x32xf32>
    %c0_6 = arith.constant 0 : index
    %c0_7 = arith.constant 0 : index
    %c0_8 = arith.constant 0 : index
    %6 = vector.load %arg4[%c0_6, %c0_7, %c0_8] : memref<1x32x96xf32, #tpu.memory_space<vmem>>, vector<1x32x96xf32>
    %7 = vector.shape_cast %6 : vector<1x32x96xf32> to vector<32x96xf32>
    %cst = arith.constant dense<0.000000e+00> : vector<9x96xf32>
    %8 = tpu.matmul %5, %7, %cst {dimension_numbers = #tpu.dot_dimension_numbers<[1], [0], [0], [1], [0, 0, 1, 1], [], []>} : vector<9x32xf32>, vector<32x96xf32>, vector<9x96xf32> -> vector<9x96xf32>
    %c0_9 = arith.constant 0 : index
    %c0_10 = arith.constant 0 : index
    %c0_11 = arith.constant 0 : index
    %9 = vector.load %arg5[%c0_9, %c0_10, %c0_11] : memref<1x1x96xf32, #tpu.memory_space<vmem>>, vector<1x1x96xf32>
    %10 = vector.shape_cast %9 : vector<1x1x96xf32> to vector<1x96xf32>
    %11 = vector.broadcast %10 : vector<1x96xf32> to vector<9x96xf32>
    %12 = arith.addf %8, %11 : vector<9x96xf32>
    %13 = vector.extract_strided_slice %12 {offsets = [0, 0], sizes = [9, 32], strides = [1, 1]} : vector<9x96xf32> to vector<9x32xf32>
    %14 = vector.extract_strided_slice %12 {offsets = [0, 32], sizes = [9, 32], strides = [1, 1]} : vector<9x96xf32> to vector<9x32xf32>
    %15 = vector.extract_strided_slice %12 {offsets = [0, 64], sizes = [9, 32], strides = [1, 1]} : vector<9x96xf32> to vector<9x32xf32>
    %16 = vector.extract_strided_slice %13 {offsets = [0, 0], sizes = [9, 8], strides = [1, 1]} : vector<9x32xf32> to vector<9x8xf32>
    %17 = vector.extract_strided_slice %14 {offsets = [0, 0], sizes = [9, 8], strides = [1, 1]} : vector<9x32xf32> to vector<9x8xf32>
    %18 = vector.extract_strided_slice %15 {offsets = [0, 0], sizes = [9, 8], strides = [1, 1]} : vector<9x32xf32> to vector<9x8xf32>
    %19 = vector.extract_strided_slice %13 {offsets = [0, 8], sizes = [9, 8], strides = [1, 1]} : vector<9x32xf32> to vector<9x8xf32>
    %20 = vector.extract_strided_slice %14 {offsets = [0, 8], sizes = [9, 8], strides = [1, 1]} : vector<9x32xf32> to vector<9x8xf32>
    %21 = vector.extract_strided_slice %15 {offsets = [0, 8], sizes = [9, 8], strides = [1, 1]} : vector<9x32xf32> to vector<9x8xf32>
    %22 = vector.extract_strided_slice %13 {offsets = [0, 16], sizes = [9, 8], strides = [1, 1]} : vector<9x32xf32> to vector<9x8xf32>
    %23 = vector.extract_strided_slice %14 {offsets = [0, 16], sizes = [9, 8], strides = [1, 1]} : vector<9x32xf32> to vector<9x8xf32>
    %24 = vector.extract_strided_slice %15 {offsets = [0, 16], sizes = [9, 8], strides = [1, 1]} : vector<9x32xf32> to vector<9x8xf32>
    %25 = vector.extract_strided_slice %13 {offsets = [0, 24], sizes = [9, 8], strides = [1, 1]} : vector<9x32xf32> to vector<9x8xf32>
    %26 = vector.extract_strided_slice %14 {offsets = [0, 24], sizes = [9, 8], strides = [1, 1]} : vector<9x32xf32> to vector<9x8xf32>
    %27 = vector.extract_strided_slice %15 {offsets = [0, 24], sizes = [9, 8], strides = [1, 1]} : vector<9x32xf32> to vector<9x8xf32>
    %28 = vector.shape_cast %16 : vector<9x8xf32> to vector<1x9x8xf32>
    %29 = vector.shape_cast %19 : vector<9x8xf32> to vector<1x9x8xf32>
    %30 = vector.shape_cast %22 : vector<9x8xf32> to vector<1x9x8xf32>
    %31 = vector.shape_cast %25 : vector<9x8xf32> to vector<1x9x8xf32>
    %32 = tpu.concatenate %28, %29, %30, %31 in 0 : vector<1x9x8xf32>, vector<1x9x8xf32>, vector<1x9x8xf32>, vector<1x9x8xf32> -> vector<4x9x8xf32>
    %33 = vector.shape_cast %17 : vector<9x8xf32> to vector<1x9x8xf32>
    %34 = vector.shape_cast %20 : vector<9x8xf32> to vector<1x9x8xf32>
    %35 = vector.shape_cast %23 : vector<9x8xf32> to vector<1x9x8xf32>
    %36 = vector.shape_cast %26 : vector<9x8xf32> to vector<1x9x8xf32>
    %37 = tpu.concatenate %33, %34, %35, %36 in 0 : vector<1x9x8xf32>, vector<1x9x8xf32>, vector<1x9x8xf32>, vector<1x9x8xf32> -> vector<4x9x8xf32>
    %38 = vector.shape_cast %18 : vector<9x8xf32> to vector<1x9x8xf32>
    %39 = vector.shape_cast %21 : vector<9x8xf32> to vector<1x9x8xf32>
    %40 = vector.shape_cast %24 : vector<9x8xf32> to vector<1x9x8xf32>
    %41 = vector.shape_cast %27 : vector<9x8xf32> to vector<1x9x8xf32>
    %42 = tpu.concatenate %38, %39, %40, %41 in 0 : vector<1x9x8xf32>, vector<1x9x8xf32>, vector<1x9x8xf32>, vector<1x9x8xf32> -> vector<4x9x8xf32>
    "tpu.trace_start"() <{level = 10 : i32, message = "zqe,zke->zqk"}> : () -> ()
    %cst_12 = arith.constant dense<0.000000e+00> : vector<4x9x9xf32>
    %43 = tpu.matmul %32, %37, %cst_12 {dimension_numbers = #tpu.dot_dimension_numbers<[2], [2], [1], [1], [0, 0, 0, 1, 1, 1], [0], [0]>} : vector<4x9x8xf32>, vector<4x9x8xf32>, vector<4x9x9xf32> -> vector<4x9x9xf32>
    "tpu.trace_stop"() : () -> ()
    %cst_13 = arith.constant dense<0xFF800000> : vector<4x9xf32>
    %44 = vector.multi_reduction <maximumf>, %43, %cst_13 [2] : vector<4x9x9xf32> to vector<4x9xf32>
    %45 = vector.shape_cast %44 : vector<4x9xf32> to vector<4x9x1xf32>
    %46 = vector.broadcast %45 : vector<4x9x1xf32> to vector<4x9x9xf32>
    %47 = arith.subf %43, %46 : vector<4x9x9xf32>
    %48 = math.exp %47 : vector<4x9x9xf32>
    %cst_14 = arith.constant dense<0.000000e+00> : vector<4x9xf32>
    %49 = vector.multi_reduction <add>, %48, %cst_14 [2] : vector<4x9x9xf32> to vector<4x9xf32>
    %50 = vector.shape_cast %49 : vector<4x9xf32> to vector<4x9x1xf32>
    %51 = vector.broadcast %50 : vector<4x9x1xf32> to vector<4x9x9xf32>
    %52 = arith.divf %48, %51 : vector<4x9x9xf32>
    "tpu.trace_start"() <{level = 10 : i32, message = "zqk,zke->zqe"}> : () -> ()
    %cst_15 = arith.constant dense<0.000000e+00> : vector<4x9x8xf32>
    %53 = tpu.matmul %52, %42, %cst_15 {dimension_numbers = #tpu.dot_dimension_numbers<[2], [1], [1], [2], [0, 0, 0, 1, 1, 2], [0], [0]>} : vector<4x9x9xf32>, vector<4x9x8xf32>, vector<4x9x8xf32> -> vector<4x9x8xf32>
    "tpu.trace_stop"() : () -> ()
    %54 = vector.extract_strided_slice %53 {offsets = [0, 0, 0], sizes = [1, 9, 8], strides = [1, 1, 1]} : vector<4x9x8xf32> to vector<1x9x8xf32>
    %55 = vector.shape_cast %54 : vector<1x9x8xf32> to vector<9x8xf32>
    %56 = vector.extract_strided_slice %53 {offsets = [1, 0, 0], sizes = [1, 9, 8], strides = [1, 1, 1]} : vector<4x9x8xf32> to vector<1x9x8xf32>
    %57 = vector.shape_cast %56 : vector<1x9x8xf32> to vector<9x8xf32>
    %58 = vector.extract_strided_slice %53 {offsets = [2, 0, 0], sizes = [1, 9, 8], strides = [1, 1, 1]} : vector<4x9x8xf32> to vector<1x9x8xf32>
    %59 = vector.shape_cast %58 : vector<1x9x8xf32> to vector<9x8xf32>
    %60 = vector.extract_strided_slice %53 {offsets = [3, 0, 0], sizes = [1, 9, 8], strides = [1, 1, 1]} : vector<4x9x8xf32> to vector<1x9x8xf32>
    %61 = vector.shape_cast %60 : vector<1x9x8xf32> to vector<9x8xf32>
    %62 = tpu.concatenate %55, %57, %59, %61 in 1 : vector<9x8xf32>, vector<9x8xf32>, vector<9x8xf32>, vector<9x8xf32> -> vector<9x32xf32>
    %c0_16 = arith.constant 0 : index
    %c0_17 = arith.constant 0 : index
    %c0_18 = arith.constant 0 : index
    %63 = vector.load %arg6[%c0_16, %c0_17, %c0_18] : memref<1x32x32xf32, #tpu.memory_space<vmem>>, vector<1x32x32xf32>
    %64 = vector.shape_cast %63 : vector<1x32x32xf32> to vector<32x32xf32>
    %cst_19 = arith.constant dense<0.000000e+00> : vector<9x32xf32>
    %65 = tpu.matmul %62, %64, %cst_19 {dimension_numbers = #tpu.dot_dimension_numbers<[1], [0], [0], [1], [0, 0, 1, 1], [], []>} : vector<9x32xf32>, vector<32x32xf32>, vector<9x32xf32> -> vector<9x32xf32>
    %c0_20 = arith.constant 0 : index
    %c0_21 = arith.constant 0 : index
    %c0_22 = arith.constant 0 : index
    %66 = vector.load %arg7[%c0_20, %c0_21, %c0_22] : memref<1x1x32xf32, #tpu.memory_space<vmem>>, vector<1x1x32xf32>
    %67 = vector.shape_cast %66 : vector<1x1x32xf32> to vector<1x32xf32>
    %68 = vector.broadcast %67 : vector<1x32xf32> to vector<9x32xf32>
    %69 = arith.addf %65, %68 : vector<9x32xf32>
    %70 = vector.shape_cast %69 : vector<9x32xf32> to vector<1x9x32xf32>
    %71 = arith.addf %3, %70 : vector<1x9x32xf32>
    %cst_23 = arith.constant dense<0.000000e+00> : vector<1x9xf32>
    %72 = vector.multi_reduction <add>, %71, %cst_23 [2] : vector<1x9x32xf32> to vector<1x9xf32>
    %73 = vector.shape_cast %72 : vector<1x9xf32> to vector<1x9x1xf32>
    %cst_24 = arith.constant 3.200000e+01 : f32
    %74 = vector.broadcast %cst_24 : f32 to vector<1x9x1xf32>
    %75 = arith.divf %73, %74 : vector<1x9x1xf32>
    %76 = vector.broadcast %75 : vector<1x9x1xf32> to vector<1x9x32xf32>
    %77 = arith.subf %71, %76 : vector<1x9x32xf32>
    %78 = arith.mulf %77, %77 : vector<1x9x32xf32>
    %cst_25 = arith.constant dense<0.000000e+00> : vector<1x9xf32>
    %79 = vector.multi_reduction <add>, %78, %cst_25 [2] : vector<1x9x32xf32> to vector<1x9xf32>
    %80 = vector.shape_cast %79 : vector<1x9xf32> to vector<1x9x1xf32>
    %cst_26 = arith.constant 3.200000e+01 : f32
    %81 = vector.broadcast %cst_26 : f32 to vector<1x9x1xf32>
    %82 = arith.divf %80, %81 : vector<1x9x1xf32>
    %cst_27 = arith.constant 9.99999974E-6 : f32
    %83 = vector.broadcast %cst_27 : f32 to vector<1x9x1xf32>
    %84 = arith.addf %82, %83 : vector<1x9x1xf32>
    %85 = math.rsqrt %84 : vector<1x9x1xf32>
    %86 = vector.broadcast %85 : vector<1x9x1xf32> to vector<1x9x32xf32>
    %87 = arith.mulf %77, %86 : vector<1x9x32xf32>
    %c0_28 = arith.constant 0 : index
    %c0_29 = arith.constant 0 : index
    %c0_30 = arith.constant 0 : index
    %88 = vector.load %arg14[%c0_28, %c0_29, %c0_30] : memref<1x1x32xf32, #tpu.memory_space<vmem>>, vector<1x1x32xf32>
    %89 = vector.shape_cast %88 : vector<1x1x32xf32> to vector<1x32xf32>
    %90 = vector.shape_cast %89 : vector<1x32xf32> to vector<1x1x32xf32>
    %91 = vector.broadcast %90 : vector<1x1x32xf32> to vector<1x9x32xf32>
    %92 = arith.mulf %87, %91 : vector<1x9x32xf32>
    %c0_31 = arith.constant 0 : index
    %c0_32 = arith.constant 0 : index
    %c0_33 = arith.constant 0 : index
    %93 = vector.load %arg15[%c0_31, %c0_32, %c0_33] : memref<1x1x32xf32, #tpu.memory_space<vmem>>, vector<1x1x32xf32>
    %94 = vector.shape_cast %93 : vector<1x1x32xf32> to vector<1x32xf32>
    %95 = vector.shape_cast %94 : vector<1x32xf32> to vector<1x1x32xf32>
    %96 = vector.broadcast %95 : vector<1x1x32xf32> to vector<1x9x32xf32>
    %97 = arith.addf %92, %96 : vector<1x9x32xf32>
    %98 = vector.extract_strided_slice %97 {offsets = [0, 8, 0], sizes = [1, 1, 32], strides = [1, 1, 1]} : vector<1x9x32xf32> to vector<1x1x32xf32>
    %99 = vector.shape_cast %98 : vector<1x1x32xf32> to vector<1x32xf32>
    %c0_34 = arith.constant 0 : index
    %c0_35 = arith.constant 0 : index
    %c0_36 = arith.constant 0 : index
    %100 = vector.load %arg8[%c0_34, %c0_35, %c0_36] : memref<1x32x32xf32, #tpu.memory_space<vmem>>, vector<1x32x32xf32>
    %101 = vector.shape_cast %100 : vector<1x32x32xf32> to vector<32x32xf32>
    %cst_37 = arith.constant dense<0.000000e+00> : vector<1x32xf32>
    %102 = tpu.matmul %99, %101, %cst_37 {dimension_numbers = #tpu.dot_dimension_numbers<[1], [0], [0], [1], [0, 0, 1, 1], [], []>} : vector<1x32xf32>, vector<32x32xf32>, vector<1x32xf32> -> vector<1x32xf32>
    %c0_38 = arith.constant 0 : index
    %c0_39 = arith.constant 0 : index
    %c0_40 = arith.constant 0 : index
    %103 = vector.load %arg9[%c0_38, %c0_39, %c0_40] : memref<1x1x32xf32, #tpu.memory_space<vmem>>, vector<1x1x32xf32>
    %104 = vector.shape_cast %103 : vector<1x1x32xf32> to vector<1x32xf32>
    %105 = arith.addf %102, %104 : vector<1x32xf32>
    %106 = vector.shape_cast %4 : vector<1x8x32xf32> to vector<8x32xf32>
    %c0_41 = arith.constant 0 : index
    %c0_42 = arith.constant 0 : index
    %c0_43 = arith.constant 0 : index
    %107 = vector.load %arg10[%c0_41, %c0_42, %c0_43] : memref<1x32x64xf32, #tpu.memory_space<vmem>>, vector<1x32x64xf32>
    %108 = vector.shape_cast %107 : vector<1x32x64xf32> to vector<32x64xf32>
    %cst_44 = arith.constant dense<0.000000e+00> : vector<8x64xf32>
    %109 = tpu.matmul %106, %108, %cst_44 {dimension_numbers = #tpu.dot_dimension_numbers<[1], [0], [0], [1], [0, 0, 1, 1], [], []>} : vector<8x32xf32>, vector<32x64xf32>, vector<8x64xf32> -> vector<8x64xf32>
    %c0_45 = arith.constant 0 : index
    %c0_46 = arith.constant 0 : index
    %c0_47 = arith.constant 0 : index
    %110 = vector.load %arg11[%c0_45, %c0_46, %c0_47] : memref<1x1x64xf32, #tpu.memory_space<vmem>>, vector<1x1x64xf32>
    %111 = vector.shape_cast %110 : vector<1x1x64xf32> to vector<1x64xf32>
    %112 = vector.broadcast %111 : vector<1x64xf32> to vector<8x64xf32>
    %113 = arith.addf %109, %112 : vector<8x64xf32>
    %114 = vector.extract_strided_slice %113 {offsets = [0, 0], sizes = [8, 32], strides = [1, 1]} : vector<8x64xf32> to vector<8x32xf32>
    %115 = vector.extract_strided_slice %113 {offsets = [0, 32], sizes = [8, 32], strides = [1, 1]} : vector<8x64xf32> to vector<8x32xf32>
    %116 = vector.extract_strided_slice %105 {offsets = [0, 0], sizes = [1, 8], strides = [1, 1]} : vector<1x32xf32> to vector<1x8xf32>
    %117 = vector.extract_strided_slice %114 {offsets = [0, 0], sizes = [8, 8], strides = [1, 1]} : vector<8x32xf32> to vector<8x8xf32>
    %118 = vector.extract_strided_slice %115 {offsets = [0, 0], sizes = [8, 8], strides = [1, 1]} : vector<8x32xf32> to vector<8x8xf32>
    %119 = vector.extract_strided_slice %105 {offsets = [0, 8], sizes = [1, 8], strides = [1, 1]} : vector<1x32xf32> to vector<1x8xf32>
    %120 = vector.extract_strided_slice %114 {offsets = [0, 8], sizes = [8, 8], strides = [1, 1]} : vector<8x32xf32> to vector<8x8xf32>
    %121 = vector.extract_strided_slice %115 {offsets = [0, 8], sizes = [8, 8], strides = [1, 1]} : vector<8x32xf32> to vector<8x8xf32>
    %122 = vector.extract_strided_slice %105 {offsets = [0, 16], sizes = [1, 8], strides = [1, 1]} : vector<1x32xf32> to vector<1x8xf32>
    %123 = vector.extract_strided_slice %114 {offsets = [0, 16], sizes = [8, 8], strides = [1, 1]} : vector<8x32xf32> to vector<8x8xf32>
    %124 = vector.extract_strided_slice %115 {offsets = [0, 16], sizes = [8, 8], strides = [1, 1]} : vector<8x32xf32> to vector<8x8xf32>
    %125 = vector.extract_strided_slice %105 {offsets = [0, 24], sizes = [1, 8], strides = [1, 1]} : vector<1x32xf32> to vector<1x8xf32>
    %126 = vector.extract_strided_slice %114 {offsets = [0, 24], sizes = [8, 8], strides = [1, 1]} : vector<8x32xf32> to vector<8x8xf32>
    %127 = vector.extract_strided_slice %115 {offsets = [0, 24], sizes = [8, 8], strides = [1, 1]} : vector<8x32xf32> to vector<8x8xf32>
    %128 = vector.shape_cast %116 : vector<1x8xf32> to vector<1x1x8xf32>
    %129 = vector.shape_cast %119 : vector<1x8xf32> to vector<1x1x8xf32>
    %130 = vector.shape_cast %122 : vector<1x8xf32> to vector<1x1x8xf32>
    %131 = vector.shape_cast %125 : vector<1x8xf32> to vector<1x1x8xf32>
    %132 = tpu.concatenate %128, %129, %130, %131 in 0 : vector<1x1x8xf32>, vector<1x1x8xf32>, vector<1x1x8xf32>, vector<1x1x8xf32> -> vector<4x1x8xf32>
    %133 = vector.shape_cast %117 : vector<8x8xf32> to vector<1x8x8xf32>
    %134 = vector.shape_cast %120 : vector<8x8xf32> to vector<1x8x8xf32>
    %135 = vector.shape_cast %123 : vector<8x8xf32> to vector<1x8x8xf32>
    %136 = vector.shape_cast %126 : vector<8x8xf32> to vector<1x8x8xf32>
    %137 = tpu.concatenate %133, %134, %135, %136 in 0 : vector<1x8x8xf32>, vector<1x8x8xf32>, vector<1x8x8xf32>, vector<1x8x8xf32> -> vector<4x8x8xf32>
    %138 = vector.shape_cast %118 : vector<8x8xf32> to vector<1x8x8xf32>
    %139 = vector.shape_cast %121 : vector<8x8xf32> to vector<1x8x8xf32>
    %140 = vector.shape_cast %124 : vector<8x8xf32> to vector<1x8x8xf32>
    %141 = vector.shape_cast %127 : vector<8x8xf32> to vector<1x8x8xf32>
    %142 = tpu.concatenate %138, %139, %140, %141 in 0 : vector<1x8x8xf32>, vector<1x8x8xf32>, vector<1x8x8xf32>, vector<1x8x8xf32> -> vector<4x8x8xf32>
    "tpu.trace_start"() <{level = 10 : i32, message = "zqe,zke->zqk"}> : () -> ()
    %cst_48 = arith.constant dense<0.000000e+00> : vector<4x1x8xf32>
    %143 = tpu.matmul %132, %137, %cst_48 {dimension_numbers = #tpu.dot_dimension_numbers<[2], [2], [1], [1], [0, 0, 0, 1, 1, 1], [0], [0]>} : vector<4x1x8xf32>, vector<4x8x8xf32>, vector<4x1x8xf32> -> vector<4x1x8xf32>
    "tpu.trace_stop"() : () -> ()
    %cst_49 = arith.constant dense<0xFF800000> : vector<4x1xf32>
    %144 = vector.multi_reduction <maximumf>, %143, %cst_49 [2] : vector<4x1x8xf32> to vector<4x1xf32>
    %145 = vector.shape_cast %144 : vector<4x1xf32> to vector<4x1x1xf32>
    %146 = vector.broadcast %145 : vector<4x1x1xf32> to vector<4x1x8xf32>
    %147 = arith.subf %143, %146 : vector<4x1x8xf32>
    %148 = math.exp %147 : vector<4x1x8xf32>
    %cst_50 = arith.constant dense<0.000000e+00> : vector<4x1xf32>
    %149 = vector.multi_reduction <add>, %148, %cst_50 [2] : vector<4x1x8xf32> to vector<4x1xf32>
    %150 = vector.shape_cast %149 : vector<4x1xf32> to vector<4x1x1xf32>
    %151 = vector.broadcast %150 : vector<4x1x1xf32> to vector<4x1x8xf32>
    %152 = arith.divf %148, %151 : vector<4x1x8xf32>
    "tpu.trace_start"() <{level = 10 : i32, message = "zqk,zke->zqe"}> : () -> ()
    %cst_51 = arith.constant dense<0.000000e+00> : vector<4x1x8xf32>
    %153 = tpu.matmul %152, %142, %cst_51 {dimension_numbers = #tpu.dot_dimension_numbers<[2], [1], [1], [2], [0, 0, 0, 1, 1, 2], [0], [0]>} : vector<4x1x8xf32>, vector<4x8x8xf32>, vector<4x1x8xf32> -> vector<4x1x8xf32>
    "tpu.trace_stop"() : () -> ()
    %154 = vector.extract_strided_slice %153 {offsets = [0, 0, 0], sizes = [1, 1, 8], strides = [1, 1, 1]} : vector<4x1x8xf32> to vector<1x1x8xf32>
    %155 = vector.shape_cast %154 : vector<1x1x8xf32> to vector<1x8xf32>
    %156 = vector.extract_strided_slice %153 {offsets = [1, 0, 0], sizes = [1, 1, 8], strides = [1, 1, 1]} : vector<4x1x8xf32> to vector<1x1x8xf32>
    %157 = vector.shape_cast %156 : vector<1x1x8xf32> to vector<1x8xf32>
    %158 = vector.extract_strided_slice %153 {offsets = [2, 0, 0], sizes = [1, 1, 8], strides = [1, 1, 1]} : vector<4x1x8xf32> to vector<1x1x8xf32>
    %159 = vector.shape_cast %158 : vector<1x1x8xf32> to vector<1x8xf32>
    %160 = vector.extract_strided_slice %153 {offsets = [3, 0, 0], sizes = [1, 1, 8], strides = [1, 1, 1]} : vector<4x1x8xf32> to vector<1x1x8xf32>
    %161 = vector.shape_cast %160 : vector<1x1x8xf32> to vector<1x8xf32>
    %162 = tpu.concatenate %155, %157, %159, %161 in 1 : vector<1x8xf32>, vector<1x8xf32>, vector<1x8xf32>, vector<1x8xf32> -> vector<1x32xf32>
    %c0_52 = arith.constant 0 : index
    %c0_53 = arith.constant 0 : index
    %c0_54 = arith.constant 0 : index
    %163 = vector.load %arg12[%c0_52, %c0_53, %c0_54] : memref<1x32x32xf32, #tpu.memory_space<vmem>>, vector<1x32x32xf32>
    %164 = vector.shape_cast %163 : vector<1x32x32xf32> to vector<32x32xf32>
    %cst_55 = arith.constant dense<0.000000e+00> : vector<1x32xf32>
    %165 = tpu.matmul %162, %164, %cst_55 {dimension_numbers = #tpu.dot_dimension_numbers<[1], [0], [0], [1], [0, 0, 1, 1], [], []>} : vector<1x32xf32>, vector<32x32xf32>, vector<1x32xf32> -> vector<1x32xf32>
    %c0_56 = arith.constant 0 : index
    %c0_57 = arith.constant 0 : index
    %c0_58 = arith.constant 0 : index
    %166 = vector.load %arg13[%c0_56, %c0_57, %c0_58] : memref<1x1x32xf32, #tpu.memory_space<vmem>>, vector<1x1x32xf32>
    %167 = vector.shape_cast %166 : vector<1x1x32xf32> to vector<1x32xf32>
    %168 = arith.addf %165, %167 : vector<1x32xf32>
    %169 = arith.addf %99, %168 : vector<1x32xf32>
    %170 = vector.shape_cast %169 : vector<1x32xf32> to vector<1x1x32xf32>
    %cst_59 = arith.constant dense<0.000000e+00> : vector<1x1xf32>
    %171 = vector.multi_reduction <add>, %170, %cst_59 [2] : vector<1x1x32xf32> to vector<1x1xf32>
    %172 = vector.shape_cast %171 : vector<1x1xf32> to vector<1x1x1xf32>
    %cst_60 = arith.constant 3.200000e+01 : f32
    %173 = vector.broadcast %cst_60 : f32 to vector<1x1x1xf32>
    %174 = arith.divf %172, %173 : vector<1x1x1xf32>
    %175 = vector.broadcast %174 : vector<1x1x1xf32> to vector<1x1x32xf32>
    %176 = arith.subf %170, %175 : vector<1x1x32xf32>
    %177 = arith.mulf %176, %176 : vector<1x1x32xf32>
    %cst_61 = arith.constant dense<0.000000e+00> : vector<1x1xf32>
    %178 = vector.multi_reduction <add>, %177, %cst_61 [2] : vector<1x1x32xf32> to vector<1x1xf32>
    %179 = vector.shape_cast %178 : vector<1x1xf32> to vector<1x1x1xf32>
    %cst_62 = arith.constant 3.200000e+01 : f32
    %180 = vector.broadcast %cst_62 : f32 to vector<1x1x1xf32>
    %181 = arith.divf %179, %180 : vector<1x1x1xf32>
    %cst_63 = arith.constant 9.99999974E-6 : f32
    %182 = vector.broadcast %cst_63 : f32 to vector<1x1x1xf32>
    %183 = arith.addf %181, %182 : vector<1x1x1xf32>
    %184 = math.rsqrt %183 : vector<1x1x1xf32>
    %185 = vector.broadcast %184 : vector<1x1x1xf32> to vector<1x1x32xf32>
    %186 = arith.mulf %176, %185 : vector<1x1x32xf32>
    %c0_64 = arith.constant 0 : index
    %c0_65 = arith.constant 0 : index
    %c0_66 = arith.constant 0 : index
    %187 = vector.load %arg16[%c0_64, %c0_65, %c0_66] : memref<1x1x32xf32, #tpu.memory_space<vmem>>, vector<1x1x32xf32>
    %188 = vector.shape_cast %187 : vector<1x1x32xf32> to vector<1x32xf32>
    %189 = vector.shape_cast %188 : vector<1x32xf32> to vector<1x1x32xf32>
    %190 = arith.mulf %186, %189 : vector<1x1x32xf32>
    %c0_67 = arith.constant 0 : index
    %c0_68 = arith.constant 0 : index
    %c0_69 = arith.constant 0 : index
    %191 = vector.load %arg17[%c0_67, %c0_68, %c0_69] : memref<1x1x32xf32, #tpu.memory_space<vmem>>, vector<1x1x32xf32>
    %192 = vector.shape_cast %191 : vector<1x1x32xf32> to vector<1x32xf32>
    %193 = vector.shape_cast %192 : vector<1x32xf32> to vector<1x1x32xf32>
    %194 = arith.addf %190, %193 : vector<1x1x32xf32>
    %c0_70 = arith.constant 0 : index
    %c0_71 = arith.constant 0 : index
    %c0_72 = arith.constant 0 : index
    %195 = vector.load %arg29[%c0_70, %c0_71, %c0_72] : memref<1x9x32xf32, #tpu.memory_space<vmem>>, vector<1x9x32xf32>
    tpu.vector_store %arg29[%c0_70, %c0_71, %c0_72], %97 {strides = array<i32>} : memref<1x9x32xf32, #tpu.memory_space<vmem>>, vector<1x9x32xf32>,
    %c0_73 = arith.constant 0 : index
    %c8 = arith.constant 8 : index
    %c0_74 = arith.constant 0 : index
    %196 = vector.load %arg29[%c0_73, %c8, %c0_74] : memref<1x9x32xf32, #tpu.memory_space<vmem>>, vector<1x1x32xf32>
    tpu.vector_store %arg29[%c0_73, %c8, %c0_74], %194 {strides = array<i32>} : memref<1x9x32xf32, #tpu.memory_space<vmem>>, vector<1x1x32xf32>,
    %c0_75 = arith.constant 0 : index
    %c0_76 = arith.constant 0 : index
    %c0_77 = arith.constant 0 : index
    %197 = vector.load %arg29[%c0_75, %c0_76, %c0_77] : memref<1x9x32xf32, #tpu.memory_space<vmem>>, vector<1x9x32xf32>
    %198 = vector.shape_cast %197 : vector<1x9x32xf32> to vector<9x32xf32>
    %c0_78 = arith.constant 0 : index
    %c0_79 = arith.constant 0 : index
    %c0_80 = arith.constant 0 : index
    %199 = vector.load %arg20[%c0_78, %c0_79, %c0_80] : memref<1x32x64xf32, #tpu.memory_space<vmem>>, vector<1x32x64xf32>
    %200 = vector.shape_cast %199 : vector<1x32x64xf32> to vector<32x64xf32>
    %cst_81 = arith.constant dense<0.000000e+00> : vector<9x64xf32>
    %201 = tpu.matmul %198, %200, %cst_81 {dimension_numbers = #tpu.dot_dimension_numbers<[1], [0], [0], [1], [0, 0, 1, 1], [], []>} : vector<9x32xf32>, vector<32x64xf32>, vector<9x64xf32> -> vector<9x64xf32>
    %c0_82 = arith.constant 0 : index
    %c0_83 = arith.constant 0 : index
    %c0_84 = arith.constant 0 : index
    %202 = vector.load %arg21[%c0_82, %c0_83, %c0_84] : memref<1x1x64xf32, #tpu.memory_space<vmem>>, vector<1x1x64xf32>
    %203 = vector.shape_cast %202 : vector<1x1x64xf32> to vector<1x64xf32>
    %204 = vector.broadcast %203 : vector<1x64xf32> to vector<9x64xf32>
    %205 = arith.addf %201, %204 : vector<9x64xf32>
    %cst_85 = arith.constant 0.000000e+00 : f32
    %206 = vector.broadcast %cst_85 : f32 to vector<9x64xf32>
    %207 = arith.maximumf %205, %206 : vector<9x64xf32>
    %c0_86 = arith.constant 0 : index
    %c0_87 = arith.constant 0 : index
    %c0_88 = arith.constant 0 : index
    %208 = vector.load %arg22[%c0_86, %c0_87, %c0_88] : memref<1x64x32xf32, #tpu.memory_space<vmem>>, vector<1x64x32xf32>
    %209 = vector.shape_cast %208 : vector<1x64x32xf32> to vector<64x32xf32>
    %cst_89 = arith.constant dense<0.000000e+00> : vector<9x32xf32>
    %210 = tpu.matmul %207, %209, %cst_89 {dimension_numbers = #tpu.dot_dimension_numbers<[1], [0], [0], [1], [0, 0, 1, 1], [], []>} : vector<9x64xf32>, vector<64x32xf32>, vector<9x32xf32> -> vector<9x32xf32>
    %c0_90 = arith.constant 0 : index
    %c0_91 = arith.constant 0 : index
    %c0_92 = arith.constant 0 : index
    %211 = vector.load %arg23[%c0_90, %c0_91, %c0_92] : memref<1x1x32xf32, #tpu.memory_space<vmem>>, vector<1x1x32xf32>
    %212 = vector.shape_cast %211 : vector<1x1x32xf32> to vector<1x32xf32>
    %213 = vector.broadcast %212 : vector<1x32xf32> to vector<9x32xf32>
    %214 = arith.addf %210, %213 : vector<9x32xf32>
    %215 = vector.shape_cast %214 : vector<9x32xf32> to vector<1x9x32xf32>
    %216 = arith.addf %197, %215 : vector<1x9x32xf32>
    %cst_93 = arith.constant dense<0.000000e+00> : vector<1x9xf32>
    %217 = vector.multi_reduction <add>, %216, %cst_93 [2] : vector<1x9x32xf32> to vector<1x9xf32>
    %218 = vector.shape_cast %217 : vector<1x9xf32> to vector<1x9x1xf32>
    %cst_94 = arith.constant 3.200000e+01 : f32
    %219 = vector.broadcast %cst_94 : f32 to vector<1x9x1xf32>
    %220 = arith.divf %218, %219 : vector<1x9x1xf32>
    %221 = vector.broadcast %220 : vector<1x9x1xf32> to vector<1x9x32xf32>
    %222 = arith.subf %216, %221 : vector<1x9x32xf32>
    %223 = arith.mulf %222, %222 : vector<1x9x32xf32>
    %cst_95 = arith.constant dense<0.000000e+00> : vector<1x9xf32>
    %224 = vector.multi_reduction <add>, %223, %cst_95 [2] : vector<1x9x32xf32> to vector<1x9xf32>
    %225 = vector.shape_cast %224 : vector<1x9xf32> to vector<1x9x1xf32>
    %cst_96 = arith.constant 3.200000e+01 : f32
    %226 = vector.broadcast %cst_96 : f32 to vector<1x9x1xf32>
    %227 = arith.divf %225, %226 : vector<1x9x1xf32>
    %cst_97 = arith.constant 9.99999974E-6 : f32
    %228 = vector.broadcast %cst_97 : f32 to vector<1x9x1xf32>
    %229 = arith.addf %227, %228 : vector<1x9x1xf32>
    %230 = math.rsqrt %229 : vector<1x9x1xf32>
    %231 = vector.broadcast %230 : vector<1x9x1xf32> to vector<1x9x32xf32>
    %232 = arith.mulf %222, %231 : vector<1x9x32xf32>
    %c0_98 = arith.constant 0 : index
    %c0_99 = arith.constant 0 : index
    %c0_100 = arith.constant 0 : index
    %233 = vector.load %arg18[%c0_98, %c0_99, %c0_100] : memref<1x1x32xf32, #tpu.memory_space<vmem>>, vector<1x1x32xf32>
    %234 = vector.shape_cast %233 : vector<1x1x32xf32> to vector<1x32xf32>
    %235 = vector.shape_cast %234 : vector<1x32xf32> to vector<1x1x32xf32>
    %236 = vector.broadcast %235 : vector<1x1x32xf32> to vector<1x9x32xf32>
    %237 = arith.mulf %232, %236 : vector<1x9x32xf32>
    %c0_101 = arith.constant 0 : index
    %c0_102 = arith.constant 0 : index
    %c0_103 = arith.constant 0 : index
    %238 = vector.load %arg19[%c0_101, %c0_102, %c0_103] : memref<1x1x32xf32, #tpu.memory_space<vmem>>, vector<1x1x32xf32>
    %239 = vector.shape_cast %238 : vector<1x1x32xf32> to vector<1x32xf32>
    %240 = vector.shape_cast %239 : vector<1x32xf32> to vector<1x1x32xf32>
    %241 = vector.broadcast %240 : vector<1x1x32xf32> to vector<1x9x32xf32>
    %242 = arith.addf %237, %241 : vector<1x9x32xf32>
    %c0_104 = arith.constant 0 : index
    %c0_105 = arith.constant 0 : index
    %c0_106 = arith.constant 0 : index
    %243 = vector.load %arg29[%c0_104, %c0_105, %c0_106] : memref<1x9x32xf32, #tpu.memory_space<vmem>>, vector<1x9x32xf32>
    tpu.vector_store %arg29[%c0_104, %c0_105, %c0_106], %242 {strides = array<i32>} : memref<1x9x32xf32, #tpu.memory_space<vmem>>, vector<1x9x32xf32>,
    %c1_i32 = arith.constant 1 : i32
    %244 = arith.cmpi eq, %arg1, %c1_i32 : i32
    %245 = arith.extui %244 : i1 to i32
    %c0_i32_107 = arith.constant 0 : i32
    %246 = arith.cmpi ne, %245, %c0_i32_107 : i32
    scf.if %246 {
      %cst_108 = arith.constant dense<0.000000e+00> : vector<1x9xf32>
      %247 = vector.multi_reduction <add>, %242, %cst_108 [2] : vector<1x9x32xf32> to vector<1x9xf32>
      %248 = vector.shape_cast %247 : vector<1x9xf32> to vector<1x9x1xf32>
      %cst_109 = arith.constant 3.200000e+01 : f32
      %249 = vector.broadcast %cst_109 : f32 to vector<1x9x1xf32>
      %250 = arith.divf %248, %249 : vector<1x9x1xf32>
      %251 = vector.broadcast %250 : vector<1x9x1xf32> to vector<1x9x32xf32>
      %252 = arith.subf %242, %251 : vector<1x9x32xf32>
      %253 = arith.mulf %252, %252 : vector<1x9x32xf32>
      %cst_110 = arith.constant dense<0.000000e+00> : vector<1x9xf32>
      %254 = vector.multi_reduction <add>, %253, %cst_110 [2] : vector<1x9x32xf32> to vector<1x9xf32>
      %255 = vector.shape_cast %254 : vector<1x9xf32> to vector<1x9x1xf32>
      %cst_111 = arith.constant 3.200000e+01 : f32
      %256 = vector.broadcast %cst_111 : f32 to vector<1x9x1xf32>
      %257 = arith.divf %255, %256 : vector<1x9x1xf32>
      %cst_112 = arith.constant 9.99999974E-6 : f32
      %258 = vector.broadcast %cst_112 : f32 to vector<1x9x1xf32>
      %259 = arith.addf %257, %258 : vector<1x9x1xf32>
      %260 = math.rsqrt %259 : vector<1x9x1xf32>
      %261 = vector.broadcast %260 : vector<1x9x1xf32> to vector<1x9x32xf32>
      %262 = arith.mulf %252, %261 : vector<1x9x32xf32>
      %c0_113 = arith.constant 0 : index
      %c0_114 = arith.constant 0 : index
      %263 = vector.load %arg24[%c0_113, %c0_114] : memref<1x32xf32, #tpu.memory_space<vmem>>, vector<1x32xf32>
      %264 = vector.shape_cast %263 : vector<1x32xf32> to vector<1x1x32xf32>
      %265 = vector.broadcast %264 : vector<1x1x32xf32> to vector<1x9x32xf32>
      %266 = arith.mulf %262, %265 : vector<1x9x32xf32>
      %c0_115 = arith.constant 0 : index
      %c0_116 = arith.constant 0 : index
      %267 = vector.load %arg25[%c0_115, %c0_116] : memref<1x32xf32, #tpu.memory_space<vmem>>, vector<1x32xf32>
      %268 = vector.shape_cast %267 : vector<1x32xf32> to vector<1x1x32xf32>
      %269 = vector.broadcast %268 : vector<1x1x32xf32> to vector<1x9x32xf32>
      %270 = arith.addf %266, %269 : vector<1x9x32xf32>
      %271 = vector.shape_cast %270 : vector<1x9x32xf32> to vector<9x32xf32>
      %c0_117 = arith.constant 0 : index
      %c0_118 = arith.constant 0 : index
      %272 = vector.load %arg26[%c0_117, %c0_118] : memref<32x32xf32, #tpu.memory_space<vmem>>, vector<32x32xf32>
      %cst_119 = arith.constant dense<0.000000e+00> : vector<9x32xf32>
      %273 = tpu.matmul %271, %272, %cst_119 {dimension_numbers = #tpu.dot_dimension_numbers<[1], [0], [0], [1], [0, 0, 1, 1], [], []>} : vector<9x32xf32>, vector<32x32xf32>, vector<9x32xf32> -> vector<9x32xf32>
      %c0_120 = arith.constant 0 : index
      %c0_121 = arith.constant 0 : index
      %274 = vector.load %arg27[%c0_120, %c0_121] : memref<1x32xf32, #tpu.memory_space<vmem>>, vector<1x32xf32>
      %275 = vector.broadcast %274 : vector<1x32xf32> to vector<9x32xf32>
      %276 = arith.addf %273, %275 : vector<9x32xf32>
      %277 = vector.shape_cast %276 : vector<9x32xf32> to vector<1x9x32xf32>
      %c0_122 = arith.constant 0 : index
      %c0_123 = arith.constant 0 : index
      %c0_124 = arith.constant 0 : index
      %278 = vector.load %arg28[%c0_122, %c0_123, %c0_124] : memref<1x9x32xf32, #tpu.memory_space<vmem>>, vector<1x9x32xf32>
      tpu.vector_store %arg28[%c0_122, %c0_123, %c0_124], %277 {strides = array<i32>} : memref<1x9x32xf32, #tpu.memory_space<vmem>>, vector<1x9x32xf32>,
    } else {
    }
    return
  }
  func.func @transform_0(%arg0: i32, %arg1: i32) -> (i32, i32, i32) {
    %c0_i32 = arith.constant 0 : i32
    %c0_i32_0 = arith.constant 0 : i32
    %c0_i32_1 = arith.constant 0 : i32
    return %arg0, %c0_i32, %c0_i32_0 : i32, i32, i32
  }
  func.func @transform_1(%arg0: i32, %arg1: i32) -> (i32, i32, i32) {
    %c0_i32 = arith.constant 0 : i32
    %c0_i32_0 = arith.constant 0 : i32
    %c0_i32_1 = arith.constant 0 : i32
    return %arg0, %c0_i32, %c0_i32_0 : i32, i32, i32
  }
  func.func @transform_2(%arg0: i32, %arg1: i32) -> (i32, i32, i32) {
    %c0_i32 = arith.constant 0 : i32
    %c0_i32_0 = arith.constant 0 : i32
    %c0_i32_1 = arith.constant 0 : i32
    return %arg1, %c0_i32, %c0_i32_0 : i32, i32, i32
  }
  func.func @transform_3(%arg0: i32, %arg1: i32) -> (i32, i32, i32) {
    %c0_i32 = arith.constant 0 : i32
    %c0_i32_0 = arith.constant 0 : i32
    %c0_i32_1 = arith.constant 0 : i32
    return %arg1, %c0_i32, %c0_i32_0 : i32, i32, i32
  }
  func.func @transform_4(%arg0: i32, %arg1: i32) -> (i32, i32, i32) {
    %c0_i32 = arith.constant 0 : i32
    %c0_i32_0 = arith.constant 0 : i32
    %c0_i32_1 = arith.constant 0 : i32
    return %arg1, %c0_i32, %c0_i32_0 : i32, i32, i32
  }
  func.func @transform_5(%arg0: i32, %arg1: i32) -> (i32, i32, i32) {
    %c0_i32 = arith.constant 0 : i32
    %c0_i32_0 = arith.constant 0 : i32
    %c0_i32_1 = arith.constant 0 : i32
    return %arg1, %c0_i32, %c0_i32_0 : i32, i32, i32
  }
  func.func @transform_6(%arg0: i32, %arg1: i32) -> (i32, i32, i32) {
    %c0_i32 = arith.constant 0 : i32
    %c0_i32_0 = arith.constant 0 : i32
    %c0_i32_1 = arith.constant 0 : i32
    return %arg1, %c0_i32, %c0_i32_0 : i32, i32, i32
  }
  func.func @transform_7(%arg0: i32, %arg1: i32) -> (i32, i32, i32) {
    %c0_i32 = arith.constant 0 : i32
    %c0_i32_0 = arith.constant 0 : i32
    %c0_i32_1 = arith.constant 0 : i32
    return %arg1, %c0_i32, %c0_i32_0 : i32, i32, i32
  }
  func.func @transform_8(%arg0: i32, %arg1: i32) -> (i32, i32, i32) {
    %c0_i32 = arith.constant 0 : i32
    %c0_i32_0 = arith.constant 0 : i32
    %c0_i32_1 = arith.constant 0 : i32
    return %arg1, %c0_i32, %c0_i32_0 : i32, i32, i32
  }
  func.func @transform_9(%arg0: i32, %arg1: i32) -> (i32, i32, i32) {
    %c0_i32 = arith.constant 0 : i32
    %c0_i32_0 = arith.constant 0 : i32
    %c0_i32_1 = arith.constant 0 : i32
    return %arg1, %c0_i32, %c0_i32_0 : i32, i32, i32
  }
  func.func @transform_10(%arg0: i32, %arg1: i32) -> (i32, i32, i32) {
    %c0_i32 = arith.constant 0 : i32
    %c0_i32_0 = arith.constant 0 : i32
    %c0_i32_1 = arith.constant 0 : i32
    return %arg1, %c0_i32, %c0_i32_0 : i32, i32, i32
  }
  func.func @transform_11(%arg0: i32, %arg1: i32) -> (i32, i32, i32) {
    %c0_i32 = arith.constant 0 : i32
    %c0_i32_0 = arith.constant 0 : i32
    %c0_i32_1 = arith.constant 0 : i32
    return %arg1, %c0_i32, %c0_i32_0 : i32, i32, i32
  }
  func.func @transform_12(%arg0: i32, %arg1: i32) -> (i32, i32, i32) {
    %c0_i32 = arith.constant 0 : i32
    %c0_i32_0 = arith.constant 0 : i32
    %c0_i32_1 = arith.constant 0 : i32
    return %arg1, %c0_i32, %c0_i32_0 : i32, i32, i32
  }
  func.func @transform_13(%arg0: i32, %arg1: i32) -> (i32, i32, i32) {
    %c0_i32 = arith.constant 0 : i32
    %c0_i32_0 = arith.constant 0 : i32
    %c0_i32_1 = arith.constant 0 : i32
    return %arg1, %c0_i32, %c0_i32_0 : i32, i32, i32
  }
  func.func @transform_14(%arg0: i32, %arg1: i32) -> (i32, i32, i32) {
    %c0_i32 = arith.constant 0 : i32
    %c0_i32_0 = arith.constant 0 : i32
    %c0_i32_1 = arith.constant 0 : i32
    return %arg1, %c0_i32, %c0_i32_0 : i32, i32, i32
  }
  func.func @transform_15(%arg0: i32, %arg1: i32) -> (i32, i32, i32) {
    %c0_i32 = arith.constant 0 : i32
    %c0_i32_0 = arith.constant 0 : i32
    %c0_i32_1 = arith.constant 0 : i32
    return %arg1, %c0_i32, %c0_i32_0 : i32, i32, i32
  }
  func.func @transform_16(%arg0: i32, %arg1: i32) -> (i32, i32, i32) {
    %c0_i32 = arith.constant 0 : i32
    %c0_i32_0 = arith.constant 0 : i32
    %c0_i32_1 = arith.constant 0 : i32
    return %arg1, %c0_i32, %c0_i32_0 : i32, i32, i32
  }
  func.func @transform_17(%arg0: i32, %arg1: i32) -> (i32, i32, i32) {
    %c0_i32 = arith.constant 0 : i32
    %c0_i32_0 = arith.constant 0 : i32
    %c0_i32_1 = arith.constant 0 : i32
    return %arg1, %c0_i32, %c0_i32_0 : i32, i32, i32
  }
  func.func @transform_18(%arg0: i32, %arg1: i32) -> (i32, i32, i32) {
    %c0_i32 = arith.constant 0 : i32
    %c0_i32_0 = arith.constant 0 : i32
    %c0_i32_1 = arith.constant 0 : i32
    return %arg1, %c0_i32, %c0_i32_0 : i32, i32, i32
  }
  func.func @transform_19(%arg0: i32, %arg1: i32) -> (i32, i32, i32) {
    %c0_i32 = arith.constant 0 : i32
    %c0_i32_0 = arith.constant 0 : i32
    %c0_i32_1 = arith.constant 0 : i32
    return %arg1, %c0_i32, %c0_i32_0 : i32, i32, i32
  }
  func.func @transform_20(%arg0: i32, %arg1: i32) -> (i32, i32, i32) {
    %c0_i32 = arith.constant 0 : i32
    %c0_i32_0 = arith.constant 0 : i32
    %c0_i32_1 = arith.constant 0 : i32
    return %arg1, %c0_i32, %c0_i32_0 : i32, i32, i32
  }
  func.func @transform_21(%arg0: i32, %arg1: i32) -> (i32, i32, i32) {
    %c0_i32 = arith.constant 0 : i32
    %c0_i32_0 = arith.constant 0 : i32
    %c0_i32_1 = arith.constant 0 : i32
    return %arg1, %c0_i32, %c0_i32_0 : i32, i32, i32
  }
  func.func @transform_22(%arg0: i32, %arg1: i32) -> (i32, i32) {
    %c0_i32 = arith.constant 0 : i32
    %c0_i32_0 = arith.constant 0 : i32
    %c0_i32_1 = arith.constant 0 : i32
    return %c0_i32, %c0_i32_0 : i32, i32
  }
  func.func @transform_23(%arg0: i32, %arg1: i32) -> (i32, i32) {
    %c0_i32 = arith.constant 0 : i32
    %c0_i32_0 = arith.constant 0 : i32
    %c0_i32_1 = arith.constant 0 : i32
    return %c0_i32, %c0_i32_0 : i32, i32
  }
  func.func @transform_24(%arg0: i32, %arg1: i32) -> (i32, i32) {
    %c0_i32 = arith.constant 0 : i32
    %c0_i32_0 = arith.constant 0 : i32
    %c0_i32_1 = arith.constant 0 : i32
    return %c0_i32, %c0_i32_0 : i32, i32
  }
  func.func @transform_25(%arg0: i32, %arg1: i32) -> (i32, i32) {
    %c0_i32 = arith.constant 0 : i32
    %c0_i32_0 = arith.constant 0 : i32
    %c0_i32_1 = arith.constant 0 : i32
    return %c0_i32, %c0_i32_0 : i32, i32
  }
  func.func @transform_26(%arg0: i32, %arg1: i32) -> (i32, i32, i32) {
    %c0_i32 = arith.constant 0 : i32
    %c0_i32_0 = arith.constant 0 : i32
    %c0_i32_1 = arith.constant 0 : i32
    return %arg0, %c0_i32, %c0_i32_0 : i32, i32, i32
  }
}

</mosaic_0001>

<llo_original>
// kernel: encoder_apply.1
$region0: #{encoder_apply.1}
  #allocation0 [shape = 'u32[]', space=smem, size = 0x4, offset = 0x4, fixed_abs, tag = 'smem constant byte address 0x4 - core index']
  #allocation1 [shape = 'u32[72,128]{1,0:T(1,128)}', space=vmem, size = 0x9000, scoped, tag = 'internal scratch']
  #allocation2 [shape = 'f32[1,9,32]{2,1,0:T(8,128)}', space=vmem, size = 0x2000, scoped, tag = 'scratch operand']
  %s0 = inlined_call_operand.vmem [shape: f32[2,9,32], index: 0, kind: input, shape index: {}]
  %s1 = inlined_call_operand.hbm [shape: f32[2,8,32], index: 1, kind: input, shape index: {}]
  %s2 = inlined_call_operand.vmem [shape: f32[2,32,96], index: 2, kind: input, shape index: {}]
  %s3 = inlined_call_operand.vmem [shape: f32[2,1,96], index: 3, kind: input, shape index: {}]
  %s4 = inlined_call_operand.vmem [shape: f32[2,32,32], index: 4, kind: input, shape index: {}]
  %s5 = inlined_call_operand.vmem [shape: f32[2,1,32], index: 5, kind: input, shape index: {}]
  %s6 = inlined_call_operand.vmem [shape: f32[2,32,32], index: 6, kind: input, shape index: {}]
  %s7 = inlined_call_operand.hbm [shape: f32[2,1,32], index: 7, kind: input, shape index: {}]
  %s8 = inlined_call_operand.hbm [shape: f32[2,32,64], index: 8, kind: input, shape index: {}]
  %s9 = inlined_call_operand.hbm [shape: f32[2,1,64], index: 9, kind: input, shape index: {}]
  %s10 = inlined_call_operand.hbm [shape: f32[2,32,32], index: 10, kind: input, shape index: {}]
  %s11 = inlined_call_operand.hbm [shape: f32[2,1,32], index: 11, kind: input, shape index: {}]
  %s12 = inlined_call_operand.hbm [shape: f32[2,1,32], index: 12, kind: input, shape index: {}]
  %s13 = inlined_call_operand.hbm [shape: f32[2,1,32], index: 13, kind: input, shape index: {}]
  %s14 = inlined_call_operand.hbm [shape: f32[2,1,32], index: 14, kind: input, shape index: {}]
  %s15 = inlined_call_operand.hbm [shape: f32[2,1,32], index: 15, kind: input, shape index: {}]
  %s16 = inlined_call_operand.hbm [shape: f32[2,1,32], index: 16, kind: input, shape index: {}]
  %s17 = inlined_call_operand.hbm [shape: f32[2,1,32], index: 17, kind: input, shape index: {}]
  %s18 = inlined_call_operand.hbm [shape: f32[2,32,64], index: 18, kind: input, shape index: {}]
  %s19 = inlined_call_operand.hbm [shape: f32[2,1,64], index: 19, kind: input, shape index: {}]
  %s20 = inlined_call_operand.vmem [shape: f32[2,64,32], index: 20, kind: input, shape index: {}]
  %s21 = inlined_call_operand.vmem [shape: f32[2,1,32], index: 21, kind: input, shape index: {}]
  %s22 = inlined_call_operand.hbm [shape: f32[1,32], index: 22, kind: input, shape index: {}]
  %s23 = inlined_call_operand.hbm [shape: f32[1,32], index: 23, kind: input, shape index: {}]
  %s24 = inlined_call_operand.hbm [shape: f32[32,32], index: 24, kind: input, shape index: {}]
  %s25 = inlined_call_operand.vmem [shape: f32[1,32], index: 25, kind: input, shape index: {}]
  %s26 = inlined_call_operand.vmem [shape: f32[2,9,32], index: 26, kind: output, shape index: {}]
  %s27 = sld [smem:[#allocation0]]
  $region213: #{encoder_apply.1} parent=0
    _
  %s29 = ssub.s32 1, %s27
  %s30 = scalar_select 0, %s29, %s27
  $region1: #{encoder_apply.1} parent=0
    #allocation3 [shape = 'u8[8192]{0}', space=vmem, size = 0x2000, scoped, tag = 'input window, operand 1']
    #allocation4 [shape = 's32[2]{0}', space=sflag, size = 0x8, scoped, tag = 'scoped memory for encoder_apply.1']
    #allocation5 [shape = 'u8[1024]{0}', space=vmem, size = 0x400, scoped, tag = 'input window, operand 7']
    #allocation6 [shape = 's32[2]{0}', space=sflag, size = 0x8, scoped, tag = 'scoped memory for encoder_apply.1']
    #allocation7 [shape = 'u8[32768]{0}', space=vmem, size = 0x8000, scoped, tag = 'input window, operand 8']
    #allocation8 [shape = 'u8[1024]{0}', space=vmem, size = 0x400, scoped, tag = 'input window, operand 9']
    #allocation9 [shape = 's32[2]{0}', space=sflag, size = 0x8, scoped, tag = 'scoped memory for encoder_apply.1']
    #allocation10 [shape = 'u8[32768]{0}', space=vmem, size = 0x8000, scoped, tag = 'input window, operand 10']
    #allocation11 [shape = 'u8[1024]{0}', space=vmem, size = 0x400, scoped, tag = 'input window, operand 11']
    #allocation12 [shape = 's32[2]{0}', space=sflag, size = 0x8, scoped, tag = 'scoped memory for encoder_apply.1']
    #allocation13 [shape = 'u8[1024]{0}', space=vmem, size = 0x400, scoped, tag = 'input window, operand 12']
    #allocation14 [shape = 'u8[1024]{0}', space=vmem, size = 0x400, scoped, tag = 'input window, operand 13']
    #allocation15 [shape = 's32[2]{0}', space=sflag, size = 0x8, scoped, tag = 'scoped memory for encoder_apply.1']
    #allocation16 [shape = 'u8[1024]{0}', space=vmem, size = 0x400, scoped, tag = 'input window, operand 14']
    #allocation17 [shape = 'u8[1024]{0}', space=vmem, size = 0x400, scoped, tag = 'input window, operand 15']
    #allocation18 [shape = 's32[2]{0}', space=sflag, size = 0x8, scoped, tag = 'scoped memory for encoder_apply.1']
    #allocation19 [shape = 'u8[1024]{0}', space=vmem, size = 0x400, scoped, tag = 'input window, operand 16']
    #allocation20 [shape = 'u8[1024]{0}', space=vmem, size = 0x400, scoped, tag = 'input window, operand 17']
    #allocation21 [shape = 's32[2]{0}', space=sflag, size = 0x8, scoped, tag = 'scoped memory for encoder_apply.1']
    #allocation22 [shape = 'u8[32768]{0}', space=vmem, size = 0x8000, scoped, tag = 'input window, operand 18']
    #allocation23 [shape = 'u8[1024]{0}', space=vmem, size = 0x400, scoped, tag = 'input window, operand 19']
    #allocation24 [shape = 's32[2]{0}', space=sflag, size = 0x8, scoped, tag = 'scoped memory for encoder_apply.1']
    #allocation25 [shape = 'u8[512]{0}', space=vmem, size = 0x400, scoped, tag = 'input window, operand 22, single buffered']
    #allocation26 [shape = 'u8[512]{0}', space=vmem, size = 0x400, scoped, tag = 'input window, operand 23, single buffered']
    #allocation27 [shape = 's32[1]{0}', space=sflag, size = 0x4, scoped, tag = 'scoped memory for encoder_apply.1']
    #allocation28 [shape = 'u8[16384]{0}', space=vmem, size = 0x4000, scoped, tag = 'input window, operand 24, single buffered']
    %31 = vsyncpa [#allocation4], 0
    %s32 = scalar_lea.sflag [#allocation4], 1
    %33 = vsyncpa %s32, 0
    %34 = vsyncpa [#allocation6], 0
    %s35 = scalar_lea.sflag [#allocation6], 1
    %36 = vsyncpa %s35, 0
    %37 = vsyncpa [#allocation9], 0
    %s38 = scalar_lea.sflag [#allocation9], 1
    %39 = vsyncpa %s38, 0
    %40 = vsyncpa [#allocation12], 0
    %s41 = scalar_lea.sflag [#allocation12], 1
    %42 = vsyncpa %s41, 0
    %43 = vsyncpa [#allocation15], 0
    %s44 = scalar_lea.sflag [#allocation15], 1
    %45 = vsyncpa %s44, 0
    %46 = vsyncpa [#allocation18], 0
    %s47 = scalar_lea.sflag [#allocation18], 1
    %48 = vsyncpa %s47, 0
    %49 = vsyncpa [#allocation21], 0
    %s50 = scalar_lea.sflag [#allocation21], 1
    %51 = vsyncpa %s50, 0
    %52 = vsyncpa [#allocation24], 0
    %s53 = scalar_lea.sflag [#allocation24], 1
    %54 = vsyncpa %s53, 0
    %55 = vsyncpa [#allocation27], 0
    loop: start=0, step=1, limit=6
    $region2: #{encoder_apply.1} parent=1 // loop_pre_header
      _
    $region3: #{encoder_apply.1} parent=1 // loop_header
      %s57 = sphi 0, %s61
      %p58 = scmp.ge.s32.totalorder %s57, 6
      %s64 = sphi 0, %s76
      %s65 = sphi 0, %s72
      %s66 = sphi 0, %s64
      %s67 = sphi 0, %s65
      %s68 = sphi 0, %s66
      %s69 = sphi 0, %s67
      %s79 = sphi 0, %s81
      %s82 = sphi 0, %s79
      %s83 = sphi 0, %s82
      %s99 = sphi 0, %s83
      %s105 = sphi 0, %s107
      %s108 = sphi 0, %s105
      %s109 = sphi 0, %s108
      %s125 = sphi 0, %s109
      %s131 = sphi 0, %s133
      %s134 = sphi 0, %s131
      %s135 = sphi 0, %s134
      %s151 = sphi 0, %s135
      %s157 = sphi 0, %s159
      %s160 = sphi 0, %s157
      %s161 = sphi 0, %s160
      %s177 = sphi 0, %s161
      %s183 = sphi 0, %s185
      %s186 = sphi 0, %s183
      %s187 = sphi 0, %s186
      %s203 = sphi 0, %s187
      %s209 = sphi 0, %s211
      %s212 = sphi 0, %s209
      %s213 = sphi 0, %s212
      %s229 = sphi 0, %s213
      %s235 = sphi 0, %s237
      %s238 = sphi 0, %s235
      %s239 = sphi 0, %s238
      %s255 = sphi 0, %s239
      %s261 = sphi 0, %s263
      %s264 = sphi 0, %s261
      %s265 = sphi 0, %s264
      %s281 = sphi 0, %s265
      %s287 = sphi 0, %s289
      %s290 = sphi 0, %s287
      %s291 = sphi 0, %s290
      %s307 = sphi 0, %s291
      %s313 = sphi 0, %s315
      %s316 = sphi 0, %s313
      %s317 = sphi 0, %s316
      %s333 = sphi 0, %s317
      %s339 = sphi 0, %s341
      %s342 = sphi 0, %s339
      %s343 = sphi 0, %s342
      %s359 = sphi 0, %s343
      %s365 = sphi 0, %s367
      %s368 = sphi 0, %s365
      %s369 = sphi 0, %s368
      %s385 = sphi 0, %s369
      %s391 = sphi 0, %s393
      %s394 = sphi 0, %s391
      %s395 = sphi 0, %s394
      %s411 = sphi 0, %s395
      %s417 = sphi 0, %s419
      %s420 = sphi 0, %s417
      %s421 = sphi 0, %s420
      %s437 = sphi 0, %s421
      %s443 = sphi 0, %s445
      %s446 = sphi 0, %s443
      %s447 = sphi 0, %s446
      %s463 = sphi 0, %s447
      %s469 = sphi 0, %s471
      %s472 = sphi 0, %s469
      %s473 = sphi 0, %s472
      %s489 = sphi 0, %s473
      %s495 = sphi 0, %s497
      %s498 = sphi 0, %s495
      %s499 = sphi 0, %s498
      %s515 = sphi 0, %s499
      %s521 = sphi 0, %s523
      %s524 = sphi 0, %s521
      %s525 = sphi 0, %s524
      %s541 = sphi 0, %s525
      %s547 = sphi 0, %s549
      %s550 = sphi 0, %s547
      %s551 = sphi 0, %s550
      %s567 = sphi 0, %s551
      %s573 = sphi 0, %s575
      %s576 = sphi 0, %s573
      %s577 = sphi 0, %s576
      %s593 = sphi 0, %s577
      %s599 = sphi 0, %s601
      %s602 = sphi 0, %s599
      %s603 = sphi 0, %s602
      %s619 = sphi 0, %s603
      %s625 = sphi 0, %s627
      %s628 = sphi 0, %s625
      %s629 = sphi 0, %s628
      %s645 = sphi 0, %s629
      %s649 = sphi 0, %s649
      %s651 = sphi 0, %s649
      %s652 = sphi 0, %s651
      %s666 = sphi 0, %s652
      %s670 = sphi 0, %s670
      %s672 = sphi 0, %s670
      %s673 = sphi 0, %s672
      %s687 = sphi 0, %s673
      %s691 = sphi 0, %s691
      %s693 = sphi 0, %s691
      %s694 = sphi 0, %s693
      %s708 = sphi 0, %s694
      %s712 = sphi 0, %s712
      %s714 = sphi 0, %s712
      %s715 = sphi 0, %s714
      %s729 = sphi 0, %s715
      %s735 = sphi 0, %s737
      %s738 = sphi 0, %s735
      %s739 = sphi 0, %s738
      %s755 = sphi 0, %s739
    $region4: #{encoder_apply.1} parent=1 // loop_header_branch
      %60 = sbr.rel (%p58) target = $region8
    $region5: #{encoder_apply.1} parent=1 // loop_body
      %s62 = ssub.s32 %s57, 1
      %s63 = ssub.s32 %s57, 2
      %s70 = sadd.s32 1, %s65
      %p71 = scmp.ge.s32.totalorder %s70, 2
      %s72 = scalar_select %p71, 0, %s70
      %s73 = sadd.s32 1, %s64
      %s74 = scalar_select %p71, %s73, %s64
      %p75 = scmp.ge.s32.totalorder %s74, 2
      %s76 = scalar_select %p75, 0, %s74
      %s77 = ssub.s32 %s64, %s76
      %p78 = scmp.eq.s32.totalorder %s77, 0
      %s80 = sadd.s32 %s79, 1
      %s81 = scalar_select %p78, %s79, %s80
      %p84 = pneg %p78
      %p85 = scmp.eq.s32.totalorder %s57, 3
      %p86 = por %p84, %p85
      %p87 = scmp.ne.s32.totalorder %s79, %s82
      %p88 = scmp.eq.s32.totalorder %s57, 0
      %p89 = por %p87, %p88
      %p90 = scmp.ne.s32.totalorder %s79, %s82
      %p91 = scmp.eq.s32.totalorder %s62, 3
      %p92 = por %p90, %p91
      %p93 = scmp.ne.s32.totalorder %s82, %s83
      %p94 = scmp.eq.s32.totalorder %s62, 0
      %p95 = por %p93, %p94
      %p96 = scmp.ne.s32.totalorder %s82, %s83
      %p97 = scmp.eq.s32.totalorder %s63, 3
      %p98 = por %p96, %p97
      %p100 = scmp.ne.s32.totalorder %s83, %s99
      %p101 = scmp.eq.s32.totalorder %s63, 0
      %p102 = por %p100, %p101
      %s103 = ssub.s32 %s64, %s76
      %p104 = scmp.eq.s32.totalorder %s103, 0
      %s106 = sadd.s32 %s105, 1
      %s107 = scalar_select %p104, %s105, %s106
      %p110 = pneg %p104
      %p111 = scmp.eq.s32.totalorder %s57, 3
      %p112 = por %p110, %p111
      %p113 = scmp.ne.s32.totalorder %s105, %s108
      %p114 = scmp.eq.s32.totalorder %s57, 0
      %p115 = por %p113, %p114
      %p116 = scmp.ne.s32.totalorder %s105, %s108
      %p117 = scmp.eq.s32.totalorder %s62, 3
      %p118 = por %p116, %p117
      %p119 = scmp.ne.s32.totalorder %s108, %s109
      %p120 = scmp.eq.s32.totalorder %s62, 0
      %p121 = por %p119, %p120
      %p122 = scmp.ne.s32.totalorder %s108, %s109
      %p123 = scmp.eq.s32.totalorder %s63, 3
      %p124 = por %p122, %p123
      %p126 = scmp.ne.s32.totalorder %s109, %s125
      %p127 = scmp.eq.s32.totalorder %s63, 0
      %p128 = por %p126, %p127
      %s129 = ssub.s32 %s65, %s72
      %p130 = scmp.eq.s32.totalorder %s129, 0
      %s132 = sadd.s32 %s131, 1
      %s133 = scalar_select %p130, %s131, %s132
      %p136 = pneg %p130
      %p137 = scmp.eq.s32.totalorder %s57, 3
      %p138 = por %p136, %p137
      %p139 = scmp.ne.s32.totalorder %s131, %s134
      %p140 = scmp.eq.s32.totalorder %s57, 0
      %p141 = por %p139, %p140
      %p142 = scmp.ne.s32.totalorder %s131, %s134
      %p143 = scmp.eq.s32.totalorder %s62, 3
      %p144 = por %p142, %p143
      %p145 = scmp.ne.s32.totalorder %s134, %s135
      %p146 = scmp.eq.s32.totalorder %s62, 0
      %p147 = por %p145, %p146
      %p148 = scmp.ne.s32.totalorder %s134, %s135
      %p149 = scmp.eq.s32.totalorder %s63, 3
      %p150 = por %p148, %p149
      %p152 = scmp.ne.s32.totalorder %s135, %s151
      %p153 = scmp.eq.s32.totalorder %s63, 0
      %p154 = por %p152, %p153
      %s155 = ssub.s32 %s65, %s72
      %p156 = scmp.eq.s32.totalorder %s155, 0
      %s158 = sadd.s32 %s157, 1
      %s159 = scalar_select %p156, %s157, %s158
      %p162 = pneg %p156
      %p163 = scmp.eq.s32.totalorder %s57, 3
      %p164 = por %p162, %p163
      %p165 = scmp.ne.s32.totalorder %s157, %s160
      %p166 = scmp.eq.s32.totalorder %s57, 0
      %p167 = por %p165, %p166
      %p168 = scmp.ne.s32.totalorder %s157, %s160
      %p169 = scmp.eq.s32.totalorder %s62, 3
      %p170 = por %p168, %p169
      %p171 = scmp.ne.s32.totalorder %s160, %s161
      %p172 = scmp.eq.s32.totalorder %s62, 0
      %p173 = por %p171, %p172
      %p174 = scmp.ne.s32.totalorder %s160, %s161
      %p175 = scmp.eq.s32.totalorder %s63, 3
      %p176 = por %p174, %p175
      %p178 = scmp.ne.s32.totalorder %s161, %s177
      %p179 = scmp.eq.s32.totalorder %s63, 0
      %p180 = por %p178, %p179
      %s181 = ssub.s32 %s65, %s72
      %p182 = scmp.eq.s32.totalorder %s181, 0
      %s184 = sadd.s32 %s183, 1
      %s185 = scalar_select %p182, %s183, %s184
      %p188 = pneg %p182
      %p189 = scmp.eq.s32.totalorder %s57, 3
      %p190 = por %p188, %p189
      %p191 = scmp.ne.s32.totalorder %s183, %s186
      %p192 = scmp.eq.s32.totalorder %s57, 0
      %p193 = por %p191, %p192
      %p194 = scmp.ne.s32.totalorder %s183, %s186
      %p195 = scmp.eq.s32.totalorder %s62, 3
      %p196 = por %p194, %p195
      %p197 = scmp.ne.s32.totalorder %s186, %s187
      %p198 = scmp.eq.s32.totalorder %s62, 0
      %p199 = por %p197, %p198
      %p200 = scmp.ne.s32.totalorder %s186, %s187
      %p201 = scmp.eq.s32.totalorder %s63, 3
      %p202 = por %p200, %p201
      %p204 = scmp.ne.s32.totalorder %s187, %s203
      %p205 = scmp.eq.s32.totalorder %s63, 0
      %p206 = por %p204, %p205
      %s207 = ssub.s32 %s65, %s72
      %p208 = scmp.eq.s32.totalorder %s207, 0
      %s210 = sadd.s32 %s209, 1
      %s211 = scalar_select %p208, %s209, %s210
      %p214 = pneg %p208
      %p215 = scmp.eq.s32.totalorder %s57, 3
      %p216 = por %p214, %p215
      %p217 = scmp.ne.s32.totalorder %s209, %s212
      %p218 = scmp.eq.s32.totalorder %s57, 0
      %p219 = por %p217, %p218
      %p220 = scmp.ne.s32.totalorder %s209, %s212
      %p221 = scmp.eq.s32.totalorder %s62, 3
      %p222 = por %p220, %p221
      %p223 = scmp.ne.s32.totalorder %s212, %s213
      %p224 = scmp.eq.s32.totalorder %s62, 0
      %p225 = por %p223, %p224
      %p226 = scmp.ne.s32.totalorder %s212, %s213
      %p227 = scmp.eq.s32.totalorder %s63, 3
      %p228 = por %p226, %p227
      %p230 = scmp.ne.s32.totalorder %s213, %s229
      %p231 = scmp.eq.s32.totalorder %s63, 0
      %p232 = por %p230, %p231
      %s233 = ssub.s32 %s65, %s72
      %p234 = scmp.eq.s32.totalorder %s233, 0
      %s236 = sadd.s32 %s235, 1
      %s237 = scalar_select %p234, %s235, %s236
      %p240 = pneg %p234
      %p241 = scmp.eq.s32.totalorder %s57, 3
      %p242 = por %p240, %p241
      %p243 = scmp.ne.s32.totalorder %s235, %s238
      %p244 = scmp.eq.s32.totalorder %s57, 0
      %p245 = por %p243, %p244
      %p246 = scmp.ne.s32.totalorder %s235, %s238
      %p247 = scmp.eq.s32.totalorder %s62, 3
      %p248 = por %p246, %p247
      %p249 = scmp.ne.s32.totalorder %s238, %s239
      %p250 = scmp.eq.s32.totalorder %s62, 0
      %p251 = por %p249, %p250
      %p252 = scmp.ne.s32.totalorder %s238, %s239
      %p253 = scmp.eq.s32.totalorder %s63, 3
      %p254 = por %p252, %p253
      %p256 = scmp.ne.s32.totalorder %s239, %s255
      %p257 = scmp.eq.s32.totalorder %s63, 0
      %p258 = por %p256, %p257
      %s259 = ssub.s32 %s65, %s72
      %p260 = scmp.eq.s32.totalorder %s259, 0
      %s262 = sadd.s32 %s261, 1
      %s263 = scalar_select %p260, %s261, %s262
      %p266 = pneg %p260
      %p267 = scmp.eq.s32.totalorder %s57, 3
      %p268 = por %p266, %p267
      %p269 = scmp.ne.s32.totalorder %s261, %s264
      %p270 = scmp.eq.s32.totalorder %s57, 0
      %p271 = por %p269, %p270
      %p272 = scmp.ne.s32.totalorder %s261, %s264
      %p273 = scmp.eq.s32.totalorder %s62, 3
      %p274 = por %p272, %p273
      %p275 = scmp.ne.s32.totalorder %s264, %s265
      %p276 = scmp.eq.s32.totalorder %s62, 0
      %p277 = por %p275, %p276
      %p278 = scmp.ne.s32.totalorder %s264, %s265
      %p279 = scmp.eq.s32.totalorder %s63, 3
      %p280 = por %p278, %p279
      %p282 = scmp.ne.s32.totalorder %s265, %s281
      %p283 = scmp.eq.s32.totalorder %s63, 0
      %p284 = por %p282, %p283
      %s285 = ssub.s32 %s65, %s72
      %p286 = scmp.eq.s32.totalorder %s285, 0
      %s288 = sadd.s32 %s287, 1
      %s289 = scalar_select %p286, %s287, %s288
      %p292 = pneg %p286
      %p293 = scmp.eq.s32.totalorder %s57, 3
      %p294 = por %p292, %p293
      %p295 = scmp.ne.s32.totalorder %s287, %s290
      %p296 = scmp.eq.s32.totalorder %s57, 0
      %p297 = por %p295, %p296
      %p298 = scmp.ne.s32.totalorder %s287, %s290
      %p299 = scmp.eq.s32.totalorder %s62, 3
      %p300 = por %p298, %p299
      %p301 = scmp.ne.s32.totalorder %s290, %s291
      %p302 = scmp.eq.s32.totalorder %s62, 0
      %p303 = por %p301, %p302
      %p304 = scmp.ne.s32.totalorder %s290, %s291
      %p305 = scmp.eq.s32.totalorder %s63, 3
      %p306 = por %p304, %p305
      %p308 = scmp.ne.s32.totalorder %s291, %s307
      %p309 = scmp.eq.s32.totalorder %s63, 0
      %p310 = por %p308, %p309
      %s311 = ssub.s32 %s65, %s72
      %p312 = scmp.eq.s32.totalorder %s311, 0
      %s314 = sadd.s32 %s313, 1
      %s315 = scalar_select %p312, %s313, %s314
      %p318 = pneg %p312
      %p319 = scmp.eq.s32.totalorder %s57, 3
      %p320 = por %p318, %p319
      %p321 = scmp.ne.s32.totalorder %s313, %s316
      %p322 = scmp.eq.s32.totalorder %s57, 0
      %p323 = por %p321, %p322
      %p324 = scmp.ne.s32.totalorder %s313, %s316
      %p325 = scmp.eq.s32.totalorder %s62, 3
      %p326 = por %p324, %p325
      %p327 = scmp.ne.s32.totalorder %s316, %s317
      %p328 = scmp.eq.s32.totalorder %s62, 0
      %p329 = por %p327, %p328
      %p330 = scmp.ne.s32.totalorder %s316, %s317
      %p331 = scmp.eq.s32.totalorder %s63, 3
      %p332 = por %p330, %p331
      %p334 = scmp.ne.s32.totalorder %s317, %s333
      %p335 = scmp.eq.s32.totalorder %s63, 0
      %p336 = por %p334, %p335
      %s337 = ssub.s32 %s65, %s72
      %p338 = scmp.eq.s32.totalorder %s337, 0
      %s340 = sadd.s32 %s339, 1
      %s341 = scalar_select %p338, %s339, %s340
      %p344 = pneg %p338
      %p345 = scmp.eq.s32.totalorder %s57, 3
      %p346 = por %p344, %p345
      %p347 = scmp.ne.s32.totalorder %s339, %s342
      %p348 = scmp.eq.s32.totalorder %s57, 0
      %p349 = por %p347, %p348
      %p350 = scmp.ne.s32.totalorder %s339, %s342
      %p351 = scmp.eq.s32.totalorder %s62, 3
      %p352 = por %p350, %p351
      %p353 = scmp.ne.s32.totalorder %s342, %s343
      %p354 = scmp.eq.s32.totalorder %s62, 0
      %p355 = por %p353, %p354
      %p356 = scmp.ne.s32.totalorder %s342, %s343
      %p357 = scmp.eq.s32.totalorder %s63, 3
      %p358 = por %p356, %p357
      %p360 = scmp.ne.s32.totalorder %s343, %s359
      %p361 = scmp.eq.s32.totalorder %s63, 0
      %p362 = por %p360, %p361
      %s363 = ssub.s32 %s65, %s72
      %p364 = scmp.eq.s32.totalorder %s363, 0
      %s366 = sadd.s32 %s365, 1
      %s367 = scalar_select %p364, %s365, %s366
      %p370 = pneg %p364
      %p371 = scmp.eq.s32.totalorder %s57, 3
      %p372 = por %p370, %p371
      %p373 = scmp.ne.s32.totalorder %s365, %s368
      %p374 = scmp.eq.s32.totalorder %s57, 0
      %p375 = por %p373, %p374
      %p376 = scmp.ne.s32.totalorder %s365, %s368
      %p377 = scmp.eq.s32.totalorder %s62, 3
      %p378 = por %p376, %p377
      %p379 = scmp.ne.s32.totalorder %s368, %s369
      %p380 = scmp.eq.s32.totalorder %s62, 0
      %p381 = por %p379, %p380
      %p382 = scmp.ne.s32.totalorder %s368, %s369
      %p383 = scmp.eq.s32.totalorder %s63, 3
      %p384 = por %p382, %p383
      %p386 = scmp.ne.s32.totalorder %s369, %s385
      %p387 = scmp.eq.s32.totalorder %s63, 0
      %p388 = por %p386, %p387
      %s389 = ssub.s32 %s65, %s72
      %p390 = scmp.eq.s32.totalorder %s389, 0
      %s392 = sadd.s32 %s391, 1
      %s393 = scalar_select %p390, %s391, %s392
      %p396 = pneg %p390
      %p397 = scmp.eq.s32.totalorder %s57, 3
      %p398 = por %p396, %p397
      %p399 = scmp.ne.s32.totalorder %s391, %s394
      %p400 = scmp.eq.s32.totalorder %s57, 0
      %p401 = por %p399, %p400
      %p402 = scmp.ne.s32.totalorder %s391, %s394
      %p403 = scmp.eq.s32.totalorder %s62, 3
      %p404 = por %p402, %p403
      %p405 = scmp.ne.s32.totalorder %s394, %s395
      %p406 = scmp.eq.s32.totalorder %s62, 0
      %p407 = por %p405, %p406
      %p408 = scmp.ne.s32.totalorder %s394, %s395
      %p409 = scmp.eq.s32.totalorder %s63, 3
      %p410 = por %p408, %p409
      %p412 = scmp.ne.s32.totalorder %s395, %s411
      %p413 = scmp.eq.s32.totalorder %s63, 0
      %p414 = por %p412, %p413
      %s415 = ssub.s32 %s65, %s72
      %p416 = scmp.eq.s32.totalorder %s415, 0
      %s418 = sadd.s32 %s417, 1
      %s419 = scalar_select %p416, %s417, %s418
      %p422 = pneg %p416
      %p423 = scmp.eq.s32.totalorder %s57, 3
      %p424 = por %p422, %p423
      %p425 = scmp.ne.s32.totalorder %s417, %s420
      %p426 = scmp.eq.s32.totalorder %s57, 0
      %p427 = por %p425, %p426
      %p428 = scmp.ne.s32.totalorder %s417, %s420
      %p429 = scmp.eq.s32.totalorder %s62, 3
      %p430 = por %p428, %p429
      %p431 = scmp.ne.s32.totalorder %s420, %s421
      %p432 = scmp.eq.s32.totalorder %s62, 0
      %p433 = por %p431, %p432
      %p434 = scmp.ne.s32.totalorder %s420, %s421
      %p435 = scmp.eq.s32.totalorder %s63, 3
      %p436 = por %p434, %p435
      %p438 = scmp.ne.s32.totalorder %s421, %s437
      %p439 = scmp.eq.s32.totalorder %s63, 0
      %p440 = por %p438, %p439
      %s441 = ssub.s32 %s65, %s72
      %p442 = scmp.eq.s32.totalorder %s441, 0
      %s444 = sadd.s32 %s443, 1
      %s445 = scalar_select %p442, %s443, %s444
      %p448 = pneg %p442
      %p449 = scmp.eq.s32.totalorder %s57, 3
      %p450 = por %p448, %p449
      %p451 = scmp.ne.s32.totalorder %s443, %s446
      %p452 = scmp.eq.s32.totalorder %s57, 0
      %p453 = por %p451, %p452
      %p454 = scmp.ne.s32.totalorder %s443, %s446
      %p455 = scmp.eq.s32.totalorder %s62, 3
      %p456 = por %p454, %p455
      %p457 = scmp.ne.s32.totalorder %s446, %s447
      %p458 = scmp.eq.s32.totalorder %s62, 0
      %p459 = por %p457, %p458
      %p460 = scmp.ne.s32.totalorder %s446, %s447
      %p461 = scmp.eq.s32.totalorder %s63, 3
      %p462 = por %p460, %p461
      %p464 = scmp.ne.s32.totalorder %s447, %s463
      %p465 = scmp.eq.s32.totalorder %s63, 0
      %p466 = por %p464, %p465
      %s467 = ssub.s32 %s65, %s72
      %p468 = scmp.eq.s32.totalorder %s467, 0
      %s470 = sadd.s32 %s469, 1
      %s471 = scalar_select %p468, %s469, %s470
      %p474 = pneg %p468
      %p475 = scmp.eq.s32.totalorder %s57, 3
      %p476 = por %p474, %p475
      %p477 = scmp.ne.s32.totalorder %s469, %s472
      %p478 = scmp.eq.s32.totalorder %s57, 0
      %p479 = por %p477, %p478
      %p480 = scmp.ne.s32.totalorder %s469, %s472
      %p481 = scmp.eq.s32.totalorder %s62, 3
      %p482 = por %p480, %p481
      %p483 = scmp.ne.s32.totalorder %s472, %s473
      %p484 = scmp.eq.s32.totalorder %s62, 0
      %p485 = por %p483, %p484
      %p486 = scmp.ne.s32.totalorder %s472, %s473
      %p487 = scmp.eq.s32.totalorder %s63, 3
      %p488 = por %p486, %p487
      %p490 = scmp.ne.s32.totalorder %s473, %s489
      %p491 = scmp.eq.s32.totalorder %s63, 0
      %p492 = por %p490, %p491
      %s493 = ssub.s32 %s65, %s72
      %p494 = scmp.eq.s32.totalorder %s493, 0
      %s496 = sadd.s32 %s495, 1
      %s497 = scalar_select %p494, %s495, %s496
      %p500 = pneg %p494
      %p501 = scmp.eq.s32.totalorder %s57, 3
      %p502 = por %p500, %p501
      %p503 = scmp.ne.s32.totalorder %s495, %s498
      %p504 = scmp.eq.s32.totalorder %s57, 0
      %p505 = por %p503, %p504
      %p506 = scmp.ne.s32.totalorder %s495, %s498
      %p507 = scmp.eq.s32.totalorder %s62, 3
      %p508 = por %p506, %p507
      %p509 = scmp.ne.s32.totalorder %s498, %s499
      %p510 = scmp.eq.s32.totalorder %s62, 0
      %p511 = por %p509, %p510
      %p512 = scmp.ne.s32.totalorder %s498, %s499
      %p513 = scmp.eq.s32.totalorder %s63, 3
      %p514 = por %p512, %p513
      %p516 = scmp.ne.s32.totalorder %s499, %s515
      %p517 = scmp.eq.s32.totalorder %s63, 0
      %p518 = por %p516, %p517
      %s519 = ssub.s32 %s65, %s72
      %p520 = scmp.eq.s32.totalorder %s519, 0
      %s522 = sadd.s32 %s521, 1
      %s523 = scalar_select %p520, %s521, %s522
      %p526 = pneg %p520
      %p527 = scmp.eq.s32.totalorder %s57, 3
      %p528 = por %p526, %p527
      %p529 = scmp.ne.s32.totalorder %s521, %s524
      %p530 = scmp.eq.s32.totalorder %s57, 0
      %p531 = por %p529, %p530
      %p532 = scmp.ne.s32.totalorder %s521, %s524
      %p533 = scmp.eq.s32.totalorder %s62, 3
      %p534 = por %p532, %p533
      %p535 = scmp.ne.s32.totalorder %s524, %s525
      %p536 = scmp.eq.s32.totalorder %s62, 0
      %p537 = por %p535, %p536
      %p538 = scmp.ne.s32.totalorder %s524, %s525
      %p539 = scmp.eq.s32.totalorder %s63, 3
      %p540 = por %p538, %p539
      %p542 = scmp.ne.s32.totalorder %s525, %s541
      %p543 = scmp.eq.s32.totalorder %s63, 0
      %p544 = por %p542, %p543
      %s545 = ssub.s32 %s65, %s72
      %p546 = scmp.eq.s32.totalorder %s545, 0
      %s548 = sadd.s32 %s547, 1
      %s549 = scalar_select %p546, %s547, %s548
      %p552 = pneg %p546
      %p553 = scmp.eq.s32.totalorder %s57, 3
      %p554 = por %p552, %p553
      %p555 = scmp.ne.s32.totalorder %s547, %s550
      %p556 = scmp.eq.s32.totalorder %s57, 0
      %p557 = por %p555, %p556
      %p558 = scmp.ne.s32.totalorder %s547, %s550
      %p559 = scmp.eq.s32.totalorder %s62, 3
      %p560 = por %p558, %p559
      %p561 = scmp.ne.s32.totalorder %s550, %s551
      %p562 = scmp.eq.s32.totalorder %s62, 0
      %p563 = por %p561, %p562
      %p564 = scmp.ne.s32.totalorder %s550, %s551
      %p565 = scmp.eq.s32.totalorder %s63, 3
      %p566 = por %p564, %p565
      %p568 = scmp.ne.s32.totalorder %s551, %s567
      %p569 = scmp.eq.s32.totalorder %s63, 0
      %p570 = por %p568, %p569
      %s571 = ssub.s32 %s65, %s72
      %p572 = scmp.eq.s32.totalorder %s571, 0
      %s574 = sadd.s32 %s573, 1
      %s575 = scalar_select %p572, %s573, %s574
      %p578 = pneg %p572
      %p579 = scmp.eq.s32.totalorder %s57, 3
      %p580 = por %p578, %p579
      %p581 = scmp.ne.s32.totalorder %s573, %s576
      %p582 = scmp.eq.s32.totalorder %s57, 0
      %p583 = por %p581, %p582
      %p584 = scmp.ne.s32.totalorder %s573, %s576
      %p585 = scmp.eq.s32.totalorder %s62, 3
      %p586 = por %p584, %p585
      %p587 = scmp.ne.s32.totalorder %s576, %s577
      %p588 = scmp.eq.s32.totalorder %s62, 0
      %p589 = por %p587, %p588
      %p590 = scmp.ne.s32.totalorder %s576, %s577
      %p591 = scmp.eq.s32.totalorder %s63, 3
      %p592 = por %p590, %p591
      %p594 = scmp.ne.s32.totalorder %s577, %s593
      %p595 = scmp.eq.s32.totalorder %s63, 0
      %p596 = por %p594, %p595
      %s597 = ssub.s32 %s65, %s72
      %p598 = scmp.eq.s32.totalorder %s597, 0
      %s600 = sadd.s32 %s599, 1
      %s601 = scalar_select %p598, %s599, %s600
      %p604 = pneg %p598
      %p605 = scmp.eq.s32.totalorder %s57, 3
      %p606 = por %p604, %p605
      %p607 = scmp.ne.s32.totalorder %s599, %s602
      %p608 = scmp.eq.s32.totalorder %s57, 0
      %p609 = por %p607, %p608
      %p610 = scmp.ne.s32.totalorder %s599, %s602
      %p611 = scmp.eq.s32.totalorder %s62, 3
      %p612 = por %p610, %p611
      %p613 = scmp.ne.s32.totalorder %s602, %s603
      %p614 = scmp.eq.s32.totalorder %s62, 0
      %p615 = por %p613, %p614
      %p616 = scmp.ne.s32.totalorder %s602, %s603
      %p617 = scmp.eq.s32.totalorder %s63, 3
      %p618 = por %p616, %p617
      %p620 = scmp.ne.s32.totalorder %s603, %s619
      %p621 = scmp.eq.s32.totalorder %s63, 0
      %p622 = por %p620, %p621
      %s623 = ssub.s32 %s65, %s72
      %p624 = scmp.eq.s32.totalorder %s623, 0
      %s626 = sadd.s32 %s625, 1
      %s627 = scalar_select %p624, %s625, %s626
      %p630 = pneg %p624
      %p631 = scmp.eq.s32.totalorder %s57, 3
      %p632 = por %p630, %p631
      %p633 = scmp.ne.s32.totalorder %s625, %s628
      %p634 = scmp.eq.s32.totalorder %s57, 0
      %p635 = por %p633, %p634
      %p636 = scmp.ne.s32.totalorder %s625, %s628
      %p637 = scmp.eq.s32.totalorder %s62, 3
      %p638 = por %p636, %p637
      %p639 = scmp.ne.s32.totalorder %s628, %s629
      %p640 = scmp.eq.s32.totalorder %s62, 0
      %p641 = por %p639, %p640
      %p642 = scmp.ne.s32.totalorder %s628, %s629
      %p643 = scmp.eq.s32.totalorder %s63, 3
      %p644 = por %p642, %p643
      %p646 = scmp.ne.s32.totalorder %s629, %s645
      %p647 = scmp.eq.s32.totalorder %s63, 0
      %p648 = por %p646, %p647
      %s650 = sadd.s32 %s649, 1
      %p653 = scmp.eq.s32.totalorder %s57, 3
      %p654 = scmp.ne.s32.totalorder %s649, %s651
      %p655 = scmp.eq.s32.totalorder %s57, 0
      %p656 = por %p654, %p655
      %p657 = scmp.ne.s32.totalorder %s649, %s651
      %p658 = scmp.eq.s32.totalorder %s62, 3
      %p659 = por %p657, %p658
      %p660 = scmp.ne.s32.totalorder %s651, %s652
      %p661 = scmp.eq.s32.totalorder %s62, 0
      %p662 = por %p660, %p661
      %p663 = scmp.ne.s32.totalorder %s651, %s652
      %p664 = scmp.eq.s32.totalorder %s63, 3
      %p665 = por %p663, %p664
      %p667 = scmp.ne.s32.totalorder %s652, %s666
      %p668 = scmp.eq.s32.totalorder %s63, 0
      %p669 = por %p667, %p668
      %s671 = sadd.s32 %s670, 1
      %p674 = scmp.eq.s32.totalorder %s57, 3
      %p675 = scmp.ne.s32.totalorder %s670, %s672
      %p676 = scmp.eq.s32.totalorder %s57, 0
      %p677 = por %p675, %p676
      %p678 = scmp.ne.s32.totalorder %s670, %s672
      %p679 = scmp.eq.s32.totalorder %s62, 3
      %p680 = por %p678, %p679
      %p681 = scmp.ne.s32.totalorder %s672, %s673
      %p682 = scmp.eq.s32.totalorder %s62, 0
      %p683 = por %p681, %p682
      %p684 = scmp.ne.s32.totalorder %s672, %s673
      %p685 = scmp.eq.s32.totalorder %s63, 3
      %p686 = por %p684, %p685
      %p688 = scmp.ne.s32.totalorder %s673, %s687
      %p689 = scmp.eq.s32.totalorder %s63, 0
      %p690 = por %p688, %p689
      %s692 = sadd.s32 %s691, 1
      %p695 = scmp.eq.s32.totalorder %s57, 3
      %p696 = scmp.ne.s32.totalorder %s691, %s693
      %p697 = scmp.eq.s32.totalorder %s57, 0
      %p698 = por %p696, %p697
      %p699 = scmp.ne.s32.totalorder %s691, %s693
      %p700 = scmp.eq.s32.totalorder %s62, 3
      %p701 = por %p699, %p700
      %p702 = scmp.ne.s32.totalorder %s693, %s694
      %p703 = scmp.eq.s32.totalorder %s62, 0
      %p704 = por %p702, %p703
      %p705 = scmp.ne.s32.totalorder %s693, %s694
      %p706 = scmp.eq.s32.totalorder %s63, 3
      %p707 = por %p705, %p706
      %p709 = scmp.ne.s32.totalorder %s694, %s708
      %p710 = scmp.eq.s32.totalorder %s63, 0
      %p711 = por %p709, %p710
      %s713 = sadd.s32 %s712, 1
      %p716 = scmp.eq.s32.totalorder %s57, 3
      %p717 = scmp.ne.s32.totalorder %s712, %s714
      %p718 = scmp.eq.s32.totalorder %s57, 0
      %p719 = por %p717, %p718
      %p720 = scmp.ne.s32.totalorder %s712, %s714
      %p721 = scmp.eq.s32.totalorder %s62, 3
      %p722 = por %p720, %p721
      %p723 = scmp.ne.s32.totalorder %s714, %s715
      %p724 = scmp.eq.s32.totalorder %s62, 0
      %p725 = por %p723, %p724
      %p726 = scmp.ne.s32.totalorder %s714, %s715
      %p727 = scmp.eq.s32.totalorder %s63, 3
      %p728 = por %p726, %p727
      %p730 = scmp.ne.s32.totalorder %s715, %s729
      %p731 = scmp.eq.s32.totalorder %s63, 0
      %p732 = por %p730, %p731
      %s733 = ssub.s32 %s64, %s76
      %p734 = scmp.eq.s32.totalorder %s733, 0
      %s736 = sadd.s32 %s735, 1
      %s737 = scalar_select %p734, %s735, %s736
      %p740 = pneg %p734
      %p741 = scmp.eq.s32.totalorder %s57, 3
      %p742 = por %p740, %p741
      %p743 = scmp.ne.s32.totalorder %s735, %s738
      %p744 = scmp.eq.s32.totalorder %s57, 0
      %p745 = por %p743, %p744
      %p746 = scmp.ne.s32.totalorder %s735, %s738
      %p747 = scmp.eq.s32.totalorder %s62, 3
      %p748 = por %p746, %p747
      %p749 = scmp.ne.s32.totalorder %s738, %s739
      %p750 = scmp.eq.s32.totalorder %s62, 0
      %p751 = por %p749, %p750
      %p752 = scmp.ne.s32.totalorder %s738, %s739
      %p753 = scmp.eq.s32.totalorder %s63, 3
      %p754 = por %p752, %p753
      %p756 = scmp.ne.s32.totalorder %s739, %s755
      %p757 = scmp.eq.s32.totalorder %s63, 0
      %p758 = por %p756, %p757
      %p759 = scmp.le.s32.totalorder 1, %s57
      %p760 = scmp.lt.s32.totalorder %s57, 5
      %p761 = pnand %p759, %p760
      %p762 = pneg %p761
      // Predicated region
      $region9: #{encoder_apply.1} parent=5 // pred_check
        _
      $region10: #{encoder_apply.1} parent=5 // pred_check_branch
        %764 = sbr.rel (%p761) target = $region12
      $region11: #{encoder_apply.1} parent=5 // pred_region
        %s765 = ssub.s32 %s57, 1
        // Predicated region
        $region13: #{encoder_apply.1} parent=11 // pred_check
          %p766 = pneg %p662
        $region14: #{encoder_apply.1} parent=11 // pred_check_branch
          %768 = sbr.rel (%p766) target = $region16
        $region15: #{encoder_apply.1} parent=11 // pred_region
          %770 = vsyncadd [#allocation24], 0
          %s772 = sshll.u32 %s22, 4
          %s773 = int_to_ptr.hbm [resolvable:$true] %s772
          %s774 = sshll.u32 [#allocation25], 4
          %s775 = int_to_ptr.vmem [resolvable:$true] %s774
          %777 = dma.hbm_to_vmem [thread:$0]  %s773, 16, %s775, [#allocation24]
        $region16: #{encoder_apply.1} parent=11 // pred_fallthru
          _
        // Predicated region
        $region17: #{encoder_apply.1} parent=11 // pred_check
          %p778 = pneg %p683
        $region18: #{encoder_apply.1} parent=11 // pred_check_branch
          %780 = sbr.rel (%p778) target = $region20
        $region19: #{encoder_apply.1} parent=11 // pred_region
          %782 = vsyncadd [#allocation27], 0
          %s784 = sshll.u32 %s23, 4
          %s785 = int_to_ptr.hbm [resolvable:$true] %s784
          %s786 = sshll.u32 [#allocation26], 4
          %s787 = int_to_ptr.vmem [resolvable:$true] %s786
          %789 = dma.hbm_to_vmem [thread:$0]  %s785, 16, %s787, [#allocation27]
        $region20: #{encoder_apply.1} parent=11 // pred_fallthru
          _
        // Predicated region
        $region21: #{encoder_apply.1} parent=11 // pred_check
          %p790 = pneg %p704
        $region22: #{encoder_apply.1} parent=11 // pred_check_branch
          %792 = sbr.rel (%p790) target = $region24
        $region23: #{encoder_apply.1} parent=11 // pred_region
          %794 = vsyncadd [#allocation27], 0
          %s795 = sshll.u32 %s24, 4
          %s796 = int_to_ptr.hbm [resolvable:$true] %s795
          %s797 = sshll.u32 [#allocation28], 4
          %s798 = int_to_ptr.vmem [resolvable:$true] %s797
          %803 = dma.hbm_to_vmem [thread:$0]  %s796, 512, %s798, [#allocation27], 128, 128, 8
        $region24: #{encoder_apply.1} parent=11 // pred_fallthru
          _
        // Predicated region
        $region25: #{encoder_apply.1} parent=11 // pred_check
          %p804 = pneg %p725
        $region26: #{encoder_apply.1} parent=11 // pred_check_branch
          %806 = sbr.rel (%p804) target = $region28
        $region27: #{encoder_apply.1} parent=11 // pred_region
          _
        $region28: #{encoder_apply.1} parent=11 // pred_fallthru
          _
      $region12: #{encoder_apply.1} parent=5 // pred_fallthru
        _
      %p807 = scmp.lt.s32.totalorder %s57, 4
      // Predicated region
      $region29: #{encoder_apply.1} parent=5 // pred_check
        %p808 = pneg %p807
      $region30: #{encoder_apply.1} parent=5 // pred_check_branch
        %810 = sbr.rel (%p808) target = $region32
      $region31: #{encoder_apply.1} parent=5 // pred_region
        // Predicated region
        $region33: #{encoder_apply.1} parent=31 // pred_check
          %p811 = pneg %p89
        $region34: #{encoder_apply.1} parent=31 // pred_check_branch
          %813 = sbr.rel (%p811) target = $region36
        $region35: #{encoder_apply.1} parent=31 // pred_region
          %p814 = scmp.lt.s32.totalorder %s64, 1
          %s815 = scalar_select %p814, %s64, 1
          %s816 = smul.addr %s815, 2
          %s817 = smul.addr %s816, 8
          %s818 = scalar_lea.vmem %s0, %s817
        $region36: #{encoder_apply.1} parent=31 // pred_fallthru
          _
        // Predicated region
        $region37: #{encoder_apply.1} parent=31 // pred_check
          %p819 = pneg %p115
        $region38: #{encoder_apply.1} parent=31 // pred_check_branch
          %821 = sbr.rel (%p819) target = $region40
        $region39: #{encoder_apply.1} parent=31 // pred_region
          %s822 = sand.u32 %s105, 1
          %s823 = scalar_lea.sflag [#allocation4], %s822
          %s824 = sand.u32 %s105, 1
          %s825 = smul.addr %s824, 8
          %s826 = scalar_lea.vmem [#allocation3], %s825
          %828 = vsyncadd %s823, 0
          %s829 = smul.addr %s64, 8
          %s830 = scalar_lea.hbm %s1, %s829
          %s832 = sshll.u32 %s830, 4
          %s833 = int_to_ptr.hbm [resolvable:$true] %s832
          %s834 = sshll.u32 %s826, 4
          %s835 = int_to_ptr.vmem [resolvable:$true] %s834
          %837 = dma.hbm_to_vmem [thread:$0]  %s833, 128, %s835, %s823
        $region40: #{encoder_apply.1} parent=31 // pred_fallthru
          _
        // Predicated region
        $region41: #{encoder_apply.1} parent=31 // pred_check
          %p838 = pneg %p141
        $region42: #{encoder_apply.1} parent=31 // pred_check_branch
          %840 = sbr.rel (%p838) target = $region44
        $region43: #{encoder_apply.1} parent=31 // pred_region
          %p841 = scmp.lt.s32.totalorder %s65, 1
          %s842 = scalar_select %p841, %s65, 1
          %s843 = smul.addr %s842, 4
          %s844 = smul.addr %s843, 8
          %s845 = scalar_lea.vmem %s2, %s844
        $region44: #{encoder_apply.1} parent=31 // pred_fallthru
          _
        // Predicated region
        $region45: #{encoder_apply.1} parent=31 // pred_check
          %p846 = pneg %p167
        $region46: #{encoder_apply.1} parent=31 // pred_check_branch
          %848 = sbr.rel (%p846) target = $region48
        $region47: #{encoder_apply.1} parent=31 // pred_region
          %p849 = scmp.lt.s32.totalorder %s65, 1
          %s850 = scalar_select %p849, %s65, 1
          %s851 = scalar_lea.vmem %s3, %s850
        $region48: #{encoder_apply.1} parent=31 // pred_fallthru
          _
        // Predicated region
        $region49: #{encoder_apply.1} parent=31 // pred_check
          %p852 = pneg %p193
        $region50: #{encoder_apply.1} parent=31 // pred_check_branch
          %854 = sbr.rel (%p852) target = $region52
        $region51: #{encoder_apply.1} parent=31 // pred_region
          %p855 = scmp.lt.s32.totalorder %s65, 1
          %s856 = scalar_select %p855, %s65, 1
          %s857 = smul.addr %s856, 4
          %s858 = smul.addr %s857, 8
          %s859 = scalar_lea.vmem %s4, %s858
        $region52: #{encoder_apply.1} parent=31 // pred_fallthru
          _
        // Predicated region
        $region53: #{encoder_apply.1} parent=31 // pred_check
          %p860 = pneg %p219
        $region54: #{encoder_apply.1} parent=31 // pred_check_branch
          %862 = sbr.rel (%p860) target = $region56
        $region55: #{encoder_apply.1} parent=31 // pred_region
          %p863 = scmp.lt.s32.totalorder %s65, 1
          %s864 = scalar_select %p863, %s65, 1
          %s865 = scalar_lea.vmem %s5, %s864
        $region56: #{encoder_apply.1} parent=31 // pred_fallthru
          _
        // Predicated region
        $region57: #{encoder_apply.1} parent=31 // pred_check
          %p866 = pneg %p245
        $region58: #{encoder_apply.1} parent=31 // pred_check_branch
          %868 = sbr.rel (%p866) target = $region60
        $region59: #{encoder_apply.1} parent=31 // pred_region
          %p869 = scmp.lt.s32.totalorder %s65, 1
          %s870 = scalar_select %p869, %s65, 1
          %s871 = smul.addr %s870, 4
          %s872 = smul.addr %s871, 8
          %s873 = scalar_lea.vmem %s6, %s872
        $region60: #{encoder_apply.1} parent=31 // pred_fallthru
          _
        // Predicated region
        $region61: #{encoder_apply.1} parent=31 // pred_check
          %p874 = pneg %p271
        $region62: #{encoder_apply.1} parent=31 // pred_check_branch
          %876 = sbr.rel (%p874) target = $region64
        $region63: #{encoder_apply.1} parent=31 // pred_region
          %s877 = sand.u32 %s57, 1
          %s878 = scalar_lea.sflag [#allocation6], %s877
          %s879 = sand.u32 %s261, 1
          %s880 = scalar_lea.vmem [#allocation5], %s879
          %882 = vsyncadd %s878, 0
          %s883 = scalar_lea.hbm %s7, %s65
          %s885 = sshll.u32 %s883, 4
          %s886 = int_to_ptr.hbm [resolvable:$true] %s885
          %s887 = sshll.u32 %s880, 4
          %s888 = int_to_ptr.vmem [resolvable:$true] %s887
          %890 = dma.hbm_to_vmem [thread:$0]  %s886, 16, %s888, %s878
        $region64: #{encoder_apply.1} parent=31 // pred_fallthru
          _
        // Predicated region
        $region65: #{encoder_apply.1} parent=31 // pred_check
          %p891 = pneg %p297
        $region66: #{encoder_apply.1} parent=31 // pred_check_branch
          %893 = sbr.rel (%p891) target = $region68
        $region67: #{encoder_apply.1} parent=31 // pred_region
          %s894 = sand.u32 %s57, 1
          %s895 = scalar_lea.sflag [#allocation6], %s894
          %s896 = sand.u32 %s287, 1
          %s897 = smul.addr %s896, 32
          %s898 = scalar_lea.vmem [#allocation7], %s897
          %900 = vsyncadd %s895, 0
          %s901 = smul.addr %s65, 4
          %s902 = smul.addr %s901, 8
          %s903 = scalar_lea.hbm %s8, %s902
          %s904 = sshll.u32 %s903, 4
          %s905 = int_to_ptr.hbm [resolvable:$true] %s904
          %s906 = sshll.u32 %s898, 4
          %s907 = int_to_ptr.vmem [resolvable:$true] %s906
          %912 = dma.hbm_to_vmem [thread:$0]  %s905, 512, %s907, %s895, 128, 128, 8
        $region68: #{encoder_apply.1} parent=31 // pred_fallthru
          _
        // Predicated region
        $region69: #{encoder_apply.1} parent=31 // pred_check
          %p913 = pneg %p323
        $region70: #{encoder_apply.1} parent=31 // pred_check_branch
          %915 = sbr.rel (%p913) target = $region72
        $region71: #{encoder_apply.1} parent=31 // pred_region
          %s916 = sand.u32 %s57, 1
          %s917 = scalar_lea.sflag [#allocation9], %s916
          %s918 = sand.u32 %s313, 1
          %s919 = scalar_lea.vmem [#allocation8], %s918
          %921 = vsyncadd %s917, 0
          %s922 = scalar_lea.hbm %s9, %s65
          %s924 = sshll.u32 %s922, 4
          %s925 = int_to_ptr.hbm [resolvable:$true] %s924
          %s926 = sshll.u32 %s919, 4
          %s927 = int_to_ptr.vmem [resolvable:$true] %s926
          %929 = dma.hbm_to_vmem [thread:$0]  %s925, 16, %s927, %s917
        $region72: #{encoder_apply.1} parent=31 // pred_fallthru
          _
        // Predicated region
        $region73: #{encoder_apply.1} parent=31 // pred_check
          %p930 = pneg %p349
        $region74: #{encoder_apply.1} parent=31 // pred_check_branch
          %932 = sbr.rel (%p930) target = $region76
        $region75: #{encoder_apply.1} parent=31 // pred_region
          %s933 = sand.u32 %s57, 1
          %s934 = scalar_lea.sflag [#allocation9], %s933
          %s935 = sand.u32 %s339, 1
          %s936 = smul.addr %s935, 32
          %s937 = scalar_lea.vmem [#allocation10], %s936
          %939 = vsyncadd %s934, 0
          %s940 = smul.addr %s65, 4
          %s941 = smul.addr %s940, 8
          %s942 = scalar_lea.hbm %s10, %s941
          %s943 = sshll.u32 %s942, 4
          %s944 = int_to_ptr.hbm [resolvable:$true] %s943
          %s945 = sshll.u32 %s937, 4
          %s946 = int_to_ptr.vmem [resolvable:$true] %s945
          %951 = dma.hbm_to_vmem [thread:$0]  %s944, 512, %s946, %s934, 128, 128, 8
        $region76: #{encoder_apply.1} parent=31 // pred_fallthru
          _
        // Predicated region
        $region77: #{encoder_apply.1} parent=31 // pred_check
          %p952 = pneg %p375
        $region78: #{encoder_apply.1} parent=31 // pred_check_branch
          %954 = sbr.rel (%p952) target = $region80
        $region79: #{encoder_apply.1} parent=31 // pred_region
          %s955 = sand.u32 %s57, 1
          %s956 = scalar_lea.sflag [#allocation12], %s955
          %s957 = sand.u32 %s365, 1
          %s958 = scalar_lea.vmem [#allocation11], %s957
          %960 = vsyncadd %s956, 0
          %s961 = scalar_lea.hbm %s11, %s65
          %s963 = sshll.u32 %s961, 4
          %s964 = int_to_ptr.hbm [resolvable:$true] %s963
          %s965 = sshll.u32 %s958, 4
          %s966 = int_to_ptr.vmem [resolvable:$true] %s965
          %968 = dma.hbm_to_vmem [thread:$0]  %s964, 16, %s966, %s956
        $region80: #{encoder_apply.1} parent=31 // pred_fallthru
          _
        // Predicated region
        $region81: #{encoder_apply.1} parent=31 // pred_check
          %p969 = pneg %p401
        $region82: #{encoder_apply.1} parent=31 // pred_check_branch
          %971 = sbr.rel (%p969) target = $region84
        $region83: #{encoder_apply.1} parent=31 // pred_region
          %s972 = sand.u32 %s57, 1
          %s973 = scalar_lea.sflag [#allocation12], %s972
          %s974 = sand.u32 %s391, 1
          %s975 = scalar_lea.vmem [#allocation13], %s974
          %977 = vsyncadd %s973, 0
          %s978 = scalar_lea.hbm %s12, %s65
          %s980 = sshll.u32 %s978, 4
          %s981 = int_to_ptr.hbm [resolvable:$true] %s980
          %s982 = sshll.u32 %s975, 4
          %s983 = int_to_ptr.vmem [resolvable:$true] %s982
          %985 = dma.hbm_to_vmem [thread:$0]  %s981, 16, %s983, %s973
        $region84: #{encoder_apply.1} parent=31 // pred_fallthru
          _
        // Predicated region
        $region85: #{encoder_apply.1} parent=31 // pred_check
          %p986 = pneg %p427
        $region86: #{encoder_apply.1} parent=31 // pred_check_branch
          %988 = sbr.rel (%p986) target = $region88
        $region87: #{encoder_apply.1} parent=31 // pred_region
          %s989 = sand.u32 %s57, 1
          %s990 = scalar_lea.sflag [#allocation15], %s989
          %s991 = sand.u32 %s417, 1
          %s992 = scalar_lea.vmem [#allocation14], %s991
          %994 = vsyncadd %s990, 0
          %s995 = scalar_lea.hbm %s13, %s65
          %s997 = sshll.u32 %s995, 4
          %s998 = int_to_ptr.hbm [resolvable:$true] %s997
          %s999 = sshll.u32 %s992, 4
          %s1000 = int_to_ptr.vmem [resolvable:$true] %s999
          %1002 = dma.hbm_to_vmem [thread:$0]  %s998, 16, %s1000, %s990
        $region88: #{encoder_apply.1} parent=31 // pred_fallthru
          _
        // Predicated region
        $region89: #{encoder_apply.1} parent=31 // pred_check
          %p1003 = pneg %p453
        $region90: #{encoder_apply.1} parent=31 // pred_check_branch
          %1005 = sbr.rel (%p1003) target = $region92
        $region91: #{encoder_apply.1} parent=31 // pred_region
          %s1006 = sand.u32 %s57, 1
          %s1007 = scalar_lea.sflag [#allocation15], %s1006
          %s1008 = sand.u32 %s443, 1
          %s1009 = scalar_lea.vmem [#allocation16], %s1008
          %1011 = vsyncadd %s1007, 0
          %s1012 = scalar_lea.hbm %s14, %s65
          %s1014 = sshll.u32 %s1012, 4
          %s1015 = int_to_ptr.hbm [resolvable:$true] %s1014
          %s1016 = sshll.u32 %s1009, 4
          %s1017 = int_to_ptr.vmem [resolvable:$true] %s1016
          %1019 = dma.hbm_to_vmem [thread:$0]  %s1015, 16, %s1017, %s1007
        $region92: #{encoder_apply.1} parent=31 // pred_fallthru
          _
        // Predicated region
        $region93: #{encoder_apply.1} parent=31 // pred_check
          %p1020 = pneg %p479
        $region94: #{encoder_apply.1} parent=31 // pred_check_branch
          %1022 = sbr.rel (%p1020) target = $region96
        $region95: #{encoder_apply.1} parent=31 // pred_region
          %s1023 = sand.u32 %s57, 1
          %s1024 = scalar_lea.sflag [#allocation18], %s1023
          %s1025 = sand.u32 %s469, 1
          %s1026 = scalar_lea.vmem [#allocation17], %s1025
          %1028 = vsyncadd %s1024, 0
          %s1029 = scalar_lea.hbm %s15, %s65
          %s1031 = sshll.u32 %s1029, 4
          %s1032 = int_to_ptr.hbm [resolvable:$true] %s1031
          %s1033 = sshll.u32 %s1026, 4
          %s1034 = int_to_ptr.vmem [resolvable:$true] %s1033
          %1036 = dma.hbm_to_vmem [thread:$0]  %s1032, 16, %s1034, %s1024
        $region96: #{encoder_apply.1} parent=31 // pred_fallthru
          _
        // Predicated region
        $region97: #{encoder_apply.1} parent=31 // pred_check
          %p1037 = pneg %p505
        $region98: #{encoder_apply.1} parent=31 // pred_check_branch
          %1039 = sbr.rel (%p1037) target = $region100
        $region99: #{encoder_apply.1} parent=31 // pred_region
          %s1040 = sand.u32 %s57, 1
          %s1041 = scalar_lea.sflag [#allocation18], %s1040
          %s1042 = sand.u32 %s495, 1
          %s1043 = scalar_lea.vmem [#allocation19], %s1042
          %1045 = vsyncadd %s1041, 0
          %s1046 = scalar_lea.hbm %s16, %s65
          %s1048 = sshll.u32 %s1046, 4
          %s1049 = int_to_ptr.hbm [resolvable:$true] %s1048
          %s1050 = sshll.u32 %s1043, 4
          %s1051 = int_to_ptr.vmem [resolvable:$true] %s1050
          %1053 = dma.hbm_to_vmem [thread:$0]  %s1049, 16, %s1051, %s1041
        $region100: #{encoder_apply.1} parent=31 // pred_fallthru
          _
        // Predicated region
        $region101: #{encoder_apply.1} parent=31 // pred_check
          %p1054 = pneg %p531
        $region102: #{encoder_apply.1} parent=31 // pred_check_branch
          %1056 = sbr.rel (%p1054) target = $region104
        $region103: #{encoder_apply.1} parent=31 // pred_region
          %s1057 = sand.u32 %s57, 1
          %s1058 = scalar_lea.sflag [#allocation21], %s1057
          %s1059 = sand.u32 %s521, 1
          %s1060 = scalar_lea.vmem [#allocation20], %s1059
          %1062 = vsyncadd %s1058, 0
          %s1063 = scalar_lea.hbm %s17, %s65
          %s1065 = sshll.u32 %s1063, 4
          %s1066 = int_to_ptr.hbm [resolvable:$true] %s1065
          %s1067 = sshll.u32 %s1060, 4
          %s1068 = int_to_ptr.vmem [resolvable:$true] %s1067
          %1070 = dma.hbm_to_vmem [thread:$0]  %s1066, 16, %s1068, %s1058
        $region104: #{encoder_apply.1} parent=31 // pred_fallthru
          _
        // Predicated region
        $region105: #{encoder_apply.1} parent=31 // pred_check
          %p1071 = pneg %p557
        $region106: #{encoder_apply.1} parent=31 // pred_check_branch
          %1073 = sbr.rel (%p1071) target = $region108
        $region107: #{encoder_apply.1} parent=31 // pred_region
          %s1074 = sand.u32 %s57, 1
          %s1075 = scalar_lea.sflag [#allocation21], %s1074
          %s1076 = sand.u32 %s547, 1
          %s1077 = smul.addr %s1076, 32
          %s1078 = scalar_lea.vmem [#allocation22], %s1077
          %1080 = vsyncadd %s1075, 0
          %s1081 = smul.addr %s65, 4
          %s1082 = smul.addr %s1081, 8
          %s1083 = scalar_lea.hbm %s18, %s1082
          %s1084 = sshll.u32 %s1083, 4
          %s1085 = int_to_ptr.hbm [resolvable:$true] %s1084
          %s1086 = sshll.u32 %s1078, 4
          %s1087 = int_to_ptr.vmem [resolvable:$true] %s1086
          %1092 = dma.hbm_to_vmem [thread:$0]  %s1085, 512, %s1087, %s1075, 128, 128, 8
        $region108: #{encoder_apply.1} parent=31 // pred_fallthru
          _
        // Predicated region
        $region109: #{encoder_apply.1} parent=31 // pred_check
          %p1093 = pneg %p583
        $region110: #{encoder_apply.1} parent=31 // pred_check_branch
          %1095 = sbr.rel (%p1093) target = $region112
        $region111: #{encoder_apply.1} parent=31 // pred_region
          %s1096 = sand.u32 %s57, 1
          %s1097 = scalar_lea.sflag [#allocation24], %s1096
          %s1098 = sand.u32 %s573, 1
          %s1099 = scalar_lea.vmem [#allocation23], %s1098
          %1101 = vsyncadd %s1097, 0
          %s1102 = scalar_lea.hbm %s19, %s65
          %s1104 = sshll.u32 %s1102, 4
          %s1105 = int_to_ptr.hbm [resolvable:$true] %s1104
          %s1106 = sshll.u32 %s1099, 4
          %s1107 = int_to_ptr.vmem [resolvable:$true] %s1106
          %1109 = dma.hbm_to_vmem [thread:$0]  %s1105, 16, %s1107, %s1097
        $region112: #{encoder_apply.1} parent=31 // pred_fallthru
          _
        // Predicated region
        $region113: #{encoder_apply.1} parent=31 // pred_check
          %p1110 = pneg %p609
        $region114: #{encoder_apply.1} parent=31 // pred_check_branch
          %1112 = sbr.rel (%p1110) target = $region116
        $region115: #{encoder_apply.1} parent=31 // pred_region
          %p1113 = scmp.lt.s32.totalorder %s65, 1
          %s1114 = scalar_select %p1113, %s65, 1
          %s1115 = smul.addr %s1114, 8
          %s1116 = smul.addr %s1115, 8
          %s1117 = scalar_lea.vmem %s20, %s1116
        $region116: #{encoder_apply.1} parent=31 // pred_fallthru
          _
        // Predicated region
        $region117: #{encoder_apply.1} parent=31 // pred_check
          %p1118 = pneg %p635
        $region118: #{encoder_apply.1} parent=31 // pred_check_branch
          %1120 = sbr.rel (%p1118) target = $region120
        $region119: #{encoder_apply.1} parent=31 // pred_region
          %p1121 = scmp.lt.s32.totalorder %s65, 1
          %s1122 = scalar_select %p1121, %s65, 1
          %s1123 = scalar_lea.vmem %s21, %s1122
        $region120: #{encoder_apply.1} parent=31 // pred_fallthru
          _
      $region32: #{encoder_apply.1} parent=5 // pred_fallthru
        _
      %p1124 = scmp.le.s32.totalorder 1, %s57
      %p1125 = scmp.lt.s32.totalorder %s57, 5
      %p1126 = pnand %p1124, %p1125
      %p1127 = pneg %p1126
      // Predicated region
      $region121: #{encoder_apply.1} parent=5 // pred_check
        _
      $region122: #{encoder_apply.1} parent=5 // pred_check_branch
        %1129 = sbr.rel (%p1126) target = $region124
      $region123: #{encoder_apply.1} parent=5 // pred_region
        %s1130 = ssub.s32 %s57, 1
        %s1131 = sand.u32 %s108, 1
        %s1132 = scalar_lea.sflag [#allocation4], %s1131
        %s1133 = sand.u32 %s108, 1
        %s1134 = smul.addr %s1133, 8
        %s1135 = scalar_lea.vmem [#allocation3], %s1134
        // Predicated region
        $region125: #{encoder_apply.1} parent=123 // pred_check
          %p1136 = pneg %p121
        $region126: #{encoder_apply.1} parent=123 // pred_check_branch
          %1138 = sbr.rel (%p1136) target = $region128
        $region127: #{encoder_apply.1} parent=123 // pred_region
          %1140 = dma.done %s1132, 128
        $region128: #{encoder_apply.1} parent=123 // pred_fallthru
          _
        %s1141 = sand.u32 %s62, 1
        %s1142 = scalar_lea.sflag [#allocation6], %s1141
        %s1143 = sand.u32 %s264, 1
        %s1144 = scalar_lea.vmem [#allocation5], %s1143
        // Predicated region
        $region129: #{encoder_apply.1} parent=123 // pred_check
          %p1145 = pneg %p277
        $region130: #{encoder_apply.1} parent=123 // pred_check_branch
          %1147 = sbr.rel (%p1145) target = $region132
        $region131: #{encoder_apply.1} parent=123 // pred_region
          %1149 = dma.done %s1142, 16
        $region132: #{encoder_apply.1} parent=123 // pred_fallthru
          _
        %s1150 = sand.u32 %s62, 1
        %s1151 = scalar_lea.sflag [#allocation6], %s1150
        %s1152 = sand.u32 %s290, 1
        %s1153 = smul.addr %s1152, 32
        %s1154 = scalar_lea.vmem [#allocation7], %s1153
        // Predicated region
        $region133: #{encoder_apply.1} parent=123 // pred_check
          %p1155 = pneg %p303
        $region134: #{encoder_apply.1} parent=123 // pred_check_branch
          %1157 = sbr.rel (%p1155) target = $region136
        $region135: #{encoder_apply.1} parent=123 // pred_region
          %1159 = dma.done %s1151, 512
        $region136: #{encoder_apply.1} parent=123 // pred_fallthru
          _
        %s1160 = sand.u32 %s62, 1
        %s1161 = scalar_lea.sflag [#allocation9], %s1160
        %s1162 = sand.u32 %s316, 1
        %s1163 = scalar_lea.vmem [#allocation8], %s1162
        // Predicated region
        $region137: #{encoder_apply.1} parent=123 // pred_check
          %p1164 = pneg %p329
        $region138: #{encoder_apply.1} parent=123 // pred_check_branch
          %1166 = sbr.rel (%p1164) target = $region140
        $region139: #{encoder_apply.1} parent=123 // pred_region
          %1168 = dma.done %s1161, 16
        $region140: #{encoder_apply.1} parent=123 // pred_fallthru
          _
        %s1169 = sand.u32 %s62, 1
        %s1170 = scalar_lea.sflag [#allocation9], %s1169
        %s1171 = sand.u32 %s342, 1
        %s1172 = smul.addr %s1171, 32
        %s1173 = scalar_lea.vmem [#allocation10], %s1172
        // Predicated region
        $region141: #{encoder_apply.1} parent=123 // pred_check
          %p1174 = pneg %p355
        $region142: #{encoder_apply.1} parent=123 // pred_check_branch
          %1176 = sbr.rel (%p1174) target = $region144
        $region143: #{encoder_apply.1} parent=123 // pred_region
          %1178 = dma.done %s1170, 512
        $region144: #{encoder_apply.1} parent=123 // pred_fallthru
          _
        %s1179 = sand.u32 %s62, 1
        %s1180 = scalar_lea.sflag [#allocation12], %s1179
        %s1181 = sand.u32 %s368, 1
        %s1182 = scalar_lea.vmem [#allocation11], %s1181
        // Predicated region
        $region145: #{encoder_apply.1} parent=123 // pred_check
          %p1183 = pneg %p381
        $region146: #{encoder_apply.1} parent=123 // pred_check_branch
          %1185 = sbr.rel (%p1183) target = $region148
        $region147: #{encoder_apply.1} parent=123 // pred_region
          %1187 = dma.done %s1180, 16
        $region148: #{encoder_apply.1} parent=123 // pred_fallthru
          _
        %s1188 = sand.u32 %s62, 1
        %s1189 = scalar_lea.sflag [#allocation12], %s1188
        %s1190 = sand.u32 %s394, 1
        %s1191 = scalar_lea.vmem [#allocation13], %s1190
        // Predicated region
        $region149: #{encoder_apply.1} parent=123 // pred_check
          %p1192 = pneg %p407
        $region150: #{encoder_apply.1} parent=123 // pred_check_branch
          %1194 = sbr.rel (%p1192) target = $region152
        $region151: #{encoder_apply.1} parent=123 // pred_region
          %1196 = dma.done %s1189, 16
        $region152: #{encoder_apply.1} parent=123 // pred_fallthru
          _
        %s1197 = sand.u32 %s62, 1
        %s1198 = scalar_lea.sflag [#allocation15], %s1197
        %s1199 = sand.u32 %s420, 1
        %s1200 = scalar_lea.vmem [#allocation14], %s1199
        // Predicated region
        $region153: #{encoder_apply.1} parent=123 // pred_check
          %p1201 = pneg %p433
        $region154: #{encoder_apply.1} parent=123 // pred_check_branch
          %1203 = sbr.rel (%p1201) target = $region156
        $region155: #{encoder_apply.1} parent=123 // pred_region
          %1205 = dma.done %s1198, 16
        $region156: #{encoder_apply.1} parent=123 // pred_fallthru
          _
        %s1206 = sand.u32 %s62, 1
        %s1207 = scalar_lea.sflag [#allocation15], %s1206
        %s1208 = sand.u32 %s446, 1
        %s1209 = scalar_lea.vmem [#allocation16], %s1208
        // Predicated region
        $region157: #{encoder_apply.1} parent=123 // pred_check
          %p1210 = pneg %p459
        $region158: #{encoder_apply.1} parent=123 // pred_check_branch
          %1212 = sbr.rel (%p1210) target = $region160
        $region159: #{encoder_apply.1} parent=123 // pred_region
          %1214 = dma.done %s1207, 16
        $region160: #{encoder_apply.1} parent=123 // pred_fallthru
          _
        %s1215 = sand.u32 %s62, 1
        %s1216 = scalar_lea.sflag [#allocation18], %s1215
        %s1217 = sand.u32 %s472, 1
        %s1218 = scalar_lea.vmem [#allocation17], %s1217
        // Predicated region
        $region161: #{encoder_apply.1} parent=123 // pred_check
          %p1219 = pneg %p485
        $region162: #{encoder_apply.1} parent=123 // pred_check_branch
          %1221 = sbr.rel (%p1219) target = $region164
        $region163: #{encoder_apply.1} parent=123 // pred_region
          %1223 = dma.done %s1216, 16
        $region164: #{encoder_apply.1} parent=123 // pred_fallthru
          _
        %s1224 = sand.u32 %s62, 1
        %s1225 = scalar_lea.sflag [#allocation18], %s1224
        %s1226 = sand.u32 %s498, 1
        %s1227 = scalar_lea.vmem [#allocation19], %s1226
        // Predicated region
        $region165: #{encoder_apply.1} parent=123 // pred_check
          %p1228 = pneg %p511
        $region166: #{encoder_apply.1} parent=123 // pred_check_branch
          %1230 = sbr.rel (%p1228) target = $region168
        $region167: #{encoder_apply.1} parent=123 // pred_region
          %1232 = dma.done %s1225, 16
        $region168: #{encoder_apply.1} parent=123 // pred_fallthru
          _
        %s1233 = sand.u32 %s62, 1
        %s1234 = scalar_lea.sflag [#allocation21], %s1233
        %s1235 = sand.u32 %s524, 1
        %s1236 = scalar_lea.vmem [#allocation20], %s1235
        // Predicated region
        $region169: #{encoder_apply.1} parent=123 // pred_check
          %p1237 = pneg %p537
        $region170: #{encoder_apply.1} parent=123 // pred_check_branch
          %1239 = sbr.rel (%p1237) target = $region172
        $region171: #{encoder_apply.1} parent=123 // pred_region
          %1241 = dma.done %s1234, 16
        $region172: #{encoder_apply.1} parent=123 // pred_fallthru
          _
        %s1242 = sand.u32 %s62, 1
        %s1243 = scalar_lea.sflag [#allocation21], %s1242
        %s1244 = sand.u32 %s550, 1
        %s1245 = smul.addr %s1244, 32
        %s1246 = scalar_lea.vmem [#allocation22], %s1245
        // Predicated region
        $region173: #{encoder_apply.1} parent=123 // pred_check
          %p1247 = pneg %p563
        $region174: #{encoder_apply.1} parent=123 // pred_check_branch
          %1249 = sbr.rel (%p1247) target = $region176
        $region175: #{encoder_apply.1} parent=123 // pred_region
          %1251 = dma.done %s1243, 512
        $region176: #{encoder_apply.1} parent=123 // pred_fallthru
          _
        %s1252 = sand.u32 %s62, 1
        %s1253 = scalar_lea.sflag [#allocation24], %s1252
        %s1254 = sand.u32 %s576, 1
        %s1255 = scalar_lea.vmem [#allocation23], %s1254
        // Predicated region
        $region177: #{encoder_apply.1} parent=123 // pred_check
          %p1256 = pneg %p589
        $region178: #{encoder_apply.1} parent=123 // pred_check_branch
          %1258 = sbr.rel (%p1256) target = $region180
        $region179: #{encoder_apply.1} parent=123 // pred_region
          %1260 = dma.done %s1253, 16
        $region180: #{encoder_apply.1} parent=123 // pred_fallthru
          _
        // Predicated region
        $region181: #{encoder_apply.1} parent=123 // pred_check
          %p1261 = pneg %p662
        $region182: #{encoder_apply.1} parent=123 // pred_check_branch
          %1263 = sbr.rel (%p1261) target = $region184
        $region183: #{encoder_apply.1} parent=123 // pred_region
          %1265 = dma.done [#allocation24], 16
        $region184: #{encoder_apply.1} parent=123 // pred_fallthru
          _
        // Predicated region
        $region185: #{encoder_apply.1} parent=123 // pred_check
          %p1266 = pneg %p683
        $region186: #{encoder_apply.1} parent=123 // pred_check_branch
          %1268 = sbr.rel (%p1266) target = $region188
        $region187: #{encoder_apply.1} parent=123 // pred_region
          %1270 = dma.done [#allocation27], 16
        $region188: #{encoder_apply.1} parent=123 // pred_fallthru
          _
        // Predicated region
        $region189: #{encoder_apply.1} parent=123 // pred_check
          %p1271 = pneg %p704
        $region190: #{encoder_apply.1} parent=123 // pred_check_branch
          %1273 = sbr.rel (%p1271) target = $region192
        $region191: #{encoder_apply.1} parent=123 // pred_region
          %1275 = dma.done [#allocation27], 512
        $region192: #{encoder_apply.1} parent=123 // pred_fallthru
          _
        %p1276 = scmp.lt.s32.totalorder %s66, 1
        %s1277 = scalar_select %p1276, %s66, 1
        %s1278 = smul.addr %s1277, 2
        %s1279 = smul.addr %s1278, 8
        %s1280 = scalar_lea.vmem %s0, %s1279
        %p1281 = pneg %p95
        %p1282 = pneg %p92
        %s1283 = sand.u32 %s108, 1
        %s1284 = scalar_lea.sflag [#allocation4], %s1283
        %s1285 = sand.u32 %s108, 1
        %s1286 = smul.addr %s1285, 8
        %s1287 = scalar_lea.vmem [#allocation3], %s1286
        %p1288 = pneg %p121
        %p1289 = pneg %p118
        %p1290 = scmp.lt.s32.totalorder %s67, 1
        %s1291 = scalar_select %p1290, %s67, 1
        %s1292 = smul.addr %s1291, 4
        %s1293 = smul.addr %s1292, 8
        %s1294 = scalar_lea.vmem %s2, %s1293
        %p1295 = pneg %p147
        %p1296 = pneg %p144
        %p1297 = scmp.lt.s32.totalorder %s67, 1
        %s1298 = scalar_select %p1297, %s67, 1
        %s1299 = scalar_lea.vmem %s3, %s1298
        %p1300 = pneg %p173
        %p1301 = pneg %p170
        %p1302 = scmp.lt.s32.totalorder %s67, 1
        %s1303 = scalar_select %p1302, %s67, 1
        %s1304 = smul.addr %s1303, 4
        %s1305 = smul.addr %s1304, 8
        %s1306 = scalar_lea.vmem %s4, %s1305
        %p1307 = pneg %p199
        %p1308 = pneg %p196
        %p1309 = scmp.lt.s32.totalorder %s67, 1
        %s1310 = scalar_select %p1309, %s67, 1
        %s1311 = scalar_lea.vmem %s5, %s1310
        %p1312 = pneg %p225
        %p1313 = pneg %p222
        %p1314 = scmp.lt.s32.totalorder %s67, 1
        %s1315 = scalar_select %p1314, %s67, 1
        %s1316 = smul.addr %s1315, 4
        %s1317 = smul.addr %s1316, 8
        %s1318 = scalar_lea.vmem %s6, %s1317
        %p1319 = pneg %p251
        %p1320 = pneg %p248
        %s1321 = sand.u32 %s62, 1
        %s1322 = scalar_lea.sflag [#allocation6], %s1321
        %s1323 = sand.u32 %s264, 1
        %s1324 = scalar_lea.vmem [#allocation5], %s1323
        %p1325 = pneg %p277
        %p1326 = pneg %p274
        %s1327 = sand.u32 %s62, 1
        %s1328 = scalar_lea.sflag [#allocation6], %s1327
        %s1329 = sand.u32 %s290, 1
        %s1330 = smul.addr %s1329, 32
        %s1331 = scalar_lea.vmem [#allocation7], %s1330
        %p1332 = pneg %p303
        %p1333 = pneg %p300
        %s1334 = sand.u32 %s62, 1
        %s1335 = scalar_lea.sflag [#allocation9], %s1334
        %s1336 = sand.u32 %s316, 1
        %s1337 = scalar_lea.vmem [#allocation8], %s1336
        %p1338 = pneg %p329
        %p1339 = pneg %p326
        %s1340 = sand.u32 %s62, 1
        %s1341 = scalar_lea.sflag [#allocation9], %s1340
        %s1342 = sand.u32 %s342, 1
        %s1343 = smul.addr %s1342, 32
        %s1344 = scalar_lea.vmem [#allocation10], %s1343
        %p1345 = pneg %p355
        %p1346 = pneg %p352
        %s1347 = sand.u32 %s62, 1
        %s1348 = scalar_lea.sflag [#allocation12], %s1347
        %s1349 = sand.u32 %s368, 1
        %s1350 = scalar_lea.vmem [#allocation11], %s1349
        %p1351 = pneg %p381
        %p1352 = pneg %p378
        %s1353 = sand.u32 %s62, 1
        %s1354 = scalar_lea.sflag [#allocation12], %s1353
        %s1355 = sand.u32 %s394, 1
        %s1356 = scalar_lea.vmem [#allocation13], %s1355
        %p1357 = pneg %p407
        %p1358 = pneg %p404
        %s1359 = sand.u32 %s62, 1
        %s1360 = scalar_lea.sflag [#allocation15], %s1359
        %s1361 = sand.u32 %s420, 1
        %s1362 = scalar_lea.vmem [#allocation14], %s1361
        %p1363 = pneg %p433
        %p1364 = pneg %p430
        %s1365 = sand.u32 %s62, 1
        %s1366 = scalar_lea.sflag [#allocation15], %s1365
        %s1367 = sand.u32 %s446, 1
        %s1368 = scalar_lea.vmem [#allocation16], %s1367
        %p1369 = pneg %p459
        %p1370 = pneg %p456
        %s1371 = sand.u32 %s62, 1
        %s1372 = scalar_lea.sflag [#allocation18], %s1371
        %s1373 = sand.u32 %s472, 1
        %s1374 = scalar_lea.vmem [#allocation17], %s1373
        %p1375 = pneg %p485
        %p1376 = pneg %p482
        %s1377 = sand.u32 %s62, 1
        %s1378 = scalar_lea.sflag [#allocation18], %s1377
        %s1379 = sand.u32 %s498, 1
        %s1380 = scalar_lea.vmem [#allocation19], %s1379
        %p1381 = pneg %p511
        %p1382 = pneg %p508
        %s1383 = sand.u32 %s62, 1
        %s1384 = scalar_lea.sflag [#allocation21], %s1383
        %s1385 = sand.u32 %s524, 1
        %s1386 = scalar_lea.vmem [#allocation20], %s1385
        %p1387 = pneg %p537
        %p1388 = pneg %p534
        %s1389 = sand.u32 %s62, 1
        %s1390 = scalar_lea.sflag [#allocation21], %s1389
        %s1391 = sand.u32 %s550, 1
        %s1392 = smul.addr %s1391, 32
        %s1393 = scalar_lea.vmem [#allocation22], %s1392
        %p1394 = pneg %p563
        %p1395 = pneg %p560
        %s1396 = sand.u32 %s62, 1
        %s1397 = scalar_lea.sflag [#allocation24], %s1396
        %s1398 = sand.u32 %s576, 1
        %s1399 = scalar_lea.vmem [#allocation23], %s1398
        %p1400 = pneg %p589
        %p1401 = pneg %p586
        %p1402 = scmp.lt.s32.totalorder %s67, 1
        %s1403 = scalar_select %p1402, %s67, 1
        %s1404 = smul.addr %s1403, 8
        %s1405 = smul.addr %s1404, 8
        %s1406 = scalar_lea.vmem %s20, %s1405
        %p1407 = pneg %p615
        %p1408 = pneg %p612
        %p1409 = scmp.lt.s32.totalorder %s67, 1
        %s1410 = scalar_select %p1409, %s67, 1
        %s1411 = scalar_lea.vmem %s21, %s1410
        %p1412 = pneg %p641
        %p1413 = pneg %p638
        %p1414 = pneg %p662
        %p1415 = pneg %p659
        %p1416 = pneg %p683
        %p1417 = pneg %p680
        %p1418 = pneg %p704
        %p1419 = pneg %p701
        %p1420 = pneg %p725
        %p1421 = pneg %p722
        %p1422 = pneg %p751
        %p1423 = pneg %p748
        %p1424 = scmp.lt.s32.totalorder %s66, 1
        %s1425 = scalar_select %p1424, %s66, 1
        %s1426 = smul.addr %s1425, 2
        %s1427 = smul.addr %s1426, 8
        %s1428 = scalar_lea.vmem %s26, %s1427
        %p1429 = scmp.lt.s32.totalorder %s66, 1
        %s1430 = scalar_select %p1429, %s66, 1
        %s1431 = smul.addr %s1430, 2
        %s1432 = smul.addr %s1431, 8
        %s1433 = scalar_lea.vmem %s0, %s1432
        %p1434 = scmp.lt.s32.totalorder %s67, 1
        %s1435 = scalar_select %p1434, %s67, 1
        %s1436 = smul.addr %s1435, 4
        %s1437 = smul.addr %s1436, 8
        %s1438 = scalar_lea.vmem %s2, %s1437
        %p1439 = scmp.lt.s32.totalorder %s67, 1
        %s1440 = scalar_select %p1439, %s67, 1
        %s1441 = scalar_lea.vmem %s3, %s1440
        %p1442 = scmp.lt.s32.totalorder %s67, 1
        %s1443 = scalar_select %p1442, %s67, 1
        %s1444 = smul.addr %s1443, 4
        %s1445 = smul.addr %s1444, 8
        %s1446 = scalar_lea.vmem %s4, %s1445
        %p1447 = scmp.lt.s32.totalorder %s67, 1
        %s1448 = scalar_select %p1447, %s67, 1
        %s1449 = scalar_lea.vmem %s5, %s1448
        %p1450 = scmp.lt.s32.totalorder %s67, 1
        %s1451 = scalar_select %p1450, %s67, 1
        %s1452 = smul.addr %s1451, 4
        %s1453 = smul.addr %s1452, 8
        %s1454 = scalar_lea.vmem %s6, %s1453
        %p1455 = scmp.lt.s32.totalorder %s67, 1
        %s1456 = scalar_select %p1455, %s67, 1
        %s1457 = smul.addr %s1456, 8
        %s1458 = smul.addr %s1457, 8
        %s1459 = scalar_lea.vmem %s20, %s1458
        %p1460 = scmp.lt.s32.totalorder %s67, 1
        %s1461 = scalar_select %p1460, %s67, 1
        %s1462 = scalar_lea.vmem %s21, %s1461
        %p1463 = scmp.lt.s32.totalorder %s66, 1
        %s1464 = scalar_select %p1463, %s66, 1
        %s1465 = smul.addr %s1464, 2
        %s1466 = smul.addr %s1465, 8
        %s1467 = scalar_lea.vmem %s26, %s1466
        %p1468 = scmp.eq.s32.totalorder %s67, 0
        // Predicated region
        $region193: #{encoder_apply.1} parent=123 // pred_check
          %p1469 = pneg %p1468
        $region194: #{encoder_apply.1} parent=123 // pred_check_branch
          %1471 = sbr.rel (%p1469) target = $region196
        $region195: #{encoder_apply.1} parent=123 // pred_region
          %v1472 = vld [vmem:[%s1433] sm:$0xff]
          %v1473 = vld [vmem:[%s1433 + $0x8] sm:$0x1]
          %vm1474 = vcmask 261120
          %1475 = vst.msk [vmem:[#allocation2] sm:$0xff] %vm1474, %v1472
          %vm1476 = vcmask 253952
          %1477 = vst.msk [vmem:[#allocation2 + $0x8] sm:$0x1] %vm1476, %v1473
        $region196: #{encoder_apply.1} parent=123 // pred_fallthru
          _
        %v1478 = vld [vmem:[#allocation2] sm:$0xff]
        %v1479 = vld [vmem:[#allocation2 + $0x8] sm:$0x1]
        %v1480 = vld [vmem:[%s1135] sm:$0xff]
        %v1481 = vld [vmem:[%s1438] sm:$0xff]
        %v1482 = vld [vmem:[%s1438 + $0x8] sm:$0xff]
        %v1483 = vld [vmem:[%s1438 + $0x10] sm:$0xff]
        %v1484 = vld [vmem:[%s1438 + $0x18] sm:$0xff]
        %v1485 = vld [vmem:[%s1441] sm:$0x1]
        %v1487 = vperm.slane %v1485, 0
        %vm1489 = vcmask 261120
        %v1491 = vsel %vm1489, %v1478, 0
        %v1494 = vsel %vm1489, %v1479, 0
        %1496 = vmatpush.msra.mxu0 0.0
        %1497 = vmatpush.msra.mxu0 0.0
        %1498 = vmatpush.msra.mxu0 0.0
        %1499 = vmatpush.msra.mxu0 0.0
        %1500 = vmatpush.msra.mxu0 0.0
        %1501 = vmatpush.msra.mxu0 0.0
        %1502 = vmatpush.msra.mxu0 0.0
        %1503 = vmatpush.msra.mxu0 0.0
        %1504 = vmatpush.msra.mxu0 0.0
        %1505 = vmatpush.msra.mxu0 0.0
        %1506 = vmatpush.msra.mxu0 0.0
        %1507 = vmatpush.msra.mxu0 0.0
        %1508 = vmatpush.msra.mxu0 %v1484
        %1509 = vmatpush.msra.mxu0 %v1483
        %1510 = vmatpush.msra.mxu0 %v1482
        %1511 = vmatpush.msra.mxu0 %v1481
        %1512 = vmatmul.f32.gmra.mxu0 %v1491
        %v1513 = vpop.f32.mrf.mxu0
        %v1514 = vadd.f32 %v1487, %v1513
        %1515 = vmatmul.f32.gmra.mxu0 %v1494
        %v1516 = vpop.f32.mrf.mxu0
        %v1517 = vadd.f32 %v1487, %v1516
        %1518 = vdwg.mxu0
        %1521 = vrot.lane.b32.xlu0 %v1514, 120
        %v1522 = vpop.permute.xlu0 %1521
        %1523 = vrot.lane.b32.xlu0 %v1517, 120
        %v1524 = vpop.permute.xlu0 %1523
        %1525 = vrot.lane.b32.xlu0 %v1514, 112
        %v1526 = vpop.permute.xlu0 %1525
        %1527 = vrot.lane.b32.xlu0 %v1517, 112
        %v1528 = vpop.permute.xlu0 %1527
        %1529 = vrot.lane.b32.xlu0 %v1514, 104
        %v1530 = vpop.permute.xlu0 %1529
        %1531 = vrot.lane.b32.xlu0 %v1517, 104
        %v1532 = vpop.permute.xlu0 %1531
        %1533 = vrot.lane.b32.xlu0 %v1514, 96
        %v1534 = vpop.permute.xlu0 %1533
        %1535 = vrot.lane.b32.xlu0 %v1517, 96
        %v1536 = vpop.permute.xlu0 %1535
        %vm1537 = vcmask 64512
        %v1538 = vsel %vm1537, %v1514, 0
        %v1540 = vsel %vm1537, %v1517, 0
        %v1542 = vsel %vm1537, %v1534, 0
        %v1544 = vsel %vm1537, %v1536, 0
        %1546 = vmatpush.xpose.msra.mxu0 0.0
        %1547 = vmatpush.xpose.msra.mxu0 0.0
        %1548 = vmatpush.xpose.msra.mxu0 0.0
        %1549 = vmatpush.xpose.msra.mxu0 0.0
        %1550 = vmatpush.xpose.msra.mxu0 0.0
        %1551 = vmatpush.xpose.msra.mxu0 0.0
        %1552 = vmatpush.xpose.msra.mxu0 0.0
        %1553 = vmatpush.xpose.msra.mxu0 0.0
        %1554 = vmatpush.xpose.msra.mxu0 0.0
        %1555 = vmatpush.xpose.msra.mxu0 0.0
        %1556 = vmatpush.xpose.msra.mxu0 0.0
        %1557 = vmatpush.xpose.msra.mxu0 0.0
        %1558 = vmatpush.xpose.msra.mxu0 0.0
        %1559 = vmatpush.xpose.msra.mxu0 0.0
        %1560 = vmatpush.xpose.msra.mxu0 %v1544
        %1561 = vmatpush.xpose.msra.mxu0 %v1542
        %1562 = vmatmul.f32.gmra.mxu0 %v1538
        %v1563 = vpop.f32.mrf.mxu0
        %v1564 = vadd.f32 0.0, %v1563
        %1565 = vmatmul.f32.gmra.mxu0 %v1540
        %v1566 = vpop.f32.mrf.mxu0
        %v1567 = vadd.f32 0.0, %v1566
        %1568 = vdwg.mxu0
        %1569 = vrot.lane.b32.xlu0 %v1522, 96
        %v1570 = vpop.permute.xlu0 %1569
        %1571 = vrot.lane.b32.xlu0 %v1524, 96
        %v1572 = vpop.permute.xlu0 %1571
        %v1573 = vsel %vm1537, %v1522, 0
        %v1575 = vsel %vm1537, %v1524, 0
        %v1577 = vsel %vm1537, %v1570, 0
        %v1579 = vsel %vm1537, %v1572, 0
        %1581 = vmatpush.xpose.msra.mxu0 0.0
        %1582 = vmatpush.xpose.msra.mxu0 0.0
        %1583 = vmatpush.xpose.msra.mxu0 0.0
        %1584 = vmatpush.xpose.msra.mxu0 0.0
        %1585 = vmatpush.xpose.msra.mxu0 0.0
        %1586 = vmatpush.xpose.msra.mxu0 0.0
        %1587 = vmatpush.xpose.msra.mxu0 0.0
        %1588 = vmatpush.xpose.msra.mxu0 0.0
        %1589 = vmatpush.xpose.msra.mxu0 0.0
        %1590 = vmatpush.xpose.msra.mxu0 0.0
        %1591 = vmatpush.xpose.msra.mxu0 0.0
        %1592 = vmatpush.xpose.msra.mxu0 0.0
        %1593 = vmatpush.xpose.msra.mxu0 0.0
        %1594 = vmatpush.xpose.msra.mxu0 0.0
        %1595 = vmatpush.xpose.msra.mxu0 %v1579
        %1596 = vmatpush.xpose.msra.mxu0 %v1577
        %1597 = vmatmul.f32.gmra.mxu0 %v1573
        %v1598 = vpop.f32.mrf.mxu0
        %v1599 = vadd.f32 0.0, %v1598
        %1600 = vmatmul.f32.gmra.mxu0 %v1575
        %v1601 = vpop.f32.mrf.mxu0
        %v1602 = vadd.f32 0.0, %v1601
        %1603 = vdwg.mxu0
        %1604 = vrot.lane.b32.xlu0 %v1526, 96
        %v1605 = vpop.permute.xlu0 %1604
        %1606 = vrot.lane.b32.xlu0 %v1528, 96
        %v1607 = vpop.permute.xlu0 %1606
        %v1608 = vsel %vm1537, %v1526, 0
        %v1610 = vsel %vm1537, %v1528, 0
        %v1612 = vsel %vm1537, %v1605, 0
        %v1614 = vsel %vm1537, %v1607, 0
        %1616 = vmatpush.xpose.msra.mxu0 0.0
        %1617 = vmatpush.xpose.msra.mxu0 0.0
        %1618 = vmatpush.xpose.msra.mxu0 0.0
        %1619 = vmatpush.xpose.msra.mxu0 0.0
        %1620 = vmatpush.xpose.msra.mxu0 0.0
        %1621 = vmatpush.xpose.msra.mxu0 0.0
        %1622 = vmatpush.xpose.msra.mxu0 0.0
        %1623 = vmatpush.xpose.msra.mxu0 0.0
        %1624 = vmatpush.xpose.msra.mxu0 0.0
        %1625 = vmatpush.xpose.msra.mxu0 0.0
        %1626 = vmatpush.xpose.msra.mxu0 0.0
        %1627 = vmatpush.xpose.msra.mxu0 0.0
        %1628 = vmatpush.xpose.msra.mxu0 0.0
        %1629 = vmatpush.xpose.msra.mxu0 0.0
        %1630 = vmatpush.xpose.msra.mxu0 %v1614
        %1631 = vmatpush.xpose.msra.mxu0 %v1612
        %1632 = vmatmul.f32.gmra.mxu0 %v1608
        %v1633 = vpop.f32.mrf.mxu0
        %v1634 = vadd.f32 0.0, %v1633
        %1635 = vmatmul.f32.gmra.mxu0 %v1610
        %v1636 = vpop.f32.mrf.mxu0
        %v1637 = vadd.f32 0.0, %v1636
        %1638 = vdwg.mxu0
        %1639 = vrot.lane.b32.xlu0 %v1530, 96
        %v1640 = vpop.permute.xlu0 %1639
        %1641 = vrot.lane.b32.xlu0 %v1532, 96
        %v1642 = vpop.permute.xlu0 %1641
        %v1643 = vsel %vm1537, %v1530, 0
        %v1645 = vsel %vm1537, %v1532, 0
        %v1647 = vsel %vm1537, %v1640, 0
        %v1649 = vsel %vm1537, %v1642, 0
        %1651 = vmatpush.xpose.msra.mxu0 0.0
        %1652 = vmatpush.xpose.msra.mxu0 0.0
        %1653 = vmatpush.xpose.msra.mxu0 0.0
        %1654 = vmatpush.xpose.msra.mxu0 0.0
        %1655 = vmatpush.xpose.msra.mxu0 0.0
        %1656 = vmatpush.xpose.msra.mxu0 0.0
        %1657 = vmatpush.xpose.msra.mxu0 0.0
        %1658 = vmatpush.xpose.msra.mxu0 0.0
        %1659 = vmatpush.xpose.msra.mxu0 0.0
        %1660 = vmatpush.xpose.msra.mxu0 0.0
        %1661 = vmatpush.xpose.msra.mxu0 0.0
        %1662 = vmatpush.xpose.msra.mxu0 0.0
        %1663 = vmatpush.xpose.msra.mxu0 0.0
        %1664 = vmatpush.xpose.msra.mxu0 0.0
        %1665 = vmatpush.xpose.msra.mxu0 %v1649
        %1666 = vmatpush.xpose.msra.mxu0 %v1647
        %1667 = vmatmul.f32.gmra.mxu0 %v1643
        %v1668 = vpop.f32.mrf.mxu0
        %v1669 = vadd.f32 0.0, %v1668
        %1670 = vmatmul.f32.gmra.mxu0 %v1645
        %v1671 = vpop.f32.mrf.mxu0
        %v1672 = vadd.f32 0.0, %v1671
        %1673 = vdwg.mxu0
        %vm1674 = vcmask 72704
        %v1675 = vsel %vm1674, %v1564, -inf
        %1676 = vmax.xlane.f32.xlu0 %v1675
        %v1677 = vpop.xlane.xlu0 %1676
        %vm1678 = vcmask 65536
        %v1679 = vsel %vm1678, %v1567, -inf
        %1680 = vmax.xlane.f32.xlu0 %v1679
        %v1681 = vpop.xlane.xlu0 %1680
        %v1682 = vsel %vm1674, %v1599, -inf
        %1683 = vmax.xlane.f32.xlu0 %v1682
        %v1684 = vpop.xlane.xlu0 %1683
        %v1685 = vsel %vm1678, %v1602, -inf
        %1686 = vmax.xlane.f32.xlu0 %v1685
        %v1687 = vpop.xlane.xlu0 %1686
        %v1688 = vsel %vm1674, %v1634, -inf
        %1689 = vmax.xlane.f32.xlu0 %v1688
        %v1690 = vpop.xlane.xlu0 %1689
        %v1691 = vsel %vm1678, %v1637, -inf
        %1692 = vmax.xlane.f32.xlu0 %v1691
        %v1693 = vpop.xlane.xlu0 %1692
        %v1694 = vsel %vm1674, %v1669, -inf
        %1695 = vmax.xlane.f32.xlu0 %v1694
        %v1696 = vpop.xlane.xlu0 %1695
        %v1697 = vsel %vm1678, %v1672, -inf
        %1698 = vmax.xlane.f32.xlu0 %v1697
        %v1699 = vpop.xlane.xlu0 %1698
        %v1700 = vsub.f32 %v1564, %v1677
        %v1701 = vsub.f32 %v1567, %v1681
        %v1702 = vsub.f32 %v1599, %v1684
        %v1703 = vsub.f32 %v1602, %v1687
        %v1704 = vsub.f32 %v1634, %v1690
        %v1705 = vsub.f32 %v1637, %v1693
        %v1706 = vsub.f32 %v1669, %v1696
        %v1707 = vsub.f32 %v1672, %v1699
        %v1708 = vmul.f32 %v1700, 1.442695
        %v1709 = vpow.pop %v1708
        %v1710 = vmul.f32 %v1701, 1.442695
        %v1711 = vpow.pop %v1710
        %v1712 = vmul.f32 %v1702, 1.442695
        %v1713 = vpow.pop %v1712
        %v1714 = vmul.f32 %v1703, 1.442695
        %v1715 = vpow.pop %v1714
        %v1716 = vmul.f32 %v1704, 1.442695
        %v1717 = vpow.pop %v1716
        %v1718 = vmul.f32 %v1705, 1.442695
        %v1719 = vpow.pop %v1718
        %v1720 = vmul.f32 %v1706, 1.442695
        %v1721 = vpow.pop %v1720
        %v1722 = vmul.f32 %v1707, 1.442695
        %v1723 = vpow.pop %v1722
        %v1724 = vsel %vm1674, %v1709, 0.0
        %1725 = vadd.xlane.f32.xlu0 %v1724
        %v1726 = vpop.xlane.xlu0 %1725
        %v1727 = vsel %vm1678, %v1711, 0.0
        %1728 = vadd.xlane.f32.xlu0 %v1727
        %v1729 = vpop.xlane.xlu0 %1728
        %v1730 = vsel %vm1674, %v1713, 0.0
        %1731 = vadd.xlane.f32.xlu0 %v1730
        %v1732 = vpop.xlane.xlu0 %1731
        %v1733 = vsel %vm1678, %v1715, 0.0
        %1734 = vadd.xlane.f32.xlu0 %v1733
        %v1735 = vpop.xlane.xlu0 %1734
        %v1736 = vsel %vm1674, %v1717, 0.0
        %1737 = vadd.xlane.f32.xlu0 %v1736
        %v1738 = vpop.xlane.xlu0 %1737
        %v1739 = vsel %vm1678, %v1719, 0.0
        %1740 = vadd.xlane.f32.xlu0 %v1739
        %v1741 = vpop.xlane.xlu0 %1740
        %v1742 = vsel %vm1674, %v1721, 0.0
        %1743 = vadd.xlane.f32.xlu0 %v1742
        %v1744 = vpop.xlane.xlu0 %1743
        %v1745 = vsel %vm1678, %v1723, 0.0
        %1746 = vadd.xlane.f32.xlu0 %v1745
        %v1747 = vpop.xlane.xlu0 %1746
        %v1748 = vrcp.pop %v1726
        %v1749 = vmul.f32 %v1726, %v1748
        %v1750 = vsub.f32 1.0, %v1749
        %v1751 = vmul.f32 %v1748, %v1750
        %v1752 = vadd.f32 %v1748, %v1751
        %vm1753 = vweird.f32 %v1726
        %vm1754 = vweird.f32 %v1748
        %vm1755 = vmor %vm1753, %vm1754
        %v1756 = vsel %vm1755, %v1748, %v1752
        %v1757 = vand.u32 2147483647, %v1726
        %vm1758 = vcmp.eq.f32.partialorder %v1757, 8.507059e+37
        %v1759 = vand.u32 %v1726, 2147483648
        %v1760 = vor.u32 1.1754944e-38, %v1759
        %v1761 = vsel %vm1758, %v1760, %v1756
        %v1762 = vmul.f32 %v1709, %v1761
        %v1763 = vrcp.pop %v1729
        %v1764 = vmul.f32 %v1729, %v1763
        %v1765 = vsub.f32 1.0, %v1764
        %v1766 = vmul.f32 %v1763, %v1765
        %v1767 = vadd.f32 %v1763, %v1766
        %vm1768 = vweird.f32 %v1729
        %vm1769 = vweird.f32 %v1763
        %vm1770 = vmor %vm1768, %vm1769
        %v1771 = vsel %vm1770, %v1763, %v1767
        %v1772 = vand.u32 2147483647, %v1729
        %vm1773 = vcmp.eq.f32.partialorder %v1772, 8.507059e+37
        %v1774 = vand.u32 %v1729, 2147483648
        %v1775 = vor.u32 1.1754944e-38, %v1774
        %v1776 = vsel %vm1773, %v1775, %v1771
        %v1777 = vmul.f32 %v1711, %v1776
        %v1778 = vrcp.pop %v1732
        %v1779 = vmul.f32 %v1732, %v1778
        %v1780 = vsub.f32 1.0, %v1779
        %v1781 = vmul.f32 %v1778, %v1780
        %v1782 = vadd.f32 %v1778, %v1781
        %vm1783 = vweird.f32 %v1732
        %vm1784 = vweird.f32 %v1778
        %vm1785 = vmor %vm1783, %vm1784
        %v1786 = vsel %vm1785, %v1778, %v1782
        %v1787 = vand.u32 2147483647, %v1732
        %vm1788 = vcmp.eq.f32.partialorder %v1787, 8.507059e+37
        %v1789 = vand.u32 %v1732, 2147483648
        %v1790 = vor.u32 1.1754944e-38, %v1789
        %v1791 = vsel %vm1788, %v1790, %v1786
        %v1792 = vmul.f32 %v1713, %v1791
        %v1793 = vrcp.pop %v1735
        %v1794 = vmul.f32 %v1735, %v1793
        %v1795 = vsub.f32 1.0, %v1794
        %v1796 = vmul.f32 %v1793, %v1795
        %v1797 = vadd.f32 %v1793, %v1796
        %vm1798 = vweird.f32 %v1735
        %vm1799 = vweird.f32 %v1793
        %vm1800 = vmor %vm1798, %vm1799
        %v1801 = vsel %vm1800, %v1793, %v1797
        %v1802 = vand.u32 2147483647, %v1735
        %vm1803 = vcmp.eq.f32.partialorder %v1802, 8.507059e+37
        %v1804 = vand.u32 %v1735, 2147483648
        %v1805 = vor.u32 1.1754944e-38, %v1804
        %v1806 = vsel %vm1803, %v1805, %v1801
        %v1807 = vmul.f32 %v1715, %v1806
        %v1808 = vrcp.pop %v1738
        %v1809 = vmul.f32 %v1738, %v1808
        %v1810 = vsub.f32 1.0, %v1809
        %v1811 = vmul.f32 %v1808, %v1810
        %v1812 = vadd.f32 %v1808, %v1811
        %vm1813 = vweird.f32 %v1738
        %vm1814 = vweird.f32 %v1808
        %vm1815 = vmor %vm1813, %vm1814
        %v1816 = vsel %vm1815, %v1808, %v1812
        %v1817 = vand.u32 2147483647, %v1738
        %vm1818 = vcmp.eq.f32.partialorder %v1817, 8.507059e+37
        %v1819 = vand.u32 %v1738, 2147483648
        %v1820 = vor.u32 1.1754944e-38, %v1819
        %v1821 = vsel %vm1818, %v1820, %v1816
        %v1822 = vmul.f32 %v1717, %v1821
        %v1823 = vrcp.pop %v1741
        %v1824 = vmul.f32 %v1741, %v1823
        %v1825 = vsub.f32 1.0, %v1824
        %v1826 = vmul.f32 %v1823, %v1825
        %v1827 = vadd.f32 %v1823, %v1826
        %vm1828 = vweird.f32 %v1741
        %vm1829 = vweird.f32 %v1823
        %vm1830 = vmor %vm1828, %vm1829
        %v1831 = vsel %vm1830, %v1823, %v1827
        %v1832 = vand.u32 2147483647, %v1741
        %vm1833 = vcmp.eq.f32.partialorder %v1832, 8.507059e+37
        %v1834 = vand.u32 %v1741, 2147483648
        %v1835 = vor.u32 1.1754944e-38, %v1834
        %v1836 = vsel %vm1833, %v1835, %v1831
        %v1837 = vmul.f32 %v1719, %v1836
        %v1838 = vrcp.pop %v1744
        %v1839 = vmul.f32 %v1744, %v1838
        %v1840 = vsub.f32 1.0, %v1839
        %v1841 = vmul.f32 %v1838, %v1840
        %v1842 = vadd.f32 %v1838, %v1841
        %vm1843 = vweird.f32 %v1744
        %vm1844 = vweird.f32 %v1838
        %vm1845 = vmor %vm1843, %vm1844
        %v1846 = vsel %vm1845, %v1838, %v1842
        %v1847 = vand.u32 2147483647, %v1744
        %vm1848 = vcmp.eq.f32.partialorder %v1847, 8.507059e+37
        %v1849 = vand.u32 %v1744, 2147483648
        %v1850 = vor.u32 1.1754944e-38, %v1849
        %v1851 = vsel %vm1848, %v1850, %v1846
        %v1852 = vmul.f32 %v1721, %v1851
        %v1853 = vrcp.pop %v1747
        %v1854 = vmul.f32 %v1747, %v1853
        %v1855 = vsub.f32 1.0, %v1854
        %v1856 = vmul.f32 %v1853, %v1855
        %v1857 = vadd.f32 %v1853, %v1856
        %vm1858 = vweird.f32 %v1747
        %vm1859 = vweird.f32 %v1853
        %vm1860 = vmor %vm1858, %vm1859
        %v1861 = vsel %vm1860, %v1853, %v1857
        %v1862 = vand.u32 2147483647, %v1747
        %vm1863 = vcmp.eq.f32.partialorder %v1862, 8.507059e+37
        %v1864 = vand.u32 %v1747, 2147483648
        %v1865 = vor.u32 1.1754944e-38, %v1864
        %v1866 = vsel %vm1863, %v1865, %v1861
        %v1867 = vmul.f32 %v1723, %v1866
        %1868 = vrot.lane.b32.xlu0 %v1514, 64
        %v1869 = vpop.permute.xlu0 %1868
        %1870 = vrot.lane.b32.xlu0 %v1517, 64
        %v1871 = vpop.permute.xlu0 %1870
        %v1874 = vsel %vm1674, %v1762, 0
        %v1877 = vsel %vm1674, %v1777, 0
        %vm1879 = vcmask 1040384
        %v1880 = vsel %vm1879, %v1871, 0
        %1882 = vmatpush.msra.mxu0 0.0
        %1883 = vmatpush.msra.mxu0 0.0
        %1884 = vmatpush.msra.mxu0 0.0
        %1885 = vmatpush.msra.mxu0 0.0
        %1886 = vmatpush.msra.mxu0 0.0
        %1887 = vmatpush.msra.mxu0 0.0
        %1888 = vmatpush.msra.mxu0 0.0
        %1889 = vmatpush.msra.mxu0 0.0
        %1890 = vmatpush.msra.mxu0 0.0
        %1891 = vmatpush.msra.mxu0 0.0
        %1892 = vmatpush.msra.mxu0 0.0
        %1893 = vmatpush.msra.mxu0 0.0
        %1894 = vmatpush.msra.mxu0 0.0
        %1895 = vmatpush.msra.mxu0 0.0
        %1896 = vmatpush.msra.mxu0 %v1880
        %1897 = vmatpush.msra.mxu0 %v1869
        %1898 = vmatmul.f32.gmra.mxu0 %v1874
        %v1899 = vpop.f32.mrf.mxu0
        %v1900 = vadd.f32 0.0, %v1899
        %1901 = vmatmul.f32.gmra.mxu0 %v1877
        %v1902 = vpop.f32.mrf.mxu0
        %v1903 = vadd.f32 0.0, %v1902
        %1904 = vdwg.mxu0
        %1905 = vrot.lane.b32.xlu0 %v1522, 64
        %v1906 = vpop.permute.xlu0 %1905
        %1907 = vrot.lane.b32.xlu0 %v1524, 64
        %v1908 = vpop.permute.xlu0 %1907
        %v1911 = vsel %vm1674, %v1792, 0
        %v1914 = vsel %vm1674, %v1807, 0
        %v1916 = vsel %vm1879, %v1908, 0
        %1918 = vmatpush.msra.mxu0 0.0
        %1919 = vmatpush.msra.mxu0 0.0
        %1920 = vmatpush.msra.mxu0 0.0
        %1921 = vmatpush.msra.mxu0 0.0
        %1922 = vmatpush.msra.mxu0 0.0
        %1923 = vmatpush.msra.mxu0 0.0
        %1924 = vmatpush.msra.mxu0 0.0
        %1925 = vmatpush.msra.mxu0 0.0
        %1926 = vmatpush.msra.mxu0 0.0
        %1927 = vmatpush.msra.mxu0 0.0
        %1928 = vmatpush.msra.mxu0 0.0
        %1929 = vmatpush.msra.mxu0 0.0
        %1930 = vmatpush.msra.mxu0 0.0
        %1931 = vmatpush.msra.mxu0 0.0
        %1932 = vmatpush.msra.mxu0 %v1916
        %1933 = vmatpush.msra.mxu0 %v1906
        %1934 = vmatmul.f32.gmra.mxu0 %v1911
        %v1935 = vpop.f32.mrf.mxu0
        %v1936 = vadd.f32 0.0, %v1935
        %1937 = vmatmul.f32.gmra.mxu0 %v1914
        %v1938 = vpop.f32.mrf.mxu0
        %v1939 = vadd.f32 0.0, %v1938
        %1940 = vdwg.mxu0
        %1941 = vrot.lane.b32.xlu0 %v1526, 64
        %v1942 = vpop.permute.xlu0 %1941
        %1943 = vrot.lane.b32.xlu0 %v1528, 64
        %v1944 = vpop.permute.xlu0 %1943
        %v1947 = vsel %vm1674, %v1822, 0
        %v1950 = vsel %vm1674, %v1837, 0
        %v1952 = vsel %vm1879, %v1944, 0
        %1954 = vmatpush.msra.mxu0 0.0
        %1955 = vmatpush.msra.mxu0 0.0
        %1956 = vmatpush.msra.mxu0 0.0
        %1957 = vmatpush.msra.mxu0 0.0
        %1958 = vmatpush.msra.mxu0 0.0
        %1959 = vmatpush.msra.mxu0 0.0
        %1960 = vmatpush.msra.mxu0 0.0
        %1961 = vmatpush.msra.mxu0 0.0
        %1962 = vmatpush.msra.mxu0 0.0
        %1963 = vmatpush.msra.mxu0 0.0
        %1964 = vmatpush.msra.mxu0 0.0
        %1965 = vmatpush.msra.mxu0 0.0
        %1966 = vmatpush.msra.mxu0 0.0
        %1967 = vmatpush.msra.mxu0 0.0
        %1968 = vmatpush.msra.mxu0 %v1952
        %1969 = vmatpush.msra.mxu0 %v1942
        %1970 = vmatmul.f32.gmra.mxu0 %v1947
        %v1971 = vpop.f32.mrf.mxu0
        %v1972 = vadd.f32 0.0, %v1971
        %1973 = vmatmul.f32.gmra.mxu0 %v1950
        %v1974 = vpop.f32.mrf.mxu0
        %v1975 = vadd.f32 0.0, %v1974
        %1976 = vdwg.mxu0
        %1977 = vrot.lane.b32.xlu0 %v1530, 64
        %v1978 = vpop.permute.xlu0 %1977
        %1979 = vrot.lane.b32.xlu0 %v1532, 64
        %v1980 = vpop.permute.xlu0 %1979
        %v1983 = vsel %vm1674, %v1852, 0
        %v1986 = vsel %vm1674, %v1867, 0
        %v1988 = vsel %vm1879, %v1980, 0
        %1990 = vmatpush.msra.mxu0 0.0
        %1991 = vmatpush.msra.mxu0 0.0
        %1992 = vmatpush.msra.mxu0 0.0
        %1993 = vmatpush.msra.mxu0 0.0
        %1994 = vmatpush.msra.mxu0 0.0
        %1995 = vmatpush.msra.mxu0 0.0
        %1996 = vmatpush.msra.mxu0 0.0
        %1997 = vmatpush.msra.mxu0 0.0
        %1998 = vmatpush.msra.mxu0 0.0
        %1999 = vmatpush.msra.mxu0 0.0
        %2000 = vmatpush.msra.mxu0 0.0
        %2001 = vmatpush.msra.mxu0 0.0
        %2002 = vmatpush.msra.mxu0 0.0
        %2003 = vmatpush.msra.mxu0 0.0
        %2004 = vmatpush.msra.mxu0 %v1988
        %2005 = vmatpush.msra.mxu0 %v1978
        %2006 = vmatmul.f32.gmra.mxu0 %v1983
        %v2007 = vpop.f32.mrf.mxu0
        %v2008 = vadd.f32 0.0, %v2007
        %2009 = vmatmul.f32.gmra.mxu0 %v1986
        %v2010 = vpop.f32.mrf.mxu0
        %v2011 = vadd.f32 0.0, %v2010
        %2012 = vdwg.mxu0
        %2015 = vrot.lane.b32.xlu0 %v1936, 8
        %v2016 = vpop.permute.xlu0 %2015
        %2017 = vrot.lane.b32.xlu0 %v1939, 8
        %v2018 = vpop.permute.xlu0 %2017
        %2023 = vrot.lane.b32.xlu0 %v1972, 16
        %v2024 = vpop.permute.xlu0 %2023
        %2025 = vrot.lane.b32.xlu0 %v1975, 16
        %v2026 = vpop.permute.xlu0 %2025
        %2031 = vrot.lane.b32.xlu0 %v2008, 24
        %v2032 = vpop.permute.xlu0 %2031
        %2033 = vrot.lane.b32.xlu0 %v2011, 24
        %v2034 = vpop.permute.xlu0 %2033
        %v2037 = vsel %vm1537, %v1900, %v2016
        %v2038 = vsel %vm1537, %v1903, %v2018
        %vm2039 = vcmask 130048
        %v2040 = vsel %vm2039, %v2037, %v2024
        %v2041 = vsel %vm2039, %v2038, %v2026
        %vm2042 = vcmask 195584
        %v2043 = vsel %vm2042, %v2040, %v2032
        %v2044 = vsel %vm2042, %v2041, %v2034
        %v2045 = vld [vmem:[%s1446] sm:$0xff]
        %v2046 = vld [vmem:[%s1446 + $0x8] sm:$0xff]
        %v2047 = vld [vmem:[%s1446 + $0x10] sm:$0xff]
        %v2048 = vld [vmem:[%s1446 + $0x18] sm:$0xff]
        %v2049 = vld [vmem:[%s1449] sm:$0x1]
        %v2051 = vperm.slane %v2049, 0
        %v2054 = vsel %vm1489, %v2043, 0
        %v2057 = vsel %vm1489, %v2044, 0
        %2059 = vmatpush.msra.mxu0 0.0
        %2060 = vmatpush.msra.mxu0 0.0
        %2061 = vmatpush.msra.mxu0 0.0
        %2062 = vmatpush.msra.mxu0 0.0
        %2063 = vmatpush.msra.mxu0 0.0
        %2064 = vmatpush.msra.mxu0 0.0
        %2065 = vmatpush.msra.mxu0 0.0
        %2066 = vmatpush.msra.mxu0 0.0
        %2067 = vmatpush.msra.mxu0 0.0
        %2068 = vmatpush.msra.mxu0 0.0
        %2069 = vmatpush.msra.mxu0 0.0
        %2070 = vmatpush.msra.mxu0 0.0
        %2071 = vmatpush.msra.mxu0 %v2048
        %2072 = vmatpush.msra.mxu0 %v2047
        %2073 = vmatpush.msra.mxu0 %v2046
        %2074 = vmatpush.msra.mxu0 %v2045
        %2075 = vmatmul.f32.gmra.mxu0 %v2054
        %v2076 = vpop.f32.mrf.mxu0
        %v2077 = vadd.f32 %v2051, %v2076
        %2078 = vmatmul.f32.gmra.mxu0 %v2057
        %v2079 = vpop.f32.mrf.mxu0
        %v2080 = vadd.f32 %v2051, %v2079
        %2081 = vdwg.mxu0
        %v2082 = vadd.f32 %v1478, %v2077
        %v2083 = vadd.f32 %v1479, %v2080
        %v2084 = vsel %vm1489, %v2082, 0.0
        %2085 = vadd.xlane.f32.xlu0 %v2084
        %v2086 = vpop.xlane.xlu0 %2085
        %vm2087 = vcmask 253952
        %v2088 = vsel %vm2087, %v2083, 0.0
        %2089 = vadd.xlane.f32.xlu0 %v2088
        %v2090 = vpop.xlane.xlu0 %2089
        %v2091 = vrcp.pop 32.0
        %v2092 = vmul.f32 32.0, %v2091
        %v2093 = vsub.f32 1.0, %v2092
        %v2094 = vmul.f32 %v2091, %v2093
        %v2095 = vadd.f32 %v2091, %v2094
        %vm2096 = vweird.f32 %v2091
        %v2097 = vsel %vm2096, %v2091, %v2095
        %v2098 = vmul.f32 %v2086, %v2097
        %v2099 = vmul.f32 %v2090, %v2097
        %v2100 = vsub.f32 %v2082, %v2098
        %v2101 = vsub.f32 %v2083, %v2099
        %v2102 = vmul.f32 %v2100, %v2100
        %v2103 = vmul.f32 %v2101, %v2101
        %v2104 = vsel %vm1489, %v2102, 0.0
        %2105 = vadd.xlane.f32.xlu0 %v2104
        %v2106 = vpop.xlane.xlu0 %2105
        %v2107 = vsel %vm2087, %v2103, 0.0
        %2108 = vadd.xlane.f32.xlu0 %v2107
        %v2109 = vpop.xlane.xlu0 %2108
        %v2110 = vmul.f32 %v2106, %v2097
        %v2111 = vmul.f32 %v2109, %v2097
        %v2112 = vadd.f32 %v2110, 1e-05
        %v2113 = vadd.f32 %v2111, 1e-05
        %v2114 = vrsqrt.pop %v2112
        %v2115 = vmul.f32 %v2114, %v2112
        %v2116 = vmul.f32 %v2115, %v2114
        %v2117 = vmul.f32 0.5, %v2116
        %v2118 = vsub.f32 1.5, %v2117
        %v2119 = vmul.f32 %v2114, %v2118
        %vm2120 = vweird.f32 %v2112
        %vm2121 = vweird.f32 %v2114
        %vm2122 = vmor %vm2120, %vm2121
        %v2123 = vsel %vm2122, %v2114, %v2119
        %v2124 = vrsqrt.pop %v2113
        %v2125 = vmul.f32 %v2124, %v2113
        %v2126 = vmul.f32 %v2125, %v2124
        %v2127 = vmul.f32 0.5, %v2126
        %v2128 = vsub.f32 1.5, %v2127
        %v2129 = vmul.f32 %v2124, %v2128
        %vm2130 = vweird.f32 %v2113
        %vm2131 = vweird.f32 %v2124
        %vm2132 = vmor %vm2130, %vm2131
        %v2133 = vsel %vm2132, %v2124, %v2129
        %v2134 = vmul.f32 %v2100, %v2123
        %v2135 = vmul.f32 %v2101, %v2133
        %v2136 = vld [vmem:[%s1191] sm:$0x1]
        %v2138 = vperm.slane %v2136, 0
        %v2140 = vmul.f32 %v2134, %v2138
        %v2141 = vmul.f32 %v2135, %v2138
        %v2142 = vld [vmem:[%s1200] sm:$0x1]
        %v2144 = vperm.slane %v2142, 0
        %v2146 = vadd.f32 %v2140, %v2144
        %v2147 = vadd.f32 %v2141, %v2144
        %v2148 = vld [vmem:[%s1454] sm:$0xff]
        %v2149 = vld [vmem:[%s1454 + $0x8] sm:$0xff]
        %v2150 = vld [vmem:[%s1454 + $0x10] sm:$0xff]
        %v2151 = vld [vmem:[%s1454 + $0x18] sm:$0xff]
        %v2152 = vld [vmem:[%s1144] sm:$0x1]
        %v2154 = vsel %vm1489, %v2147, 0
        %2156 = vmatpush.msra.mxu0 0.0
        %2157 = vmatpush.msra.mxu0 0.0
        %2158 = vmatpush.msra.mxu0 0.0
        %2159 = vmatpush.msra.mxu0 0.0
        %2160 = vmatpush.msra.mxu0 0.0
        %2161 = vmatpush.msra.mxu0 0.0
        %2162 = vmatpush.msra.mxu0 0.0
        %2163 = vmatpush.msra.mxu0 0.0
        %2164 = vmatpush.msra.mxu0 0.0
        %2165 = vmatpush.msra.mxu0 0.0
        %2166 = vmatpush.msra.mxu0 0.0
        %2167 = vmatpush.msra.mxu0 0.0
        %2168 = vmatpush.msra.mxu0 %v2151
        %2169 = vmatpush.msra.mxu0 %v2150
        %2170 = vmatpush.msra.mxu0 %v2149
        %2171 = vmatpush.msra.mxu0 %v2148
        %2172 = vmatmul.f32.gmra.mxu0 %v2154
        %v2173 = vpop.f32.mrf.mxu0
        %v2174 = vadd.f32 %v2152, %v2173
        %2175 = vdwg.mxu0
        %v2176 = vld [vmem:[%s1154] sm:$0xff]
        %v2177 = vld [vmem:[%s1154 + $0x8] sm:$0xff]
        %v2178 = vld [vmem:[%s1154 + $0x10] sm:$0xff]
        %v2179 = vld [vmem:[%s1154 + $0x18] sm:$0xff]
        %v2180 = vld [vmem:[%s1163] sm:$0x1]
        %v2182 = vperm.slane %v2180, 0
        %v2185 = vsel %vm1489, %v1480, 0
        %2187 = vmatpush.msra.mxu0 0.0
        %2188 = vmatpush.msra.mxu0 0.0
        %2189 = vmatpush.msra.mxu0 0.0
        %2190 = vmatpush.msra.mxu0 0.0
        %2191 = vmatpush.msra.mxu0 0.0
        %2192 = vmatpush.msra.mxu0 0.0
        %2193 = vmatpush.msra.mxu0 0.0
        %2194 = vmatpush.msra.mxu0 0.0
        %2195 = vmatpush.msra.mxu0 0.0
        %2196 = vmatpush.msra.mxu0 0.0
        %2197 = vmatpush.msra.mxu0 0.0
        %2198 = vmatpush.msra.mxu0 0.0
        %2199 = vmatpush.msra.mxu0 %v2179
        %2200 = vmatpush.msra.mxu0 %v2178
        %2201 = vmatpush.msra.mxu0 %v2177
        %2202 = vmatpush.msra.mxu0 %v2176
        %2203 = vmatmul.f32.gmra.mxu0 %v2185
        %v2204 = vpop.f32.mrf.mxu0
        %v2205 = vadd.f32 %v2182, %v2204
        %2206 = vdwg.mxu0
        %2208 = vrot.lane.b32.xlu0 %v2174, 120
        %v2209 = vpop.permute.xlu0 %2208
        %2210 = vrot.lane.b32.xlu0 %v2174, 112
        %v2211 = vpop.permute.xlu0 %2210
        %2212 = vrot.lane.b32.xlu0 %v2174, 104
        %v2213 = vpop.permute.xlu0 %2212
        %2215 = vrot.lane.b32.xlu0 %v2205, 120
        %v2216 = vpop.permute.xlu0 %2215
        %2217 = vrot.lane.b32.xlu0 %v2205, 112
        %v2218 = vpop.permute.xlu0 %2217
        %2219 = vrot.lane.b32.xlu0 %v2205, 104
        %v2220 = vpop.permute.xlu0 %2219
        %v2221 = vsel %vm1537, %v2174, 0
        %v2223 = vsel %vm1537, %v2205, 0
        %2225 = vmatpush.xpose.msra.mxu0 0.0
        %2226 = vmatpush.xpose.msra.mxu0 0.0
        %2227 = vmatpush.xpose.msra.mxu0 0.0
        %2228 = vmatpush.xpose.msra.mxu0 0.0
        %2229 = vmatpush.xpose.msra.mxu0 0.0
        %2230 = vmatpush.xpose.msra.mxu0 0.0
        %2231 = vmatpush.xpose.msra.mxu0 0.0
        %2232 = vmatpush.xpose.msra.mxu0 0.0
        %2233 = vmatpush.xpose.msra.mxu0 0.0
        %2234 = vmatpush.xpose.msra.mxu0 0.0
        %2235 = vmatpush.xpose.msra.mxu0 0.0
        %2236 = vmatpush.xpose.msra.mxu0 0.0
        %2237 = vmatpush.xpose.msra.mxu0 0.0
        %2238 = vmatpush.xpose.msra.mxu0 0.0
        %2239 = vmatpush.xpose.msra.mxu0 0.0
        %2240 = vmatpush.xpose.msra.mxu0 %v2223
        %2241 = vmatmul.f32.gmra.mxu0 %v2221
        %v2242 = vpop.f32.mrf.mxu0
        %v2243 = vadd.f32 0.0, %v2242
        %2244 = vdwg.mxu0
        %v2245 = vsel %vm1537, %v2209, 0
        %v2247 = vsel %vm1537, %v2216, 0
        %2249 = vmatpush.xpose.msra.mxu0 0.0
        %2250 = vmatpush.xpose.msra.mxu0 0.0
        %2251 = vmatpush.xpose.msra.mxu0 0.0
        %2252 = vmatpush.xpose.msra.mxu0 0.0
        %2253 = vmatpush.xpose.msra.mxu0 0.0
        %2254 = vmatpush.xpose.msra.mxu0 0.0
        %2255 = vmatpush.xpose.msra.mxu0 0.0
        %2256 = vmatpush.xpose.msra.mxu0 0.0
        %2257 = vmatpush.xpose.msra.mxu0 0.0
        %2258 = vmatpush.xpose.msra.mxu0 0.0
        %2259 = vmatpush.xpose.msra.mxu0 0.0
        %2260 = vmatpush.xpose.msra.mxu0 0.0
        %2261 = vmatpush.xpose.msra.mxu0 0.0
        %2262 = vmatpush.xpose.msra.mxu0 0.0
        %2263 = vmatpush.xpose.msra.mxu0 0.0
        %2264 = vmatpush.xpose.msra.mxu0 %v2247
        %2265 = vmatmul.f32.gmra.mxu0 %v2245
        %v2266 = vpop.f32.mrf.mxu0
        %v2267 = vadd.f32 0.0, %v2266
        %2268 = vdwg.mxu0
        %v2269 = vsel %vm1537, %v2211, 0
        %v2271 = vsel %vm1537, %v2218, 0
        %2273 = vmatpush.xpose.msra.mxu0 0.0
        %2274 = vmatpush.xpose.msra.mxu0 0.0
        %2275 = vmatpush.xpose.msra.mxu0 0.0
        %2276 = vmatpush.xpose.msra.mxu0 0.0
        %2277 = vmatpush.xpose.msra.mxu0 0.0
        %2278 = vmatpush.xpose.msra.mxu0 0.0
        %2279 = vmatpush.xpose.msra.mxu0 0.0
        %2280 = vmatpush.xpose.msra.mxu0 0.0
        %2281 = vmatpush.xpose.msra.mxu0 0.0
        %2282 = vmatpush.xpose.msra.mxu0 0.0
        %2283 = vmatpush.xpose.msra.mxu0 0.0
        %2284 = vmatpush.xpose.msra.mxu0 0.0
        %2285 = vmatpush.xpose.msra.mxu0 0.0
        %2286 = vmatpush.xpose.msra.mxu0 0.0
        %2287 = vmatpush.xpose.msra.mxu0 0.0
        %2288 = vmatpush.xpose.msra.mxu0 %v2271
        %2289 = vmatmul.f32.gmra.mxu0 %v2269
        %v2290 = vpop.f32.mrf.mxu0
        %v2291 = vadd.f32 0.0, %v2290
        %2292 = vdwg.mxu0
        %v2293 = vsel %vm1537, %v2213, 0
        %v2295 = vsel %vm1537, %v2220, 0
        %2297 = vmatpush.xpose.msra.mxu0 0.0
        %2298 = vmatpush.xpose.msra.mxu0 0.0
        %2299 = vmatpush.xpose.msra.mxu0 0.0
        %2300 = vmatpush.xpose.msra.mxu0 0.0
        %2301 = vmatpush.xpose.msra.mxu0 0.0
        %2302 = vmatpush.xpose.msra.mxu0 0.0
        %2303 = vmatpush.xpose.msra.mxu0 0.0
        %2304 = vmatpush.xpose.msra.mxu0 0.0
        %2305 = vmatpush.xpose.msra.mxu0 0.0
        %2306 = vmatpush.xpose.msra.mxu0 0.0
        %2307 = vmatpush.xpose.msra.mxu0 0.0
        %2308 = vmatpush.xpose.msra.mxu0 0.0
        %2309 = vmatpush.xpose.msra.mxu0 0.0
        %2310 = vmatpush.xpose.msra.mxu0 0.0
        %2311 = vmatpush.xpose.msra.mxu0 0.0
        %2312 = vmatpush.xpose.msra.mxu0 %v2295
        %2313 = vmatmul.f32.gmra.mxu0 %v2293
        %v2314 = vpop.f32.mrf.mxu0
        %v2315 = vadd.f32 0.0, %v2314
        %2316 = vdwg.mxu0
        %vm2317 = vcmask 57344
        %v2318 = vsel %vm2317, %v2243, -inf
        %2319 = vmax.xlane.f32.xlu0 %v2318
        %v2320 = vpop.xlane.xlu0 %2319
        %v2321 = vsel %vm2317, %v2267, -inf
        %2322 = vmax.xlane.f32.xlu0 %v2321
        %v2323 = vpop.xlane.xlu0 %2322
        %v2324 = vsel %vm2317, %v2291, -inf
        %2325 = vmax.xlane.f32.xlu0 %v2324
        %v2326 = vpop.xlane.xlu0 %2325
        %v2327 = vsel %vm2317, %v2315, -inf
        %2328 = vmax.xlane.f32.xlu0 %v2327
        %v2329 = vpop.xlane.xlu0 %2328
        %v2330 = vsub.f32 %v2243, %v2320
        %v2331 = vsub.f32 %v2267, %v2323
        %v2332 = vsub.f32 %v2291, %v2326
        %v2333 = vsub.f32 %v2315, %v2329
        %v2334 = vmul.f32 %v2330, 1.442695
        %v2335 = vpow.pop %v2334
        %v2336 = vmul.f32 %v2331, 1.442695
        %v2337 = vpow.pop %v2336
        %v2338 = vmul.f32 %v2332, 1.442695
        %v2339 = vpow.pop %v2338
        %v2340 = vmul.f32 %v2333, 1.442695
        %v2341 = vpow.pop %v2340
        %v2342 = vsel %vm2317, %v2335, 0.0
        %2343 = vadd.xlane.f32.xlu0 %v2342
        %v2344 = vpop.xlane.xlu0 %2343
        %v2345 = vsel %vm2317, %v2337, 0.0
        %2346 = vadd.xlane.f32.xlu0 %v2345
        %v2347 = vpop.xlane.xlu0 %2346
        %v2348 = vsel %vm2317, %v2339, 0.0
        %2349 = vadd.xlane.f32.xlu0 %v2348
        %v2350 = vpop.xlane.xlu0 %2349
        %v2351 = vsel %vm2317, %v2341, 0.0
        %2352 = vadd.xlane.f32.xlu0 %v2351
        %v2353 = vpop.xlane.xlu0 %2352
        %v2354 = vrcp.pop %v2344
        %v2355 = vmul.f32 %v2344, %v2354
        %v2356 = vsub.f32 1.0, %v2355
        %v2357 = vmul.f32 %v2354, %v2356
        %v2358 = vadd.f32 %v2354, %v2357
        %vm2359 = vweird.f32 %v2344
        %vm2360 = vweird.f32 %v2354
        %vm2361 = vmor %vm2359, %vm2360
        %v2362 = vsel %vm2361, %v2354, %v2358
        %v2363 = vand.u32 2147483647, %v2344
        %vm2364 = vcmp.eq.f32.partialorder %v2363, 8.507059e+37
        %v2365 = vand.u32 %v2344, 2147483648
        %v2366 = vor.u32 1.1754944e-38, %v2365
        %v2367 = vsel %vm2364, %v2366, %v2362
        %v2368 = vmul.f32 %v2335, %v2367
        %v2369 = vrcp.pop %v2347
        %v2370 = vmul.f32 %v2347, %v2369
        %v2371 = vsub.f32 1.0, %v2370
        %v2372 = vmul.f32 %v2369, %v2371
        %v2373 = vadd.f32 %v2369, %v2372
        %vm2374 = vweird.f32 %v2347
        %vm2375 = vweird.f32 %v2369
        %vm2376 = vmor %vm2374, %vm2375
        %v2377 = vsel %vm2376, %v2369, %v2373
        %v2378 = vand.u32 2147483647, %v2347
        %vm2379 = vcmp.eq.f32.partialorder %v2378, 8.507059e+37
        %v2380 = vand.u32 %v2347, 2147483648
        %v2381 = vor.u32 1.1754944e-38, %v2380
        %v2382 = vsel %vm2379, %v2381, %v2377
        %v2383 = vmul.f32 %v2337, %v2382
        %v2384 = vrcp.pop %v2350
        %v2385 = vmul.f32 %v2350, %v2384
        %v2386 = vsub.f32 1.0, %v2385
        %v2387 = vmul.f32 %v2384, %v2386
        %v2388 = vadd.f32 %v2384, %v2387
        %vm2389 = vweird.f32 %v2350
        %vm2390 = vweird.f32 %v2384
        %vm2391 = vmor %vm2389, %vm2390
        %v2392 = vsel %vm2391, %v2384, %v2388
        %v2393 = vand.u32 2147483647, %v2350
        %vm2394 = vcmp.eq.f32.partialorder %v2393, 8.507059e+37
        %v2395 = vand.u32 %v2350, 2147483648
        %v2396 = vor.u32 1.1754944e-38, %v2395
        %v2397 = vsel %vm2394, %v2396, %v2392
        %v2398 = vmul.f32 %v2339, %v2397
        %v2399 = vrcp.pop %v2353
        %v2400 = vmul.f32 %v2353, %v2399
        %v2401 = vsub.f32 1.0, %v2400
        %v2402 = vmul.f32 %v2399, %v2401
        %v2403 = vadd.f32 %v2399, %v2402
        %vm2404 = vweird.f32 %v2353
        %vm2405 = vweird.f32 %v2399
        %vm2406 = vmor %vm2404, %vm2405
        %v2407 = vsel %vm2406, %v2399, %v2403
        %v2408 = vand.u32 2147483647, %v2353
        %vm2409 = vcmp.eq.f32.partialorder %v2408, 8.507059e+37
        %v2410 = vand.u32 %v2353, 2147483648
        %v2411 = vor.u32 1.1754944e-38, %v2410
        %v2412 = vsel %vm2409, %v2411, %v2407
        %v2413 = vmul.f32 %v2341, %v2412
        %2414 = vrot.lane.b32.xlu0 %v2205, 96
        %v2415 = vpop.permute.xlu0 %2414
        %v2418 = vsel %vm1537, %v2368, 0
        %2420 = vmatpush.msra.mxu0 0.0
        %2421 = vmatpush.msra.mxu0 0.0
        %2422 = vmatpush.msra.mxu0 0.0
        %2423 = vmatpush.msra.mxu0 0.0
        %2424 = vmatpush.msra.mxu0 0.0
        %2425 = vmatpush.msra.mxu0 0.0
        %2426 = vmatpush.msra.mxu0 0.0
        %2427 = vmatpush.msra.mxu0 0.0
        %2428 = vmatpush.msra.mxu0 0.0
        %2429 = vmatpush.msra.mxu0 0.0
        %2430 = vmatpush.msra.mxu0 0.0
        %2431 = vmatpush.msra.mxu0 0.0
        %2432 = vmatpush.msra.mxu0 0.0
        %2433 = vmatpush.msra.mxu0 0.0
        %2434 = vmatpush.msra.mxu0 0.0
        %2435 = vmatpush.msra.mxu0 %v2415
        %2436 = vmatmul.f32.gmra.mxu0 %v2418
        %v2437 = vpop.f32.mrf.mxu0
        %v2438 = vadd.f32 0.0, %v2437
        %2439 = vdwg.mxu0
        %2440 = vrot.lane.b32.xlu0 %v2216, 96
        %v2441 = vpop.permute.xlu0 %2440
        %v2444 = vsel %vm1537, %v2383, 0
        %2446 = vmatpush.msra.mxu0 0.0
        %2447 = vmatpush.msra.mxu0 0.0
        %2448 = vmatpush.msra.mxu0 0.0
        %2449 = vmatpush.msra.mxu0 0.0
        %2450 = vmatpush.msra.mxu0 0.0
        %2451 = vmatpush.msra.mxu0 0.0
        %2452 = vmatpush.msra.mxu0 0.0
        %2453 = vmatpush.msra.mxu0 0.0
        %2454 = vmatpush.msra.mxu0 0.0
        %2455 = vmatpush.msra.mxu0 0.0
        %2456 = vmatpush.msra.mxu0 0.0
        %2457 = vmatpush.msra.mxu0 0.0
        %2458 = vmatpush.msra.mxu0 0.0
        %2459 = vmatpush.msra.mxu0 0.0
        %2460 = vmatpush.msra.mxu0 0.0
        %2461 = vmatpush.msra.mxu0 %v2441
        %2462 = vmatmul.f32.gmra.mxu0 %v2444
        %v2463 = vpop.f32.mrf.mxu0
        %v2464 = vadd.f32 0.0, %v2463
        %2465 = vdwg.mxu0
        %2466 = vrot.lane.b32.xlu0 %v2218, 96
        %v2467 = vpop.permute.xlu0 %2466
        %v2470 = vsel %vm1537, %v2398, 0
        %2472 = vmatpush.msra.mxu0 0.0
        %2473 = vmatpush.msra.mxu0 0.0
        %2474 = vmatpush.msra.mxu0 0.0
        %2475 = vmatpush.msra.mxu0 0.0
        %2476 = vmatpush.msra.mxu0 0.0
        %2477 = vmatpush.msra.mxu0 0.0
        %2478 = vmatpush.msra.mxu0 0.0
        %2479 = vmatpush.msra.mxu0 0.0
        %2480 = vmatpush.msra.mxu0 0.0
        %2481 = vmatpush.msra.mxu0 0.0
        %2482 = vmatpush.msra.mxu0 0.0
        %2483 = vmatpush.msra.mxu0 0.0
        %2484 = vmatpush.msra.mxu0 0.0
        %2485 = vmatpush.msra.mxu0 0.0
        %2486 = vmatpush.msra.mxu0 0.0
        %2487 = vmatpush.msra.mxu0 %v2467
        %2488 = vmatmul.f32.gmra.mxu0 %v2470
        %v2489 = vpop.f32.mrf.mxu0
        %v2490 = vadd.f32 0.0, %v2489
        %2491 = vdwg.mxu0
        %2492 = vrot.lane.b32.xlu0 %v2220, 96
        %v2493 = vpop.permute.xlu0 %2492
        %v2496 = vsel %vm1537, %v2413, 0
        %2498 = vmatpush.msra.mxu0 0.0
        %2499 = vmatpush.msra.mxu0 0.0
        %2500 = vmatpush.msra.mxu0 0.0
        %2501 = vmatpush.msra.mxu0 0.0
        %2502 = vmatpush.msra.mxu0 0.0
        %2503 = vmatpush.msra.mxu0 0.0
        %2504 = vmatpush.msra.mxu0 0.0
        %2505 = vmatpush.msra.mxu0 0.0
        %2506 = vmatpush.msra.mxu0 0.0
        %2507 = vmatpush.msra.mxu0 0.0
        %2508 = vmatpush.msra.mxu0 0.0
        %2509 = vmatpush.msra.mxu0 0.0
        %2510 = vmatpush.msra.mxu0 0.0
        %2511 = vmatpush.msra.mxu0 0.0
        %2512 = vmatpush.msra.mxu0 0.0
        %2513 = vmatpush.msra.mxu0 %v2493
        %2514 = vmatmul.f32.gmra.mxu0 %v2496
        %v2515 = vpop.f32.mrf.mxu0
        %v2516 = vadd.f32 0.0, %v2515
        %2517 = vdwg.mxu0
        %2519 = vrot.lane.b32.xlu0 %v2464, 8
        %v2520 = vpop.permute.xlu0 %2519
        %2523 = vrot.lane.b32.xlu0 %v2490, 16
        %v2524 = vpop.permute.xlu0 %2523
        %2527 = vrot.lane.b32.xlu0 %v2516, 24
        %v2528 = vpop.permute.xlu0 %2527
        %v2530 = vsel %vm1537, %v2438, %v2520
        %v2531 = vsel %vm2039, %v2530, %v2524
        %v2532 = vsel %vm2042, %v2531, %v2528
        %v2533 = vld [vmem:[%s1173] sm:$0xff]
        %v2534 = vld [vmem:[%s1173 + $0x8] sm:$0xff]
        %v2535 = vld [vmem:[%s1173 + $0x10] sm:$0xff]
        %v2536 = vld [vmem:[%s1173 + $0x18] sm:$0xff]
        %v2537 = vld [vmem:[%s1182] sm:$0x1]
        %v2539 = vsel %vm1489, %v2532, 0
        %2541 = vmatpush.msra.mxu0 0.0
        %2542 = vmatpush.msra.mxu0 0.0
        %2543 = vmatpush.msra.mxu0 0.0
        %2544 = vmatpush.msra.mxu0 0.0
        %2545 = vmatpush.msra.mxu0 0.0
        %2546 = vmatpush.msra.mxu0 0.0
        %2547 = vmatpush.msra.mxu0 0.0
        %2548 = vmatpush.msra.mxu0 0.0
        %2549 = vmatpush.msra.mxu0 0.0
        %2550 = vmatpush.msra.mxu0 0.0
        %2551 = vmatpush.msra.mxu0 0.0
        %2552 = vmatpush.msra.mxu0 0.0
        %2553 = vmatpush.msra.mxu0 %v2536
        %2554 = vmatpush.msra.mxu0 %v2535
        %2555 = vmatpush.msra.mxu0 %v2534
        %2556 = vmatpush.msra.mxu0 %v2533
        %2557 = vmatmul.f32.gmra.mxu0 %v2539
        %v2558 = vpop.f32.mrf.mxu0
        %v2559 = vadd.f32 %v2537, %v2558
        %2560 = vdwg.mxu0
        %v2561 = vadd.f32 %v2147, %v2559
        %v2562 = vsel %vm2087, %v2561, 0.0
        %2563 = vadd.xlane.f32.xlu0 %v2562
        %v2564 = vpop.xlane.xlu0 %2563
        %v2565 = vmul.f32 %v2564, %v2097
        %v2566 = vsub.f32 %v2561, %v2565
        %v2567 = vmul.f32 %v2566, %v2566
        %v2568 = vsel %vm2087, %v2567, 0.0
        %2569 = vadd.xlane.f32.xlu0 %v2568
        %v2570 = vpop.xlane.xlu0 %2569
        %v2571 = vmul.f32 %v2570, %v2097
        %v2572 = vadd.f32 %v2571, 1e-05
        %v2573 = vrsqrt.pop %v2572
        %v2574 = vmul.f32 %v2573, %v2572
        %v2575 = vmul.f32 %v2574, %v2573
        %v2576 = vmul.f32 0.5, %v2575
        %v2577 = vsub.f32 1.5, %v2576
        %v2578 = vmul.f32 %v2573, %v2577
        %vm2579 = vweird.f32 %v2572
        %vm2580 = vweird.f32 %v2573
        %vm2581 = vmor %vm2579, %vm2580
        %v2582 = vsel %vm2581, %v2573, %v2578
        %v2583 = vmul.f32 %v2566, %v2582
        %v2584 = vld [vmem:[%s1209] sm:$0x1]
        %v2585 = vmul.f32 %v2583, %v2584
        %v2586 = vld [vmem:[%s1218] sm:$0x1]
        %v2587 = vadd.f32 %v2585, %v2586
        %2588 = vst.msk [vmem:[#allocation2] sm:$0xff] %vm1489, %v2146
        %2589 = vst.msk [vmem:[#allocation2 + $0x8] sm:$0x1] %vm2087, %v2147
        %2590 = vst.msk [vmem:[#allocation2 + $0x8] sm:$0x1] %vm2087, %v2587
        %v2591 = vld [vmem:[#allocation2] sm:$0xff]
        %v2592 = vld [vmem:[#allocation2 + $0x8] sm:$0x1]
        %v2593 = vld [vmem:[%s1246] sm:$0xff]
        %v2594 = vld [vmem:[%s1246 + $0x8] sm:$0xff]
        %v2595 = vld [vmem:[%s1246 + $0x10] sm:$0xff]
        %v2596 = vld [vmem:[%s1246 + $0x18] sm:$0xff]
        %v2597 = vld [vmem:[%s1255] sm:$0x1]
        %v2599 = vperm.slane %v2597, 0
        %v2602 = vsel %vm1489, %v2591, 0
        %v2605 = vsel %vm1489, %v2592, 0
        %2607 = vmatpush.msra.mxu0 0.0
        %2608 = vmatpush.msra.mxu0 0.0
        %2609 = vmatpush.msra.mxu0 0.0
        %2610 = vmatpush.msra.mxu0 0.0
        %2611 = vmatpush.msra.mxu0 0.0
        %2612 = vmatpush.msra.mxu0 0.0
        %2613 = vmatpush.msra.mxu0 0.0
        %2614 = vmatpush.msra.mxu0 0.0
        %2615 = vmatpush.msra.mxu0 0.0
        %2616 = vmatpush.msra.mxu0 0.0
        %2617 = vmatpush.msra.mxu0 0.0
        %2618 = vmatpush.msra.mxu0 0.0
        %2619 = vmatpush.msra.mxu0 %v2596
        %2620 = vmatpush.msra.mxu0 %v2595
        %2621 = vmatpush.msra.mxu0 %v2594
        %2622 = vmatpush.msra.mxu0 %v2593
        %2623 = vmatmul.f32.gmra.mxu0 %v2602
        %v2624 = vpop.f32.mrf.mxu0
        %v2625 = vadd.f32 %v2599, %v2624
        %2626 = vmatmul.f32.gmra.mxu0 %v2605
        %v2627 = vpop.f32.mrf.mxu0
        %v2628 = vadd.f32 %v2599, %v2627
        %2629 = vdwg.mxu0
        %v2630 = vmax.f32 %v2625, 0.0
        %v2631 = vmax.f32 %v2628, 0.0
        %v2632 = vld [vmem:[%s1459] sm:$0xff]
        %v2633 = vld [vmem:[%s1459 + $0x8] sm:$0xff]
        %v2634 = vld [vmem:[%s1459 + $0x10] sm:$0xff]
        %v2635 = vld [vmem:[%s1459 + $0x18] sm:$0xff]
        %v2636 = vld [vmem:[%s1459 + $0x20] sm:$0xff]
        %v2637 = vld [vmem:[%s1459 + $0x28] sm:$0xff]
        %v2638 = vld [vmem:[%s1459 + $0x30] sm:$0xff]
        %v2639 = vld [vmem:[%s1459 + $0x38] sm:$0xff]
        %v2640 = vld [vmem:[%s1462] sm:$0x1]
        %v2642 = vperm.slane %v2640, 0
        %vm2644 = vcmask 523264
        %v2646 = vsel %vm2644, %v2630, 0
        %v2649 = vsel %vm2644, %v2631, 0
        %2651 = vmatpush.msra.mxu0 0.0
        %2652 = vmatpush.msra.mxu0 0.0
        %2653 = vmatpush.msra.mxu0 0.0
        %2654 = vmatpush.msra.mxu0 0.0
        %2655 = vmatpush.msra.mxu0 0.0
        %2656 = vmatpush.msra.mxu0 0.0
        %2657 = vmatpush.msra.mxu0 0.0
        %2658 = vmatpush.msra.mxu0 0.0
        %2659 = vmatpush.msra.mxu0 %v2639
        %2660 = vmatpush.msra.mxu0 %v2638
        %2661 = vmatpush.msra.mxu0 %v2637
        %2662 = vmatpush.msra.mxu0 %v2636
        %2663 = vmatpush.msra.mxu0 %v2635
        %2664 = vmatpush.msra.mxu0 %v2634
        %2665 = vmatpush.msra.mxu0 %v2633
        %2666 = vmatpush.msra.mxu0 %v2632
        %2667 = vmatmul.f32.gmra.mxu0 %v2646
        %v2668 = vpop.f32.mrf.mxu0
        %v2669 = vadd.f32 %v2642, %v2668
        %2670 = vmatmul.f32.gmra.mxu0 %v2649
        %v2671 = vpop.f32.mrf.mxu0
        %v2672 = vadd.f32 %v2642, %v2671
        %2673 = vdwg.mxu0
        %v2674 = vadd.f32 %v2591, %v2669
        %v2675 = vadd.f32 %v2592, %v2672
        %v2676 = vsel %vm1489, %v2674, 0.0
        %2677 = vadd.xlane.f32.xlu0 %v2676
        %v2678 = vpop.xlane.xlu0 %2677
        %v2679 = vsel %vm2087, %v2675, 0.0
        %2680 = vadd.xlane.f32.xlu0 %v2679
        %v2681 = vpop.xlane.xlu0 %2680
        %v2682 = vmul.f32 %v2678, %v2097
        %v2683 = vmul.f32 %v2681, %v2097
        %v2684 = vsub.f32 %v2674, %v2682
        %v2685 = vsub.f32 %v2675, %v2683
        %v2686 = vmul.f32 %v2684, %v2684
        %v2687 = vmul.f32 %v2685, %v2685
        %v2688 = vsel %vm1489, %v2686, 0.0
        %2689 = vadd.xlane.f32.xlu0 %v2688
        %v2690 = vpop.xlane.xlu0 %2689
        %v2691 = vsel %vm2087, %v2687, 0.0
        %2692 = vadd.xlane.f32.xlu0 %v2691
        %v2693 = vpop.xlane.xlu0 %2692
        %v2694 = vmul.f32 %v2690, %v2097
        %v2695 = vmul.f32 %v2693, %v2097
        %v2696 = vadd.f32 %v2694, 1e-05
        %v2697 = vadd.f32 %v2695, 1e-05
        %v2698 = vrsqrt.pop %v2696
        %v2699 = vmul.f32 %v2698, %v2696
        %v2700 = vmul.f32 %v2699, %v2698
        %v2701 = vmul.f32 0.5, %v2700
        %v2702 = vsub.f32 1.5, %v2701
        %v2703 = vmul.f32 %v2698, %v2702
        %vm2704 = vweird.f32 %v2696
        %vm2705 = vweird.f32 %v2698
        %vm2706 = vmor %vm2704, %vm2705
        %v2707 = vsel %vm2706, %v2698, %v2703
        %v2708 = vrsqrt.pop %v2697
        %v2709 = vmul.f32 %v2708, %v2697
        %v2710 = vmul.f32 %v2709, %v2708
        %v2711 = vmul.f32 0.5, %v2710
        %v2712 = vsub.f32 1.5, %v2711
        %v2713 = vmul.f32 %v2708, %v2712
        %vm2714 = vweird.f32 %v2697
        %vm2715 = vweird.f32 %v2708
        %vm2716 = vmor %vm2714, %vm2715
        %v2717 = vsel %vm2716, %v2708, %v2713
        %v2718 = vmul.f32 %v2684, %v2707
        %v2719 = vmul.f32 %v2685, %v2717
        %v2720 = vld [vmem:[%s1227] sm:$0x1]
        %v2722 = vperm.slane %v2720, 0
        %v2724 = vmul.f32 %v2718, %v2722
        %v2725 = vmul.f32 %v2719, %v2722
        %v2726 = vld [vmem:[%s1236] sm:$0x1]
        %v2728 = vperm.slane %v2726, 0
        %v2730 = vadd.f32 %v2724, %v2728
        %v2731 = vadd.f32 %v2725, %v2728
        %2732 = vst.msk [vmem:[#allocation2] sm:$0xff] %vm1489, %v2730
        %2733 = vst.msk [vmem:[#allocation2 + $0x8] sm:$0x1] %vm2087, %v2731
        %p2734 = scmp.eq.s32.totalorder %s67, 1
        // Predicated region
        $region197: #{encoder_apply.1} parent=123 // pred_check
          %p2735 = pneg %p2734
        $region198: #{encoder_apply.1} parent=123 // pred_check_branch
          %2737 = sbr.rel (%p2735) target = $region200
        $region199: #{encoder_apply.1} parent=123 // pred_region
          %v2738 = vsel %vm1489, %v2730, 0.0
          %2739 = vadd.xlane.f32.xlu0 %v2738
          %v2740 = vpop.xlane.xlu0 %2739
          %v2741 = vsel %vm2087, %v2731, 0.0
          %2742 = vadd.xlane.f32.xlu0 %v2741
          %v2743 = vpop.xlane.xlu0 %2742
          %v2744 = vmul.f32 %v2740, %v2097
          %v2745 = vmul.f32 %v2743, %v2097
          %v2746 = vsub.f32 %v2730, %v2744
          %v2747 = vsub.f32 %v2731, %v2745
          %v2748 = vmul.f32 %v2746, %v2746
          %v2749 = vmul.f32 %v2747, %v2747
          %v2750 = vsel %vm1489, %v2748, 0.0
          %2751 = vadd.xlane.f32.xlu0 %v2750
          %v2752 = vpop.xlane.xlu0 %2751
          %v2753 = vsel %vm2087, %v2749, 0.0
          %2754 = vadd.xlane.f32.xlu0 %v2753
          %v2755 = vpop.xlane.xlu0 %2754
          %v2756 = vmul.f32 %v2752, %v2097
          %v2757 = vmul.f32 %v2755, %v2097
          %v2758 = vadd.f32 %v2756, 1e-05
          %v2759 = vadd.f32 %v2757, 1e-05
          %v2760 = vrsqrt.pop %v2758
          %v2761 = vmul.f32 %v2760, %v2758
          %v2762 = vmul.f32 %v2761, %v2760
          %v2763 = vmul.f32 0.5, %v2762
          %v2764 = vsub.f32 1.5, %v2763
          %v2765 = vmul.f32 %v2760, %v2764
          %vm2766 = vweird.f32 %v2758
          %vm2767 = vweird.f32 %v2760
          %vm2768 = vmor %vm2766, %vm2767
          %v2769 = vsel %vm2768, %v2760, %v2765
          %v2770 = vrsqrt.pop %v2759
          %v2771 = vmul.f32 %v2770, %v2759
          %v2772 = vmul.f32 %v2771, %v2770
          %v2773 = vmul.f32 0.5, %v2772
          %v2774 = vsub.f32 1.5, %v2773
          %v2775 = vmul.f32 %v2770, %v2774
          %vm2776 = vweird.f32 %v2759
          %vm2777 = vweird.f32 %v2770
          %vm2778 = vmor %vm2776, %vm2777
          %v2779 = vsel %vm2778, %v2770, %v2775
          %v2780 = vmul.f32 %v2746, %v2769
          %v2781 = vmul.f32 %v2747, %v2779
          %v2782 = vld [vmem:[#allocation25] sm:$0x1]
          %v2784 = vperm.slane %v2782, 0
          %v2786 = vmul.f32 %v2780, %v2784
          %v2787 = vmul.f32 %v2781, %v2784
          %v2788 = vld [vmem:[#allocation26] sm:$0x1]
          %v2790 = vperm.slane %v2788, 0
          %v2792 = vadd.f32 %v2786, %v2790
          %v2793 = vadd.f32 %v2787, %v2790
          %v2794 = vld [vmem:[#allocation28] sm:$0xff]
          %v2795 = vld [vmem:[#allocation28 + $0x8] sm:$0xff]
          %v2796 = vld [vmem:[#allocation28 + $0x10] sm:$0xff]
          %v2797 = vld [vmem:[#allocation28 + $0x18] sm:$0xff]
          %v2798 = vld [vmem:[%s25] sm:$0x1]
          %v2800 = vperm.slane %v2798, 0
          %v2803 = vsel %vm1489, %v2792, 0
          %v2806 = vsel %vm1489, %v2793, 0
          %2808 = vmatpush.msra.mxu0 0.0
          %2809 = vmatpush.msra.mxu0 0.0
          %2810 = vmatpush.msra.mxu0 0.0
          %2811 = vmatpush.msra.mxu0 0.0
          %2812 = vmatpush.msra.mxu0 0.0
          %2813 = vmatpush.msra.mxu0 0.0
          %2814 = vmatpush.msra.mxu0 0.0
          %2815 = vmatpush.msra.mxu0 0.0
          %2816 = vmatpush.msra.mxu0 0.0
          %2817 = vmatpush.msra.mxu0 0.0
          %2818 = vmatpush.msra.mxu0 0.0
          %2819 = vmatpush.msra.mxu0 0.0
          %2820 = vmatpush.msra.mxu0 %v2797
          %2821 = vmatpush.msra.mxu0 %v2796
          %2822 = vmatpush.msra.mxu0 %v2795
          %2823 = vmatpush.msra.mxu0 %v2794
          %2824 = vmatmul.f32.gmra.mxu0 %v2803
          %v2825 = vpop.f32.mrf.mxu0
          %v2826 = vadd.f32 %v2800, %v2825
          %2827 = vmatmul.f32.gmra.mxu0 %v2806
          %v2828 = vpop.f32.mrf.mxu0
          %v2829 = vadd.f32 %v2800, %v2828
          %2830 = vdwg.mxu0
          %2831 = vst.msk [vmem:[%s1467] sm:$0xff] %vm1489, %v2826
          %2832 = vst.msk [vmem:[%s1467 + $0x8] sm:$0x1] %vm2087, %v2829
        $region200: #{encoder_apply.1} parent=123 // pred_fallthru
          _
        %p2833 = scmp.lt.s32.totalorder %s66, 1
        %s2834 = scalar_select %p2833, %s66, 1
        %s2835 = smul.addr %s2834, 2
        %s2836 = smul.addr %s2835, 8
        %s2837 = scalar_lea.vmem %s26, %s2836
        // Predicated region
        $region201: #{encoder_apply.1} parent=123 // pred_check
          %p2838 = pneg %p748
        $region202: #{encoder_apply.1} parent=123 // pred_check_branch
          %2840 = sbr.rel (%p2838) target = $region204
        $region203: #{encoder_apply.1} parent=123 // pred_region
          _
        $region204: #{encoder_apply.1} parent=123 // pred_fallthru
          _
      $region124: #{encoder_apply.1} parent=5 // pred_fallthru
        _
      %p2841 = scmp.le.s32.totalorder 2, %s57
      // Predicated region
      $region205: #{encoder_apply.1} parent=5 // pred_check
        %p2842 = pneg %p2841
      $region206: #{encoder_apply.1} parent=5 // pred_check_branch
        %2844 = sbr.rel (%p2842) target = $region208
      $region207: #{encoder_apply.1} parent=5 // pred_region
        %s2845 = ssub.s32 %s57, 2
        // Predicated region
        $region209: #{encoder_apply.1} parent=207 // pred_check
          %p2846 = pneg %p754
        $region210: #{encoder_apply.1} parent=207 // pred_check_branch
          %2848 = sbr.rel (%p2846) target = $region212
        $region211: #{encoder_apply.1} parent=207 // pred_region
          %p2849 = scmp.lt.s32.totalorder %s68, 1
          %s2850 = scalar_select %p2849, %s68, 1
          %s2851 = smul.addr %s2850, 2
          %s2852 = smul.addr %s2851, 8
          %s2853 = scalar_lea.vmem %s26, %s2852
        $region212: #{encoder_apply.1} parent=207 // pred_fallthru
          _
      $region208: #{encoder_apply.1} parent=5 // pred_fallthru
        _
    $region6: #{encoder_apply.1} parent=1 // loop_footer
      %s61 = sadd.s32 1, %s57
    $region7: #{encoder_apply.1} parent=1 // loop_footer_branch
      %56 = sbr.rel target = $region3
    $region8: #{encoder_apply.1} parent=1 // loop_exit
      _
    %2854 = vsyncpa [#allocation4], 1
    %s2855 = scalar_lea.sflag [#allocation4], 1
    %2856 = vsyncpa %s2855, 1
    %2857 = vsyncpa [#allocation6], 1
    %s2858 = scalar_lea.sflag [#allocation6], 1
    %2859 = vsyncpa %s2858, 1
    %2860 = vsyncpa [#allocation9], 1
    %s2861 = scalar_lea.sflag [#allocation9], 1
    %2862 = vsyncpa %s2861, 1
    %2863 = vsyncpa [#allocation12], 1
    %s2864 = scalar_lea.sflag [#allocation12], 1
    %2865 = vsyncpa %s2864, 1
    %2866 = vsyncpa [#allocation15], 1
    %s2867 = scalar_lea.sflag [#allocation15], 1
    %2868 = vsyncpa %s2867, 1
    %2869 = vsyncpa [#allocation18], 1
    %s2870 = scalar_lea.sflag [#allocation18], 1
    %2871 = vsyncpa %s2870, 1
    %2872 = vsyncpa [#allocation21], 1
    %s2873 = scalar_lea.sflag [#allocation21], 1
    %2874 = vsyncpa %s2873, 1
    %2875 = vsyncpa [#allocation24], 1
    %s2876 = scalar_lea.sflag [#allocation24], 1
    %2877 = vsyncpa %s2876, 1
    %2878 = vsyncpa [#allocation27], 1

</llo_original>
